<compile_context>
chip_gen: v6e
topology: v6e:2x2x1
jax: 0.10.0
libtpu: 0.0.40
codegen_flags: <defaults>
</compile_context>

<pallas_src>
import math

import jax
import jax.numpy as jnp
from jax import lax
from jax.experimental import pallas as pl
from jax.experimental.pallas import tpu as pltpu

LANE = 128


def _round_up(x, m):
    return (x + m - 1) // m * m


def qnet_dims(cin, h, w, action_size):
    """Static sizes of the conv/fc stack and of the packed kernel layout."""
    assert h % 4 == 0 and w % 4 == 0, "spatial dims must be multiples of conv1's stride (4)"
    hs, ws = h // 4, w // 4               # 4x4 space-to-depth grid (conv1 -> k2, s1)
    cs = 16 * cin                         # 4x4 s2d channel count
    assert (4 * cs) % LANE == 0, "need cin even so packed lane offsets stay 128-aligned"
    oh1, ow1 = hs - 1, ws - 1             # conv1 output
    assert oh1 % 2 == 0 and ow1 % 2 == 0, "kernel supports h % 8 == 4 and w % 8 == 4"
    oh1b, ow1b = oh1 // 2, ow1 // 2       # conv1 output in 2x2-block (s2d) coords
    hs2, ws2 = oh1b + 1, ow1b + 1         # 8x8-s2d input grid (one zero-pad row/col)
    oh2, ow2 = oh1b - 1, ow1b - 1         # conv2 output ( == (oh1 - 4)//2 + 1 )
    oh3, ow3 = oh2 - 2, ow2 - 2           # conv3 output
    assert oh3 >= 1 and ow3 >= 1, "input too small for the conv stack (need >= 36)"
    ap = _round_up(action_size, LANE)
    return dict(cin=cin, h=h, w=w, hs=hs, ws=ws, cs=cs,
                hs2=hs2, ws2=ws2, oh1b=oh1b, ow1b=ow1b,
                oh1=oh1, ow1=ow1, oh2=oh2, ow2=ow2, oh3=oh3, ow3=ow3,
                p3=oh3 * ow3, f1=512, a=action_size, ap=ap,
                flat=64 * oh3 * ow3)


def init_params(key, d):
    """PyTorch-style U(-1/sqrt(fan_in), +1/sqrt(fan_in)) init, HWIO conv layout."""
    def uniform(k, shape, fan_in):
        bound = 1.0 / math.sqrt(fan_in)
        return jax.random.uniform(k, shape, jnp.float32, -bound, bound)

    ks = jax.random.split(key, 10)
    cin = d["cin"]
    p = {}
    p["w1"] = uniform(ks[0], (8, 8, cin, 32), 8 * 8 * cin)
    p["b1"] = uniform(ks[1], (32,), 8 * 8 * cin)
    p["w2"] = uniform(ks[2], (4, 4, 32, 64), 4 * 4 * 32)
    p["b2"] = uniform(ks[3], (64,), 4 * 4 * 32)
    p["w3"] = uniform(ks[4], (3, 3, 64, 64), 3 * 3 * 64)
    p["b3"] = uniform(ks[5], (64,), 3 * 3 * 64)
    # TODO(synk): the PyTorch module hardcodes fc1 in_features=144, which is
    # inconsistent with the conv stack (64*H3*W3 can never equal 144); we use
    # the true flattened size produced by the conv stack.
    p["wf1"] = uniform(ks[6], (d["flat"], d["f1"]), d["flat"])
    p["bf1"] = uniform(ks[7], (d["f1"],), d["flat"])
    p["wf2"] = uniform(ks[8], (d["f1"], d["a"]), d["f1"])
    p["bf2"] = uniform(ks[9], (d["a"],), d["f1"])
    return p


def pack_params(p, d):
    """Offline weight packing (pure layout): conv1 folded onto the 8x8-s2d input
    and grouped so each matmul row block produces a 2x2 block of conv1 outputs
    (128 dense output lanes); conv2 repacked to a k=2,s=1 conv with 128 dense
    input lanes; conv3 channel-padded; the NCHW flatten folded into fc1 rows."""
    bf16, f32 = jnp.bfloat16, jnp.float32
    cin, CS = d["cin"], d["cs"]
    P3, OH3, OW3 = d["p3"], d["oh3"], d["ow3"]

    # conv1: fold the 4x4 space-to-depth into the taps:
    #   w1s[ti, tj, (di*4+dj)*cin + c, o] = w1[4*ti+di, 4*tj+dj, c, o]
    w1s = p["w1"].reshape(2, 4, 2, 4, cin, 32).transpose(0, 2, 1, 3, 4, 5)
    w1s = w1s.reshape(2, 2, CS, 32)
    # Block-output packing: per 2x2 block (R, C) of conv1 outputs, compute all
    # four outputs (dr, dc) from the 2x2 window of the 8x8-s2d input.
    # Row of W1B: window tap (I, J), sub-pixel (p, q) of that xs2 pixel, s2d
    # channel ch.  Column: (dr*2 + dc)*32 + out_channel.
    W1B = jnp.zeros((2, 2, 2, 2, CS, 2, 2, 32), f32)
    for I in range(2):
        for J in range(2):
            for pp in range(2):
                for qq in range(2):
                    for dr in range(2):
                        for dc in range(2):
                            ti, tj = 2 * I + pp - dr, 2 * J + qq - dc
                            if 0 <= ti <= 1 and 0 <= tj <= 1:
                                W1B = W1B.at[I, J, pp, qq, :, dr, dc, :].set(w1s[ti, tj])
    w1p = W1B.reshape(16 * CS, 128).astype(bf16)
    b1p = jnp.tile(p["b1"], 4).reshape(1, 128).astype(f32)

    # conv2 (k=4, s=2) in block coords is a k=2, s=1 conv with 128 dense input
    # lanes: lane (dr*2+dc)*32 + c of window tap (I, J) is conv1 channel c at
    # original conv2 tap (2I+dr, 2J+dc).
    W2S = jnp.zeros((2, 2, 2, 2, 32, 64), f32)
    for I in range(2):
        for J in range(2):
            for dr in range(2):
                for dc in range(2):
                    W2S = W2S.at[I, J, dr, dc].set(p["w2"][2 * I + dr, 2 * J + dc])
    w2p = jnp.pad(W2S.reshape(512, 64), ((0, 0), (0, 64))).astype(bf16)
    b2p = jnp.pad(p["b2"], (0, 64)).reshape(1, 128).astype(f32)

    # conv3: plain HWIO flatten with in/out channels padded to 128 lanes.
    w3p = jnp.pad(p["w3"], ((0, 0), (0, 0), (0, 64), (0, 64)))
    w3p = w3p.reshape(9 * 128, 128).astype(bf16)
    b3p = jnp.pad(p["b3"], (0, 64)).reshape(1, 128).astype(f32)

    # fc1: fold the NCHW flatten permutation + channel padding into the rows.
    wf1 = p["wf1"].reshape(64, OH3, OW3, d["f1"]).transpose(1, 2, 0, 3)
    wf1 = jnp.pad(wf1, ((0, 0), (0, 0), (0, 64), (0, 0)))
    wf1p = wf1.reshape(P3 * 128, d["f1"]).astype(bf16)
    bf1p = p["bf1"].reshape(1, d["f1"]).astype(f32)

    # fc2: pad action_size to a full lane group (sliced off outside the kernel).
    wf2p = jnp.pad(p["wf2"], ((0, 0), (0, d["ap"] - d["a"]))).astype(bf16)
    bf2p = jnp.pad(p["bf2"], (0, d["ap"] - d["a"])).reshape(1, d["ap"]).astype(f32)

    return dict(w1=w1p, b1=b1p, w2=w2p, b2=b2p, w3=w3p, b3=b3p,
                wf1=wf1p, bf1=bf1p, wf2=wf2p, bf2=bf2p)


def make_forward(d, tb_max=64):
    CIN, CS = d["cin"], d["cs"]
    HS, WS, HS2, WS2 = d["hs"], d["ws"], d["hs2"], d["ws2"]
    OH1B, OW1B = d["oh1b"], d["ow1b"]
    OH2, OW2 = d["oh2"], d["ow2"]
    OH3, OW3 = d["oh3"], d["ow3"]
    P1B, P2, P3 = OH1B * OW1B, OH2 * OW2, OH3 * OW3
    PIN = HS2 * WS2
    KIN = 4 * CS                       # one xs2 pixel = one conv1-block tap (256 lanes)
    F1, A, AP = d["f1"], d["a"], d["ap"]
    bf16, f32 = jnp.bfloat16, jnp.float32

    def forward(packed, state_nchw):
        n = state_nchw.shape[0]
        TB = min(tb_max, _round_up(n, 8))          # images per grid step
        assert TB % 8 == 0
        num_tiles = (n + TB - 1) // TB
        npad = num_tiles * TB

        def kernel(xs_ref, w1_ref, b1_ref, w2_ref, b2_ref, w3_ref, b3_ref,
                   wf1_ref, bf1_ref, wf2_ref, bf2_ref, out_ref,
                   p1_ref, y1_ref, p2_ref, y2_ref, p3_ref, f1_ref):
            # All activations are (positions*TB, channels); row = pos*TB + image.
            # ---- conv1: k=2, s=1 over the 8x8-s2d input grid ------------------
            for R in range(OH1B):
                for I in range(2):
                    for J in range(2):
                        p1_ref[pl.ds(R * OW1B * TB, OW1B * TB),
                               pl.ds((I * 2 + J) * KIN, KIN)] = \
                            xs_ref[pl.ds(((R + I) * WS2 + J) * TB, OW1B * TB), :]
            acc1 = jnp.dot(p1_ref[:, pl.ds(0, KIN)], w1_ref[pl.ds(0, KIN), :],
                           preferred_element_type=f32)
            for t in range(1, 4):                  # accumulate the remaining taps
                acc1 = acc1 + jnp.dot(p1_ref[:, pl.ds(t * KIN, KIN)],
                                      w1_ref[pl.ds(t * KIN, KIN), :],
                                      preferred_element_type=f32)
            y1_ref[...] = jnp.maximum(acc1 + b1_ref[...], 0.0).astype(bf16)

            # ---- conv2: k=2, s=1 in block coords, K = 512 dense lanes ---------
            for oh in range(OH2):
                for I in range(2):
                    for J in range(2):
                        p2_ref[pl.ds(oh * OW2 * TB, OW2 * TB),
                               pl.ds((I * 2 + J) * 128, 128)] = \
                            y1_ref[pl.ds(((oh + I) * OW1B + J) * TB, OW2 * TB), :]
            acc2 = jnp.dot(p2_ref[...], w2_ref[...], preferred_element_type=f32)
            y2_ref[...] = jnp.maximum(acc2 + b2_ref[...], 0.0).astype(bf16)

            # ---- conv3: k=3, s=1 ---------------------------------------------
            for oh in range(OH3):
                for i in range(3):
                    for j in range(3):
                        p3_ref[pl.ds(oh * OW3 * TB, OW3 * TB),
                               pl.ds((i * 3 + j) * 128, 128)] = \
                            y2_ref[pl.ds(((oh + i) * OW2 + j) * TB, OW3 * TB), :]
            acc3 = jnp.dot(p3_ref[...], w3_ref[...], preferred_element_type=f32)
            a3 = jnp.maximum(acc3 + b3_ref[...], 0.0).astype(bf16)   # (P3*TB, 128)

            # ---- fc1 (single GEMM; NCHW flatten folded into wf1) + fc2 --------
            for pos in range(P3):
                f1_ref[:, pl.ds(pos * 128, 128)] = a3[pos * TB:(pos + 1) * TB, :]
            h1 = jnp.maximum(
                jnp.dot(f1_ref[...], wf1_ref[...], preferred_element_type=f32)
                + bf1_ref[...], 0.0).astype(bf16)                     # (TB, F1)
            out_ref[...] = (jnp.dot(h1, wf2_ref[...], preferred_element_type=f32)
                            + bf2_ref[...])                           # (TB, AP)

        # Host-side layout only (pure permutation + zero padding):
        # NCHW -> NHWC -> 4x4 s2d -> pad -> 2x2 s2d (== 8x8 s2d overall) ->
        # rows ordered (tile, grid position, image-in-tile).
        x = jnp.transpose(state_nchw, (0, 2, 3, 1)).astype(f32)
        x = x.reshape(n, HS, 4, WS, 4, CIN).transpose(0, 1, 3, 2, 4, 5)
        x = x.reshape(n, HS, WS, CS)
        x = jnp.pad(x, ((0, npad - n), (0, 2 * HS2 - HS), (0, 2 * WS2 - WS), (0, 0)))
        x = x.reshape(npad, HS2, 2, WS2, 2, CS).transpose(0, 1, 3, 2, 4, 5)
        x = x.reshape(npad, HS2, WS2, 4 * CS)
        x = x.reshape(num_tiles, TB, PIN, 4 * CS).transpose(0, 2, 1, 3)
        x = x.reshape(num_tiles * PIN * TB, 4 * CS).astype(bf16)

        # Weights use constant index maps -> VMEM-resident across the grid.
        # (Single-buffering them via pipeline_mode is a further small VMEM win.)
        grid_spec = pltpu.PrefetchScalarGridSpec(
            num_scalar_prefetch=0,
            grid=(num_tiles,),
            in_specs=[
                pl.BlockSpec((PIN * TB, 4 * CS), lambda t: (t, 0)),   # per-tile input
                pl.BlockSpec((16 * CS, 128), lambda t: (0, 0)),       # w1
                pl.BlockSpec((1, 128), lambda t: (0, 0)),             # b1
                pl.BlockSpec((512, 128), lambda t: (0, 0)),           # w2
                pl.BlockSpec((1, 128), lambda t: (0, 0)),             # b2
                pl.BlockSpec((9 * 128, 128), lambda t: (0, 0)),       # w3
                pl.BlockSpec((1, 128), lambda t: (0, 0)),             # b3
                pl.BlockSpec((P3 * 128, F1), lambda t: (0, 0)),       # wf1
                pl.BlockSpec((1, F1), lambda t: (0, 0)),              # bf1
                pl.BlockSpec((F1, AP), lambda t: (0, 0)),             # wf2
                pl.BlockSpec((1, AP), lambda t: (0, 0)),              # bf2
            ],
            out_specs=pl.BlockSpec((TB, AP), lambda t: (t, 0)),
            scratch_shapes=[
                pltpu.VMEM((P1B * TB, 16 * CS), bf16),   # conv1 patches
                pltpu.VMEM((P1B * TB, 128), bf16),       # conv1 activation (s2d layout)
                pltpu.VMEM((P2 * TB, 512), bf16),        # conv2 patches
                pltpu.VMEM((P2 * TB, 128), bf16),        # conv2 activation
                pltpu.VMEM((P3 * TB, 9 * 128), bf16),    # conv3 patches
                pltpu.VMEM((TB, P3 * 128), bf16),        # fc1 input (per-image rows)
            ],
        )
        out = pl.pallas_call(
            kernel,
            grid_spec=grid_spec,
            out_shape=jax.ShapeDtypeStruct((npad, AP), f32),
            compiler_params=pltpu.CompilerParams(
                dimension_semantics=("parallel",),       # batch tiles across TCs
                vmem_limit_bytes=32 * 1024 * 1024,
            ),
        )(x, packed["w1"], packed["b1"], packed["w2"], packed["b2"],
          packed["w3"], packed["b3"], packed["wf1"], packed["bf1"],
          packed["wf2"], packed["bf2"])
        return out[:n, :A]

    return forward


def reference_forward(params, state_nchw):
    """Pure-JAX reference with the same bf16-operand / f32-accumulate numerics."""
    bf16, f32 = jnp.bfloat16, jnp.float32
    x = jnp.transpose(state_nchw, (0, 2, 3, 1)).astype(bf16)

    def conv(x, w, b, s):
        y = lax.conv_general_dilated(
            x.astype(bf16), w.astype(bf16), (s, s), "VALID",
            dimension_numbers=("NHWC", "HWIO", "NHWC"),
            preferred_element_type=f32)
        return jnp.maximum(y + b, 0.0).astype(bf16)

    x = conv(x, params["w1"], params["b1"], 4)
    x = conv(x, params["w2"], params["b2"], 2)
    x = conv(x, params["w3"], params["b3"], 1)
    n = x.shape[0]
    x = jnp.transpose(x, (0, 3, 1, 2)).reshape(n, -1)       # NCHW flatten == x.view(n, -1)
    h = jnp.maximum(jnp.dot(x.astype(bf16), params["wf1"].astype(bf16),
                            preferred_element_type=f32) + params["bf1"], 0.0)
    out = jnp.dot(h.astype(bf16), params["wf2"].astype(bf16),
                  preferred_element_type=f32) + params["bf2"]
    return out


if __name__ == "__main__":
    key = jax.random.PRNGKey(0)
    k_param, k_input = jax.random.split(key)

    input_channels = 4
    action_size = 4
    batch = 2
    spatial = 36   # smallest spatial size valid for the 8/4 -> 4/2 -> 3/1 conv stack

    d = qnet_dims(input_channels, spatial, spatial, action_size)
    params = init_params(k_param, d)
    packed = pack_params(params, d)
    state = jax.random.normal(
        k_input, (batch, input_channels, spatial, spatial), jnp.float32)

    forward = jax.jit(make_forward(d))
    q_vals = jax.block_until_ready(forward(packed, state))

    assert q_vals.shape == (batch, action_size), q_vals.shape
    assert bool(jnp.all(jnp.isfinite(q_vals)))

    ref = reference_forward(params, state)
    assert bool(jnp.allclose(q_vals, ref, rtol=2e-2, atol=2e-2)), (q_vals, ref)
    print("KERNEL_OK")
</pallas_src>

<mosaic_0001>
module attributes {stable_mosaic.version = 11 : i64} {
  func.func @kernel(%arg0: i32, %arg1: memref<200x256xbf16, #tpu.memory_space<vmem>>, %arg2: memref<1024x128xbf16, #tpu.memory_space<vmem>>, %arg3: memref<1x128xf32, #tpu.memory_space<vmem>>, %arg4: memref<512x128xbf16, #tpu.memory_space<vmem>>, %arg5: memref<1x128xf32, #tpu.memory_space<vmem>>, %arg6: memref<1152x128xbf16, #tpu.memory_space<vmem>>, %arg7: memref<1x128xf32, #tpu.memory_space<vmem>>, %arg8: memref<128x512xbf16, #tpu.memory_space<vmem>>, %arg9: memref<1x512xf32, #tpu.memory_space<vmem>>, %arg10: memref<512x128xbf16, #tpu.memory_space<vmem>>, %arg11: memref<1x128xf32, #tpu.memory_space<vmem>>, %arg12: memref<8x128xf32, #tpu.memory_space<vmem>>, %arg13: memref<128x1024xbf16, #tpu.memory_space<vmem>>, %arg14: memref<128x128xbf16, #tpu.memory_space<vmem>>, %arg15: memref<72x512xbf16, #tpu.memory_space<vmem>>, %arg16: memref<72x128xbf16, #tpu.memory_space<vmem>>, %arg17: memref<8x1152xbf16, #tpu.memory_space<vmem>>, %arg18: memref<8x128xbf16, #tpu.memory_space<vmem>>) attributes {dimension_semantics = [#tpu.dimension_semantics<parallel>], iteration_bounds = array<i64: 1>, scalar_prefetch = 0 : i64, scratch_operands = 6 : i64, tpu.core_type = #tpu.core_type<tc>, window_params = [{transform_indices = @transform_0, window_bounds = array<i64: 200, 256>}, {pipeline_mode = #tpu.pipeline_mode<synchronous>, transform_indices = @transform_1, window_bounds = array<i64: 1024, 128>}, {pipeline_mode = #tpu.pipeline_mode<synchronous>, transform_indices = @transform_2, window_bounds = array<i64: 1, 128>}, {pipeline_mode = #tpu.pipeline_mode<synchronous>, transform_indices = @transform_3, window_bounds = array<i64: 512, 128>}, {pipeline_mode = #tpu.pipeline_mode<synchronous>, transform_indices = @transform_4, window_bounds = array<i64: 1, 128>}, {pipeline_mode = #tpu.pipeline_mode<synchronous>, transform_indices = @transform_5, window_bounds = array<i64: 1152, 128>}, {pipeline_mode = #tpu.pipeline_mode<synchronous>, transform_indices = @transform_6, window_bounds = array<i64: 1, 128>}, {pipeline_mode = #tpu.pipeline_mode<synchronous>, transform_indices = @transform_7, window_bounds = array<i64: 128, 512>}, {pipeline_mode = #tpu.pipeline_mode<synchronous>, transform_indices = @transform_8, window_bounds = array<i64: 1, 512>}, {pipeline_mode = #tpu.pipeline_mode<synchronous>, transform_indices = @transform_9, window_bounds = array<i64: 512, 128>}, {pipeline_mode = #tpu.pipeline_mode<synchronous>, transform_indices = @transform_10, window_bounds = array<i64: 1, 128>}, {transform_indices = @transform_11, window_bounds = array<i64: 8, 128>}]} {
    %c0 = arith.constant 0 : index
    %c0_0 = arith.constant 0 : index
    %0 = vector.load %arg1[%c0, %c0_0] : memref<200x256xbf16, #tpu.memory_space<vmem>>, vector<32x256xbf16>
    %c0_1 = arith.constant 0 : index
    %c0_2 = arith.constant 0 : index
    %1 = vector.load %arg13[%c0_1, %c0_2] : memref<128x1024xbf16, #tpu.memory_space<vmem>>, vector<32x256xbf16>
    tpu.vector_store %arg13[%c0_1, %c0_2], %0 {strides = array<i32>} : memref<128x1024xbf16, #tpu.memory_space<vmem>>, vector<32x256xbf16>,
    %c8 = arith.constant 8 : index
    %c0_3 = arith.constant 0 : index
    %2 = vector.load %arg1[%c8, %c0_3] : memref<200x256xbf16, #tpu.memory_space<vmem>>, vector<32x256xbf16>
    %c0_4 = arith.constant 0 : index
    %c256 = arith.constant 256 : index
    %3 = vector.load %arg13[%c0_4, %c256] : memref<128x1024xbf16, #tpu.memory_space<vmem>>, vector<32x256xbf16>
    tpu.vector_store %arg13[%c0_4, %c256], %2 {strides = array<i32>} : memref<128x1024xbf16, #tpu.memory_space<vmem>>, vector<32x256xbf16>,
    %c40 = arith.constant 40 : index
    %c0_5 = arith.constant 0 : index
    %4 = vector.load %arg1[%c40, %c0_5] : memref<200x256xbf16, #tpu.memory_space<vmem>>, vector<32x256xbf16>
    %c0_6 = arith.constant 0 : index
    %c512 = arith.constant 512 : index
    %5 = vector.load %arg13[%c0_6, %c512] : memref<128x1024xbf16, #tpu.memory_space<vmem>>, vector<32x256xbf16>
    tpu.vector_store %arg13[%c0_6, %c512], %4 {strides = array<i32>} : memref<128x1024xbf16, #tpu.memory_space<vmem>>, vector<32x256xbf16>,
    %c48 = arith.constant 48 : index
    %c0_7 = arith.constant 0 : index
    %6 = vector.load %arg1[%c48, %c0_7] : memref<200x256xbf16, #tpu.memory_space<vmem>>, vector<32x256xbf16>
    %c0_8 = arith.constant 0 : index
    %c768 = arith.constant 768 : index
    %7 = vector.load %arg13[%c0_8, %c768] : memref<128x1024xbf16, #tpu.memory_space<vmem>>, vector<32x256xbf16>
    tpu.vector_store %arg13[%c0_8, %c768], %6 {strides = array<i32>} : memref<128x1024xbf16, #tpu.memory_space<vmem>>, vector<32x256xbf16>,
    %c40_9 = arith.constant 40 : index
    %c0_10 = arith.constant 0 : index
    %8 = vector.load %arg1[%c40_9, %c0_10] : memref<200x256xbf16, #tpu.memory_space<vmem>>, vector<32x256xbf16>
    %c32 = arith.constant 32 : index
    %c0_11 = arith.constant 0 : index
    %9 = vector.load %arg13[%c32, %c0_11] : memref<128x1024xbf16, #tpu.memory_space<vmem>>, vector<32x256xbf16>
    tpu.vector_store %arg13[%c32, %c0_11], %8 {strides = array<i32>} : memref<128x1024xbf16, #tpu.memory_space<vmem>>, vector<32x256xbf16>,
    %c48_12 = arith.constant 48 : index
    %c0_13 = arith.constant 0 : index
    %10 = vector.load %arg1[%c48_12, %c0_13] : memref<200x256xbf16, #tpu.memory_space<vmem>>, vector<32x256xbf16>
    %c32_14 = arith.constant 32 : index
    %c256_15 = arith.constant 256 : index
    %11 = vector.load %arg13[%c32_14, %c256_15] : memref<128x1024xbf16, #tpu.memory_space<vmem>>, vector<32x256xbf16>
    tpu.vector_store %arg13[%c32_14, %c256_15], %10 {strides = array<i32>} : memref<128x1024xbf16, #tpu.memory_space<vmem>>, vector<32x256xbf16>,
    %c80 = arith.constant 80 : index
    %c0_16 = arith.constant 0 : index
    %12 = vector.load %arg1[%c80, %c0_16] : memref<200x256xbf16, #tpu.memory_space<vmem>>, vector<32x256xbf16>
    %c32_17 = arith.constant 32 : index
    %c512_18 = arith.constant 512 : index
    %13 = vector.load %arg13[%c32_17, %c512_18] : memref<128x1024xbf16, #tpu.memory_space<vmem>>, vector<32x256xbf16>
    tpu.vector_store %arg13[%c32_17, %c512_18], %12 {strides = array<i32>} : memref<128x1024xbf16, #tpu.memory_space<vmem>>, vector<32x256xbf16>,
    %c88 = arith.constant 88 : index
    %c0_19 = arith.constant 0 : index
    %14 = vector.load %arg1[%c88, %c0_19] : memref<200x256xbf16, #tpu.memory_space<vmem>>, vector<32x256xbf16>
    %c32_20 = arith.constant 32 : index
    %c768_21 = arith.constant 768 : index
    %15 = vector.load %arg13[%c32_20, %c768_21] : memref<128x1024xbf16, #tpu.memory_space<vmem>>, vector<32x256xbf16>
    tpu.vector_store %arg13[%c32_20, %c768_21], %14 {strides = array<i32>} : memref<128x1024xbf16, #tpu.memory_space<vmem>>, vector<32x256xbf16>,
    %c80_22 = arith.constant 80 : index
    %c0_23 = arith.constant 0 : index
    %16 = vector.load %arg1[%c80_22, %c0_23] : memref<200x256xbf16, #tpu.memory_space<vmem>>, vector<32x256xbf16>
    %c64 = arith.constant 64 : index
    %c0_24 = arith.constant 0 : index
    %17 = vector.load %arg13[%c64, %c0_24] : memref<128x1024xbf16, #tpu.memory_space<vmem>>, vector<32x256xbf16>
    tpu.vector_store %arg13[%c64, %c0_24], %16 {strides = array<i32>} : memref<128x1024xbf16, #tpu.memory_space<vmem>>, vector<32x256xbf16>,
    %c88_25 = arith.constant 88 : index
    %c0_26 = arith.constant 0 : index
    %18 = vector.load %arg1[%c88_25, %c0_26] : memref<200x256xbf16, #tpu.memory_space<vmem>>, vector<32x256xbf16>
    %c64_27 = arith.constant 64 : index
    %c256_28 = arith.constant 256 : index
    %19 = vector.load %arg13[%c64_27, %c256_28] : memref<128x1024xbf16, #tpu.memory_space<vmem>>, vector<32x256xbf16>
    tpu.vector_store %arg13[%c64_27, %c256_28], %18 {strides = array<i32>} : memref<128x1024xbf16, #tpu.memory_space<vmem>>, vector<32x256xbf16>,
    %c120 = arith.constant 120 : index
    %c0_29 = arith.constant 0 : index
    %20 = vector.load %arg1[%c120, %c0_29] : memref<200x256xbf16, #tpu.memory_space<vmem>>, vector<32x256xbf16>
    %c64_30 = arith.constant 64 : index
    %c512_31 = arith.constant 512 : index
    %21 = vector.load %arg13[%c64_30, %c512_31] : memref<128x1024xbf16, #tpu.memory_space<vmem>>, vector<32x256xbf16>
    tpu.vector_store %arg13[%c64_30, %c512_31], %20 {strides = array<i32>} : memref<128x1024xbf16, #tpu.memory_space<vmem>>, vector<32x256xbf16>,
    %c128 = arith.constant 128 : index
    %c0_32 = arith.constant 0 : index
    %22 = vector.load %arg1[%c128, %c0_32] : memref<200x256xbf16, #tpu.memory_space<vmem>>, vector<32x256xbf16>
    %c64_33 = arith.constant 64 : index
    %c768_34 = arith.constant 768 : index
    %23 = vector.load %arg13[%c64_33, %c768_34] : memref<128x1024xbf16, #tpu.memory_space<vmem>>, vector<32x256xbf16>
    tpu.vector_store %arg13[%c64_33, %c768_34], %22 {strides = array<i32>} : memref<128x1024xbf16, #tpu.memory_space<vmem>>, vector<32x256xbf16>,
    %c120_35 = arith.constant 120 : index
    %c0_36 = arith.constant 0 : index
    %24 = vector.load %arg1[%c120_35, %c0_36] : memref<200x256xbf16, #tpu.memory_space<vmem>>, vector<32x256xbf16>
    %c96 = arith.constant 96 : index
    %c0_37 = arith.constant 0 : index
    %25 = vector.load %arg13[%c96, %c0_37] : memref<128x1024xbf16, #tpu.memory_space<vmem>>, vector<32x256xbf16>
    tpu.vector_store %arg13[%c96, %c0_37], %24 {strides = array<i32>} : memref<128x1024xbf16, #tpu.memory_space<vmem>>, vector<32x256xbf16>,
    %c128_38 = arith.constant 128 : index
    %c0_39 = arith.constant 0 : index
    %26 = vector.load %arg1[%c128_38, %c0_39] : memref<200x256xbf16, #tpu.memory_space<vmem>>, vector<32x256xbf16>
    %c96_40 = arith.constant 96 : index
    %c256_41 = arith.constant 256 : index
    %27 = vector.load %arg13[%c96_40, %c256_41] : memref<128x1024xbf16, #tpu.memory_space<vmem>>, vector<32x256xbf16>
    tpu.vector_store %arg13[%c96_40, %c256_41], %26 {strides = array<i32>} : memref<128x1024xbf16, #tpu.memory_space<vmem>>, vector<32x256xbf16>,
    %c160 = arith.constant 160 : index
    %c0_42 = arith.constant 0 : index
    %28 = vector.load %arg1[%c160, %c0_42] : memref<200x256xbf16, #tpu.memory_space<vmem>>, vector<32x256xbf16>
    %c96_43 = arith.constant 96 : index
    %c512_44 = arith.constant 512 : index
    %29 = vector.load %arg13[%c96_43, %c512_44] : memref<128x1024xbf16, #tpu.memory_space<vmem>>, vector<32x256xbf16>
    tpu.vector_store %arg13[%c96_43, %c512_44], %28 {strides = array<i32>} : memref<128x1024xbf16, #tpu.memory_space<vmem>>, vector<32x256xbf16>,
    %c168 = arith.constant 168 : index
    %c0_45 = arith.constant 0 : index
    %30 = vector.load %arg1[%c168, %c0_45] : memref<200x256xbf16, #tpu.memory_space<vmem>>, vector<32x256xbf16>
    %c96_46 = arith.constant 96 : index
    %c768_47 = arith.constant 768 : index
    %31 = vector.load %arg13[%c96_46, %c768_47] : memref<128x1024xbf16, #tpu.memory_space<vmem>>, vector<32x256xbf16>
    tpu.vector_store %arg13[%c96_46, %c768_47], %30 {strides = array<i32>} : memref<128x1024xbf16, #tpu.memory_space<vmem>>, vector<32x256xbf16>,
    %c0_48 = arith.constant 0 : index
    %c0_49 = arith.constant 0 : index
    %32 = vector.load %arg13[%c0_48, %c0_49] : memref<128x1024xbf16, #tpu.memory_space<vmem>>, vector<128x256xbf16>
    %c0_50 = arith.constant 0 : index
    %c0_51 = arith.constant 0 : index
    %33 = vector.load %arg2[%c0_50, %c0_51] : memref<1024x128xbf16, #tpu.memory_space<vmem>>, vector<256x128xbf16>
    %cst = arith.constant dense<0.000000e+00> : vector<128x128xf32>
    %34 = tpu.matmul %32, %33, %cst {dimension_numbers = #tpu.dot_dimension_numbers<[1], [0], [0], [1], [0, 0, 1, 1], [], []>} : vector<128x256xbf16>, vector<256x128xbf16>, vector<128x128xf32> -> vector<128x128xf32>
    %c0_52 = arith.constant 0 : index
    %c256_53 = arith.constant 256 : index
    %35 = vector.load %arg13[%c0_52, %c256_53] : memref<128x1024xbf16, #tpu.memory_space<vmem>>, vector<128x256xbf16>
    %c256_54 = arith.constant 256 : index
    %c0_55 = arith.constant 0 : index
    %36 = vector.load %arg2[%c256_54, %c0_55] : memref<1024x128xbf16, #tpu.memory_space<vmem>>, vector<256x128xbf16>
    %cst_56 = arith.constant dense<0.000000e+00> : vector<128x128xf32>
    %37 = tpu.matmul %35, %36, %cst_56 {dimension_numbers = #tpu.dot_dimension_numbers<[1], [0], [0], [1], [0, 0, 1, 1], [], []>} : vector<128x256xbf16>, vector<256x128xbf16>, vector<128x128xf32> -> vector<128x128xf32>
    %38 = arith.addf %34, %37 : vector<128x128xf32>
    %c0_57 = arith.constant 0 : index
    %c512_58 = arith.constant 512 : index
    %39 = vector.load %arg13[%c0_57, %c512_58] : memref<128x1024xbf16, #tpu.memory_space<vmem>>, vector<128x256xbf16>
    %c512_59 = arith.constant 512 : index
    %c0_60 = arith.constant 0 : index
    %40 = vector.load %arg2[%c512_59, %c0_60] : memref<1024x128xbf16, #tpu.memory_space<vmem>>, vector<256x128xbf16>
    %cst_61 = arith.constant dense<0.000000e+00> : vector<128x128xf32>
    %41 = tpu.matmul %39, %40, %cst_61 {dimension_numbers = #tpu.dot_dimension_numbers<[1], [0], [0], [1], [0, 0, 1, 1], [], []>} : vector<128x256xbf16>, vector<256x128xbf16>, vector<128x128xf32> -> vector<128x128xf32>
    %42 = arith.addf %38, %41 : vector<128x128xf32>
    %c0_62 = arith.constant 0 : index
    %c768_63 = arith.constant 768 : index
    %43 = vector.load %arg13[%c0_62, %c768_63] : memref<128x1024xbf16, #tpu.memory_space<vmem>>, vector<128x256xbf16>
    %c768_64 = arith.constant 768 : index
    %c0_65 = arith.constant 0 : index
    %44 = vector.load %arg2[%c768_64, %c0_65] : memref<1024x128xbf16, #tpu.memory_space<vmem>>, vector<256x128xbf16>
    %cst_66 = arith.constant dense<0.000000e+00> : vector<128x128xf32>
    %45 = tpu.matmul %43, %44, %cst_66 {dimension_numbers = #tpu.dot_dimension_numbers<[1], [0], [0], [1], [0, 0, 1, 1], [], []>} : vector<128x256xbf16>, vector<256x128xbf16>, vector<128x128xf32> -> vector<128x128xf32>
    %46 = arith.addf %42, %45 : vector<128x128xf32>
    %c0_67 = arith.constant 0 : index
    %c0_68 = arith.constant 0 : index
    %47 = vector.load %arg3[%c0_67, %c0_68] : memref<1x128xf32, #tpu.memory_space<vmem>>, vector<1x128xf32>
    %48 = vector.broadcast %47 : vector<1x128xf32> to vector<128x128xf32>
    %49 = arith.addf %46, %48 : vector<128x128xf32>
    %cst_69 = arith.constant 0.000000e+00 : f32
    %50 = vector.broadcast %cst_69 : f32 to vector<128x128xf32>
    %51 = arith.maximumf %49, %50 : vector<128x128xf32>
    %52 = arith.truncf %51 : vector<128x128xf32> to vector<128x128xbf16>
    %c0_70 = arith.constant 0 : index
    %c0_71 = arith.constant 0 : index
    %53 = vector.load %arg14[%c0_70, %c0_71] : memref<128x128xbf16, #tpu.memory_space<vmem>>, vector<128x128xbf16>
    tpu.vector_store %arg14[%c0_70, %c0_71], %52 {strides = array<i32>} : memref<128x128xbf16, #tpu.memory_space<vmem>>, vector<128x128xbf16>,
    %c0_72 = arith.constant 0 : index
    %c0_73 = arith.constant 0 : index
    %54 = vector.load %arg14[%c0_72, %c0_73] : memref<128x128xbf16, #tpu.memory_space<vmem>>, vector<24x128xbf16>
    %c0_74 = arith.constant 0 : index
    %c0_75 = arith.constant 0 : index
    %55 = vector.load %arg15[%c0_74, %c0_75] : memref<72x512xbf16, #tpu.memory_space<vmem>>, vector<24x128xbf16>
    tpu.vector_store %arg15[%c0_74, %c0_75], %54 {strides = array<i32>} : memref<72x512xbf16, #tpu.memory_space<vmem>>, vector<24x128xbf16>,
    %c8_76 = arith.constant 8 : index
    %c0_77 = arith.constant 0 : index
    %56 = vector.load %arg14[%c8_76, %c0_77] : memref<128x128xbf16, #tpu.memory_space<vmem>>, vector<24x128xbf16>
    %c0_78 = arith.constant 0 : index
    %c128_79 = arith.constant 128 : index
    %57 = vector.load %arg15[%c0_78, %c128_79] : memref<72x512xbf16, #tpu.memory_space<vmem>>, vector<24x128xbf16>
    tpu.vector_store %arg15[%c0_78, %c128_79], %56 {strides = array<i32>} : memref<72x512xbf16, #tpu.memory_space<vmem>>, vector<24x128xbf16>,
    %c32_80 = arith.constant 32 : index
    %c0_81 = arith.constant 0 : index
    %58 = vector.load %arg14[%c32_80, %c0_81] : memref<128x128xbf16, #tpu.memory_space<vmem>>, vector<24x128xbf16>
    %c0_82 = arith.constant 0 : index
    %c256_83 = arith.constant 256 : index
    %59 = vector.load %arg15[%c0_82, %c256_83] : memref<72x512xbf16, #tpu.memory_space<vmem>>, vector<24x128xbf16>
    tpu.vector_store %arg15[%c0_82, %c256_83], %58 {strides = array<i32>} : memref<72x512xbf16, #tpu.memory_space<vmem>>, vector<24x128xbf16>,
    %c40_84 = arith.constant 40 : index
    %c0_85 = arith.constant 0 : index
    %60 = vector.load %arg14[%c40_84, %c0_85] : memref<128x128xbf16, #tpu.memory_space<vmem>>, vector<24x128xbf16>
    %c0_86 = arith.constant 0 : index
    %c384 = arith.constant 384 : index
    %61 = vector.load %arg15[%c0_86, %c384] : memref<72x512xbf16, #tpu.memory_space<vmem>>, vector<24x128xbf16>
    tpu.vector_store %arg15[%c0_86, %c384], %60 {strides = array<i32>} : memref<72x512xbf16, #tpu.memory_space<vmem>>, vector<24x128xbf16>,
    %c32_87 = arith.constant 32 : index
    %c0_88 = arith.constant 0 : index
    %62 = vector.load %arg14[%c32_87, %c0_88] : memref<128x128xbf16, #tpu.memory_space<vmem>>, vector<24x128xbf16>
    %c24 = arith.constant 24 : index
    %c0_89 = arith.constant 0 : index
    %63 = vector.load %arg15[%c24, %c0_89] : memref<72x512xbf16, #tpu.memory_space<vmem>>, vector<24x128xbf16>
    tpu.vector_store %arg15[%c24, %c0_89], %62 {strides = array<i32>} : memref<72x512xbf16, #tpu.memory_space<vmem>>, vector<24x128xbf16>,
    %c40_90 = arith.constant 40 : index
    %c0_91 = arith.constant 0 : index
    %64 = vector.load %arg14[%c40_90, %c0_91] : memref<128x128xbf16, #tpu.memory_space<vmem>>, vector<24x128xbf16>
    %c24_92 = arith.constant 24 : index
    %c128_93 = arith.constant 128 : index
    %65 = vector.load %arg15[%c24_92, %c128_93] : memref<72x512xbf16, #tpu.memory_space<vmem>>, vector<24x128xbf16>
    tpu.vector_store %arg15[%c24_92, %c128_93], %64 {strides = array<i32>} : memref<72x512xbf16, #tpu.memory_space<vmem>>, vector<24x128xbf16>,
    %c64_94 = arith.constant 64 : index
    %c0_95 = arith.constant 0 : index
    %66 = vector.load %arg14[%c64_94, %c0_95] : memref<128x128xbf16, #tpu.memory_space<vmem>>, vector<24x128xbf16>
    %c24_96 = arith.constant 24 : index
    %c256_97 = arith.constant 256 : index
    %67 = vector.load %arg15[%c24_96, %c256_97] : memref<72x512xbf16, #tpu.memory_space<vmem>>, vector<24x128xbf16>
    tpu.vector_store %arg15[%c24_96, %c256_97], %66 {strides = array<i32>} : memref<72x512xbf16, #tpu.memory_space<vmem>>, vector<24x128xbf16>,
    %c72 = arith.constant 72 : index
    %c0_98 = arith.constant 0 : index
    %68 = vector.load %arg14[%c72, %c0_98] : memref<128x128xbf16, #tpu.memory_space<vmem>>, vector<24x128xbf16>
    %c24_99 = arith.constant 24 : index
    %c384_100 = arith.constant 384 : index
    %69 = vector.load %arg15[%c24_99, %c384_100] : memref<72x512xbf16, #tpu.memory_space<vmem>>, vector<24x128xbf16>
    tpu.vector_store %arg15[%c24_99, %c384_100], %68 {strides = array<i32>} : memref<72x512xbf16, #tpu.memory_space<vmem>>, vector<24x128xbf16>,
    %c64_101 = arith.constant 64 : index
    %c0_102 = arith.constant 0 : index
    %70 = vector.load %arg14[%c64_101, %c0_102] : memref<128x128xbf16, #tpu.memory_space<vmem>>, vector<24x128xbf16>
    %c48_103 = arith.constant 48 : index
    %c0_104 = arith.constant 0 : index
    %71 = vector.load %arg15[%c48_103, %c0_104] : memref<72x512xbf16, #tpu.memory_space<vmem>>, vector<24x128xbf16>
    tpu.vector_store %arg15[%c48_103, %c0_104], %70 {strides = array<i32>} : memref<72x512xbf16, #tpu.memory_space<vmem>>, vector<24x128xbf16>,
    %c72_105 = arith.constant 72 : index
    %c0_106 = arith.constant 0 : index
    %72 = vector.load %arg14[%c72_105, %c0_106] : memref<128x128xbf16, #tpu.memory_space<vmem>>, vector<24x128xbf16>
    %c48_107 = arith.constant 48 : index
    %c128_108 = arith.constant 128 : index
    %73 = vector.load %arg15[%c48_107, %c128_108] : memref<72x512xbf16, #tpu.memory_space<vmem>>, vector<24x128xbf16>
    tpu.vector_store %arg15[%c48_107, %c128_108], %72 {strides = array<i32>} : memref<72x512xbf16, #tpu.memory_space<vmem>>, vector<24x128xbf16>,
    %c96_109 = arith.constant 96 : index
    %c0_110 = arith.constant 0 : index
    %74 = vector.load %arg14[%c96_109, %c0_110] : memref<128x128xbf16, #tpu.memory_space<vmem>>, vector<24x128xbf16>
    %c48_111 = arith.constant 48 : index
    %c256_112 = arith.constant 256 : index
    %75 = vector.load %arg15[%c48_111, %c256_112] : memref<72x512xbf16, #tpu.memory_space<vmem>>, vector<24x128xbf16>
    tpu.vector_store %arg15[%c48_111, %c256_112], %74 {strides = array<i32>} : memref<72x512xbf16, #tpu.memory_space<vmem>>, vector<24x128xbf16>,
    %c104 = arith.constant 104 : index
    %c0_113 = arith.constant 0 : index
    %76 = vector.load %arg14[%c104, %c0_113] : memref<128x128xbf16, #tpu.memory_space<vmem>>, vector<24x128xbf16>
    %c48_114 = arith.constant 48 : index
    %c384_115 = arith.constant 384 : index
    %77 = vector.load %arg15[%c48_114, %c384_115] : memref<72x512xbf16, #tpu.memory_space<vmem>>, vector<24x128xbf16>
    tpu.vector_store %arg15[%c48_114, %c384_115], %76 {strides = array<i32>} : memref<72x512xbf16, #tpu.memory_space<vmem>>, vector<24x128xbf16>,
    %c0_116 = arith.constant 0 : index
    %c0_117 = arith.constant 0 : index
    %78 = vector.load %arg15[%c0_116, %c0_117] : memref<72x512xbf16, #tpu.memory_space<vmem>>, vector<72x512xbf16>
    %c0_118 = arith.constant 0 : index
    %c0_119 = arith.constant 0 : index
    %79 = vector.load %arg4[%c0_118, %c0_119] : memref<512x128xbf16, #tpu.memory_space<vmem>>, vector<512x128xbf16>
    %cst_120 = arith.constant dense<0.000000e+00> : vector<72x128xf32>
    %80 = tpu.matmul %78, %79, %cst_120 {dimension_numbers = #tpu.dot_dimension_numbers<[1], [0], [0], [1], [0, 0, 1, 1], [], []>} : vector<72x512xbf16>, vector<512x128xbf16>, vector<72x128xf32> -> vector<72x128xf32>
    %c0_121 = arith.constant 0 : index
    %c0_122 = arith.constant 0 : index
    %81 = vector.load %arg5[%c0_121, %c0_122] : memref<1x128xf32, #tpu.memory_space<vmem>>, vector<1x128xf32>
    %82 = vector.broadcast %81 : vector<1x128xf32> to vector<72x128xf32>
    %83 = arith.addf %80, %82 : vector<72x128xf32>
    %cst_123 = arith.constant 0.000000e+00 : f32
    %84 = vector.broadcast %cst_123 : f32 to vector<72x128xf32>
    %85 = arith.maximumf %83, %84 : vector<72x128xf32>
    %86 = arith.truncf %85 : vector<72x128xf32> to vector<72x128xbf16>
    %c0_124 = arith.constant 0 : index
    %c0_125 = arith.constant 0 : index
    %87 = vector.load %arg16[%c0_124, %c0_125] : memref<72x128xbf16, #tpu.memory_space<vmem>>, vector<72x128xbf16>
    tpu.vector_store %arg16[%c0_124, %c0_125], %86 {strides = array<i32>} : memref<72x128xbf16, #tpu.memory_space<vmem>>, vector<72x128xbf16>,
    %c0_126 = arith.constant 0 : index
    %c0_127 = arith.constant 0 : index
    %88 = vector.load %arg16[%c0_126, %c0_127] : memref<72x128xbf16, #tpu.memory_space<vmem>>, vector<8x128xbf16>
    %c0_128 = arith.constant 0 : index
    %c0_129 = arith.constant 0 : index
    %89 = vector.load %arg17[%c0_128, %c0_129] : memref<8x1152xbf16, #tpu.memory_space<vmem>>, vector<8x128xbf16>
    tpu.vector_store %arg17[%c0_128, %c0_129], %88 {strides = array<i32>} : memref<8x1152xbf16, #tpu.memory_space<vmem>>, vector<8x128xbf16>,
    %c8_130 = arith.constant 8 : index
    %c0_131 = arith.constant 0 : index
    %90 = vector.load %arg16[%c8_130, %c0_131] : memref<72x128xbf16, #tpu.memory_space<vmem>>, vector<8x128xbf16>
    %c0_132 = arith.constant 0 : index
    %c128_133 = arith.constant 128 : index
    %91 = vector.load %arg17[%c0_132, %c128_133] : memref<8x1152xbf16, #tpu.memory_space<vmem>>, vector<8x128xbf16>
    tpu.vector_store %arg17[%c0_132, %c128_133], %90 {strides = array<i32>} : memref<8x1152xbf16, #tpu.memory_space<vmem>>, vector<8x128xbf16>,
    %c16 = arith.constant 16 : index
    %c0_134 = arith.constant 0 : index
    %92 = vector.load %arg16[%c16, %c0_134] : memref<72x128xbf16, #tpu.memory_space<vmem>>, vector<8x128xbf16>
    %c0_135 = arith.constant 0 : index
    %c256_136 = arith.constant 256 : index
    %93 = vector.load %arg17[%c0_135, %c256_136] : memref<8x1152xbf16, #tpu.memory_space<vmem>>, vector<8x128xbf16>
    tpu.vector_store %arg17[%c0_135, %c256_136], %92 {strides = array<i32>} : memref<8x1152xbf16, #tpu.memory_space<vmem>>, vector<8x128xbf16>,
    %c24_137 = arith.constant 24 : index
    %c0_138 = arith.constant 0 : index
    %94 = vector.load %arg16[%c24_137, %c0_138] : memref<72x128xbf16, #tpu.memory_space<vmem>>, vector<8x128xbf16>
    %c0_139 = arith.constant 0 : index
    %c384_140 = arith.constant 384 : index
    %95 = vector.load %arg17[%c0_139, %c384_140] : memref<8x1152xbf16, #tpu.memory_space<vmem>>, vector<8x128xbf16>
    tpu.vector_store %arg17[%c0_139, %c384_140], %94 {strides = array<i32>} : memref<8x1152xbf16, #tpu.memory_space<vmem>>, vector<8x128xbf16>,
    %c32_141 = arith.constant 32 : index
    %c0_142 = arith.constant 0 : index
    %96 = vector.load %arg16[%c32_141, %c0_142] : memref<72x128xbf16, #tpu.memory_space<vmem>>, vector<8x128xbf16>
    %c0_143 = arith.constant 0 : index
    %c512_144 = arith.constant 512 : index
    %97 = vector.load %arg17[%c0_143, %c512_144] : memref<8x1152xbf16, #tpu.memory_space<vmem>>, vector<8x128xbf16>
    tpu.vector_store %arg17[%c0_143, %c512_144], %96 {strides = array<i32>} : memref<8x1152xbf16, #tpu.memory_space<vmem>>, vector<8x128xbf16>,
    %c40_145 = arith.constant 40 : index
    %c0_146 = arith.constant 0 : index
    %98 = vector.load %arg16[%c40_145, %c0_146] : memref<72x128xbf16, #tpu.memory_space<vmem>>, vector<8x128xbf16>
    %c0_147 = arith.constant 0 : index
    %c640 = arith.constant 640 : index
    %99 = vector.load %arg17[%c0_147, %c640] : memref<8x1152xbf16, #tpu.memory_space<vmem>>, vector<8x128xbf16>
    tpu.vector_store %arg17[%c0_147, %c640], %98 {strides = array<i32>} : memref<8x1152xbf16, #tpu.memory_space<vmem>>, vector<8x128xbf16>,
    %c48_148 = arith.constant 48 : index
    %c0_149 = arith.constant 0 : index
    %100 = vector.load %arg16[%c48_148, %c0_149] : memref<72x128xbf16, #tpu.memory_space<vmem>>, vector<8x128xbf16>
    %c0_150 = arith.constant 0 : index
    %c768_151 = arith.constant 768 : index
    %101 = vector.load %arg17[%c0_150, %c768_151] : memref<8x1152xbf16, #tpu.memory_space<vmem>>, vector<8x128xbf16>
    tpu.vector_store %arg17[%c0_150, %c768_151], %100 {strides = array<i32>} : memref<8x1152xbf16, #tpu.memory_space<vmem>>, vector<8x128xbf16>,
    %c56 = arith.constant 56 : index
    %c0_152 = arith.constant 0 : index
    %102 = vector.load %arg16[%c56, %c0_152] : memref<72x128xbf16, #tpu.memory_space<vmem>>, vector<8x128xbf16>
    %c0_153 = arith.constant 0 : index
    %c896 = arith.constant 896 : index
    %103 = vector.load %arg17[%c0_153, %c896] : memref<8x1152xbf16, #tpu.memory_space<vmem>>, vector<8x128xbf16>
    tpu.vector_store %arg17[%c0_153, %c896], %102 {strides = array<i32>} : memref<8x1152xbf16, #tpu.memory_space<vmem>>, vector<8x128xbf16>,
    %c64_154 = arith.constant 64 : index
    %c0_155 = arith.constant 0 : index
    %104 = vector.load %arg16[%c64_154, %c0_155] : memref<72x128xbf16, #tpu.memory_space<vmem>>, vector<8x128xbf16>
    %c0_156 = arith.constant 0 : index
    %c1024 = arith.constant 1024 : index
    %105 = vector.load %arg17[%c0_156, %c1024] : memref<8x1152xbf16, #tpu.memory_space<vmem>>, vector<8x128xbf16>
    tpu.vector_store %arg17[%c0_156, %c1024], %104 {strides = array<i32>} : memref<8x1152xbf16, #tpu.memory_space<vmem>>, vector<8x128xbf16>,
    %c0_157 = arith.constant 0 : index
    %c0_158 = arith.constant 0 : index
    %106 = vector.load %arg17[%c0_157, %c0_158] : memref<8x1152xbf16, #tpu.memory_space<vmem>>, vector<8x1152xbf16>
    %c0_159 = arith.constant 0 : index
    %c0_160 = arith.constant 0 : index
    %107 = vector.load %arg6[%c0_159, %c0_160] : memref<1152x128xbf16, #tpu.memory_space<vmem>>, vector<1152x128xbf16>
    %cst_161 = arith.constant dense<0.000000e+00> : vector<8x128xf32>
    %108 = tpu.matmul %106, %107, %cst_161 {dimension_numbers = #tpu.dot_dimension_numbers<[1], [0], [0], [1], [0, 0, 1, 1], [], []>} : vector<8x1152xbf16>, vector<1152x128xbf16>, vector<8x128xf32> -> vector<8x128xf32>
    %c0_162 = arith.constant 0 : index
    %c0_163 = arith.constant 0 : index
    %109 = vector.load %arg7[%c0_162, %c0_163] : memref<1x128xf32, #tpu.memory_space<vmem>>, vector<1x128xf32>
    %110 = vector.broadcast %109 : vector<1x128xf32> to vector<8x128xf32>
    %111 = arith.addf %108, %110 : vector<8x128xf32>
    %cst_164 = arith.constant 0.000000e+00 : f32
    %112 = vector.broadcast %cst_164 : f32 to vector<8x128xf32>
    %113 = arith.maximumf %111, %112 : vector<8x128xf32>
    %114 = arith.truncf %113 : vector<8x128xf32> to vector<8x128xbf16>
    %c0_165 = arith.constant 0 : index
    %c0_166 = arith.constant 0 : index
    %115 = vector.load %arg18[%c0_165, %c0_166] : memref<8x128xbf16, #tpu.memory_space<vmem>>, vector<8x128xbf16>
    tpu.vector_store %arg18[%c0_165, %c0_166], %114 {strides = array<i32>} : memref<8x128xbf16, #tpu.memory_space<vmem>>, vector<8x128xbf16>,
    %c0_167 = arith.constant 0 : index
    %c0_168 = arith.constant 0 : index
    %116 = vector.load %arg18[%c0_167, %c0_168] : memref<8x128xbf16, #tpu.memory_space<vmem>>, vector<8x128xbf16>
    %c0_169 = arith.constant 0 : index
    %c0_170 = arith.constant 0 : index
    %117 = vector.load %arg8[%c0_169, %c0_170] : memref<128x512xbf16, #tpu.memory_space<vmem>>, vector<128x512xbf16>
    %cst_171 = arith.constant dense<0.000000e+00> : vector<8x512xf32>
    %118 = tpu.matmul %116, %117, %cst_171 {dimension_numbers = #tpu.dot_dimension_numbers<[1], [0], [0], [1], [0, 0, 1, 1], [], []>} : vector<8x128xbf16>, vector<128x512xbf16>, vector<8x512xf32> -> vector<8x512xf32>
    %c0_172 = arith.constant 0 : index
    %c0_173 = arith.constant 0 : index
    %119 = vector.load %arg9[%c0_172, %c0_173] : memref<1x512xf32, #tpu.memory_space<vmem>>, vector<1x512xf32>
    %120 = vector.broadcast %119 : vector<1x512xf32> to vector<8x512xf32>
    %121 = arith.addf %118, %120 : vector<8x512xf32>
    %cst_174 = arith.constant 0.000000e+00 : f32
    %122 = vector.broadcast %cst_174 : f32 to vector<8x512xf32>
    %123 = arith.maximumf %121, %122 : vector<8x512xf32>
    %124 = arith.truncf %123 : vector<8x512xf32> to vector<8x512xbf16>
    %c0_175 = arith.constant 0 : index
    %c0_176 = arith.constant 0 : index
    %125 = vector.load %arg10[%c0_175, %c0_176] : memref<512x128xbf16, #tpu.memory_space<vmem>>, vector<512x128xbf16>
    %cst_177 = arith.constant dense<0.000000e+00> : vector<8x128xf32>
    %126 = tpu.matmul %124, %125, %cst_177 {dimension_numbers = #tpu.dot_dimension_numbers<[1], [0], [0], [1], [0, 0, 1, 1], [], []>} : vector<8x512xbf16>, vector<512x128xbf16>, vector<8x128xf32> -> vector<8x128xf32>
    %c0_178 = arith.constant 0 : index
    %c0_179 = arith.constant 0 : index
    %127 = vector.load %arg11[%c0_178, %c0_179] : memref<1x128xf32, #tpu.memory_space<vmem>>, vector<1x128xf32>
    %128 = vector.broadcast %127 : vector<1x128xf32> to vector<8x128xf32>
    %129 = arith.addf %126, %128 : vector<8x128xf32>
    %c0_180 = arith.constant 0 : index
    %c0_181 = arith.constant 0 : index
    %130 = vector.load %arg12[%c0_180, %c0_181] : memref<8x128xf32, #tpu.memory_space<vmem>>, vector<8x128xf32>
    tpu.vector_store %arg12[%c0_180, %c0_181], %129 {strides = array<i32>} : memref<8x128xf32, #tpu.memory_space<vmem>>, vector<8x128xf32>,
    return
  }
  func.func @transform_0(%arg0: i32) -> (i32, i32) {
    %c0_i32 = arith.constant 0 : i32
    %c0_i32_0 = arith.constant 0 : i32
    return %arg0, %c0_i32 : i32, i32
  }
  func.func @transform_1(%arg0: i32) -> (i32, i32) {
    %c0_i32 = arith.constant 0 : i32
    %c0_i32_0 = arith.constant 0 : i32
    %c0_i32_1 = arith.constant 0 : i32
    return %c0_i32, %c0_i32_0 : i32, i32
  }
  func.func @transform_2(%arg0: i32) -> (i32, i32) {
    %c0_i32 = arith.constant 0 : i32
    %c0_i32_0 = arith.constant 0 : i32
    %c0_i32_1 = arith.constant 0 : i32
    return %c0_i32, %c0_i32_0 : i32, i32
  }
  func.func @transform_3(%arg0: i32) -> (i32, i32) {
    %c0_i32 = arith.constant 0 : i32
    %c0_i32_0 = arith.constant 0 : i32
    %c0_i32_1 = arith.constant 0 : i32
    return %c0_i32, %c0_i32_0 : i32, i32
  }
  func.func @transform_4(%arg0: i32) -> (i32, i32) {
    %c0_i32 = arith.constant 0 : i32
    %c0_i32_0 = arith.constant 0 : i32
    %c0_i32_1 = arith.constant 0 : i32
    return %c0_i32, %c0_i32_0 : i32, i32
  }
  func.func @transform_5(%arg0: i32) -> (i32, i32) {
    %c0_i32 = arith.constant 0 : i32
    %c0_i32_0 = arith.constant 0 : i32
    %c0_i32_1 = arith.constant 0 : i32
    return %c0_i32, %c0_i32_0 : i32, i32
  }
  func.func @transform_6(%arg0: i32) -> (i32, i32) {
    %c0_i32 = arith.constant 0 : i32
    %c0_i32_0 = arith.constant 0 : i32
    %c0_i32_1 = arith.constant 0 : i32
    return %c0_i32, %c0_i32_0 : i32, i32
  }
  func.func @transform_7(%arg0: i32) -> (i32, i32) {
    %c0_i32 = arith.constant 0 : i32
    %c0_i32_0 = arith.constant 0 : i32
    %c0_i32_1 = arith.constant 0 : i32
    return %c0_i32, %c0_i32_0 : i32, i32
  }
  func.func @transform_8(%arg0: i32) -> (i32, i32) {
    %c0_i32 = arith.constant 0 : i32
    %c0_i32_0 = arith.constant 0 : i32
    %c0_i32_1 = arith.constant 0 : i32
    return %c0_i32, %c0_i32_0 : i32, i32
  }
  func.func @transform_9(%arg0: i32) -> (i32, i32) {
    %c0_i32 = arith.constant 0 : i32
    %c0_i32_0 = arith.constant 0 : i32
    %c0_i32_1 = arith.constant 0 : i32
    return %c0_i32, %c0_i32_0 : i32, i32
  }
  func.func @transform_10(%arg0: i32) -> (i32, i32) {
    %c0_i32 = arith.constant 0 : i32
    %c0_i32_0 = arith.constant 0 : i32
    %c0_i32_1 = arith.constant 0 : i32
    return %c0_i32, %c0_i32_0 : i32, i32
  }
  func.func @transform_11(%arg0: i32) -> (i32, i32) {
    %c0_i32 = arith.constant 0 : i32
    %c0_i32_0 = arith.constant 0 : i32
    return %arg0, %c0_i32 : i32, i32
  }
}

</mosaic_0001>

<llo_original>
// kernel: forward.1
$region0: #{forward.1}
  #allocation0 [shape = 'u32[]', space=smem, size = 0x4, offset = 0x4, fixed_abs, tag = 'smem constant byte address 0x4 - core index']
  #allocation1 [shape = 'u32[144,128]{1,0:T(1,128)}', space=vmem, size = 0x12000, scoped, tag = 'internal scratch']
  #allocation2 [shape = 'bf16[128,1024]{1,0:T(8,128)(2,1)}', space=vmem, size = 0x40000, scoped, tag = 'scratch operand']
  #allocation3 [shape = 'bf16[128,128]{1,0:T(8,128)(2,1)}', space=vmem, size = 0x8000, scoped, tag = 'scratch operand']
  #allocation4 [shape = 'bf16[72,512]{1,0:T(8,128)(2,1)}', space=vmem, size = 0x12000, scoped, tag = 'scratch operand']
  #allocation5 [shape = 'bf16[72,128]{1,0:T(8,128)(2,1)}', space=vmem, size = 0x4800, scoped, tag = 'scratch operand']
  #allocation6 [shape = 'bf16[8,1152]{1,0:T(8,128)(2,1)}', space=vmem, size = 0x4800, scoped, tag = 'scratch operand']
  #allocation7 [shape = 'bf16[8,128]{1,0:T(8,128)(2,1)}', space=vmem, size = 0x800, scoped, tag = 'scratch operand']
  %s0 = inlined_call_operand.vmem [shape: bf16[200,256], index: 0, kind: input, shape index: {}]
  %s1 = inlined_call_operand.vmem [shape: bf16[1024,128], index: 1, kind: input, shape index: {}]
  %s2 = inlined_call_operand.vmem [shape: f32[1,128], index: 2, kind: input, shape index: {}]
  %s3 = inlined_call_operand.vmem [shape: bf16[512,128], index: 3, kind: input, shape index: {}]
  %s4 = inlined_call_operand.vmem [shape: f32[1,128], index: 4, kind: input, shape index: {}]
  %s5 = inlined_call_operand.vmem [shape: bf16[1152,128], index: 5, kind: input, shape index: {}]
  %s6 = inlined_call_operand.vmem [shape: f32[1,128], index: 6, kind: input, shape index: {}]
  %s7 = inlined_call_operand.vmem [shape: bf16[128,512], index: 7, kind: input, shape index: {}]
  %s8 = inlined_call_operand.vmem [shape: f32[1,512], index: 8, kind: input, shape index: {}]
  %s9 = inlined_call_operand.vmem [shape: bf16[512,128], index: 9, kind: input, shape index: {}]
  %s10 = inlined_call_operand.vmem [shape: f32[1,128], index: 10, kind: input, shape index: {}]
  %s11 = inlined_call_operand.vmem [shape: f32[8,128], index: 11, kind: output, shape index: {}]
  %s12 = sld [smem:[#allocation0]]
  $region54: #{forward.1} parent=0
    _
  %s14 = ssub.s32 1, %s12
  %s15 = scalar_select 0, %s14, %s12
  // Predicated region
  $region2: #{forward.1} parent=0 // pred_check
    _
  $region3: #{forward.1} parent=0 // pred_check_branch
    %17 = sbr.rel (0) target = $region5
  $region4: #{forward.1} parent=0 // pred_region
    _
  $region5: #{forward.1} parent=0 // pred_fallthru
    _
  // Predicated region
  $region6: #{forward.1} parent=0 // pred_check
    _
  $region7: #{forward.1} parent=0 // pred_check_branch
    %19 = sbr.rel (0) target = $region9
  $region8: #{forward.1} parent=0 // pred_region
    _
  $region9: #{forward.1} parent=0 // pred_fallthru
    _
  // Predicated region
  $region10: #{forward.1} parent=0 // pred_check
    _
  $region11: #{forward.1} parent=0 // pred_check_branch
    %21 = sbr.rel (0) target = $region13
  $region12: #{forward.1} parent=0 // pred_region
    _
  $region13: #{forward.1} parent=0 // pred_fallthru
    _
  // Predicated region
  $region14: #{forward.1} parent=0 // pred_check
    _
  $region15: #{forward.1} parent=0 // pred_check_branch
    %23 = sbr.rel (0) target = $region17
  $region16: #{forward.1} parent=0 // pred_region
    _
  $region17: #{forward.1} parent=0 // pred_fallthru
    _
  // Predicated region
  $region18: #{forward.1} parent=0 // pred_check
    _
  $region19: #{forward.1} parent=0 // pred_check_branch
    %25 = sbr.rel (0) target = $region21
  $region20: #{forward.1} parent=0 // pred_region
    _
  $region21: #{forward.1} parent=0 // pred_fallthru
    _
  // Predicated region
  $region22: #{forward.1} parent=0 // pred_check
    _
  $region23: #{forward.1} parent=0 // pred_check_branch
    %27 = sbr.rel (0) target = $region25
  $region24: #{forward.1} parent=0 // pred_region
    _
  $region25: #{forward.1} parent=0 // pred_fallthru
    _
  // Predicated region
  $region26: #{forward.1} parent=0 // pred_check
    _
  $region27: #{forward.1} parent=0 // pred_check_branch
    %29 = sbr.rel (0) target = $region29
  $region28: #{forward.1} parent=0 // pred_region
    _
  $region29: #{forward.1} parent=0 // pred_fallthru
    _
  // Predicated region
  $region30: #{forward.1} parent=0 // pred_check
    _
  $region31: #{forward.1} parent=0 // pred_check_branch
    %31 = sbr.rel (0) target = $region33
  $region32: #{forward.1} parent=0 // pred_region
    _
  $region33: #{forward.1} parent=0 // pred_fallthru
    _
  // Predicated region
  $region34: #{forward.1} parent=0 // pred_check
    _
  $region35: #{forward.1} parent=0 // pred_check_branch
    %33 = sbr.rel (0) target = $region37
  $region36: #{forward.1} parent=0 // pred_region
    _
  $region37: #{forward.1} parent=0 // pred_fallthru
    _
  // Predicated region
  $region38: #{forward.1} parent=0 // pred_check
    _
  $region39: #{forward.1} parent=0 // pred_check_branch
    %35 = sbr.rel (0) target = $region41
  $region40: #{forward.1} parent=0 // pred_region
    _
  $region41: #{forward.1} parent=0 // pred_fallthru
    _
  // Predicated region
  $region42: #{forward.1} parent=0 // pred_check
    _
  $region43: #{forward.1} parent=0 // pred_check_branch
    %37 = sbr.rel (0) target = $region45
  $region44: #{forward.1} parent=0 // pred_region
    _
  $region45: #{forward.1} parent=0 // pred_fallthru
    _
  %v39 = vld [vmem:[%s0] sm:$0xff]
  %v40 = vld [vmem:[%s0 + $0x8] sm:$0xff]
  %v41 = vld [vmem:[%s0 + $0x10] sm:$0xff]
  %v42 = vld [vmem:[%s0 + $0x18] sm:$0xff]
  %43 = vst [vmem:[#allocation2] sm:$0xff] %v39
  %44 = vst [vmem:[#allocation2 + $0x20] sm:$0xff] %v40
  %45 = vst [vmem:[#allocation2 + $0x40] sm:$0xff] %v41
  %46 = vst [vmem:[#allocation2 + $0x60] sm:$0xff] %v42
  %v47 = vld [vmem:[%s0 + $0x8] sm:$0xff]
  %v48 = vld [vmem:[%s0 + $0x10] sm:$0xff]
  %v49 = vld [vmem:[%s0 + $0x18] sm:$0xff]
  %v50 = vld [vmem:[%s0 + $0x20] sm:$0xff]
  %51 = vst [vmem:[#allocation2 + $0x8] sm:$0xff] %v47
  %52 = vst [vmem:[#allocation2 + $0x28] sm:$0xff] %v48
  %53 = vst [vmem:[#allocation2 + $0x48] sm:$0xff] %v49
  %54 = vst [vmem:[#allocation2 + $0x68] sm:$0xff] %v50
  %v55 = vld [vmem:[%s0 + $0x28] sm:$0xff]
  %v56 = vld [vmem:[%s0 + $0x30] sm:$0xff]
  %v57 = vld [vmem:[%s0 + $0x38] sm:$0xff]
  %v58 = vld [vmem:[%s0 + $0x40] sm:$0xff]
  %59 = vst [vmem:[#allocation2 + $0x10] sm:$0xff] %v55
  %60 = vst [vmem:[#allocation2 + $0x30] sm:$0xff] %v56
  %61 = vst [vmem:[#allocation2 + $0x50] sm:$0xff] %v57
  %62 = vst [vmem:[#allocation2 + $0x70] sm:$0xff] %v58
  %v63 = vld [vmem:[%s0 + $0x30] sm:$0xff]
  %v64 = vld [vmem:[%s0 + $0x38] sm:$0xff]
  %v65 = vld [vmem:[%s0 + $0x40] sm:$0xff]
  %v66 = vld [vmem:[%s0 + $0x48] sm:$0xff]
  %67 = vst [vmem:[#allocation2 + $0x18] sm:$0xff] %v63
  %68 = vst [vmem:[#allocation2 + $0x38] sm:$0xff] %v64
  %69 = vst [vmem:[#allocation2 + $0x58] sm:$0xff] %v65
  %70 = vst [vmem:[#allocation2 + $0x78] sm:$0xff] %v66
  %v71 = vld [vmem:[%s0 + $0x28] sm:$0xff]
  %v72 = vld [vmem:[%s0 + $0x30] sm:$0xff]
  %v73 = vld [vmem:[%s0 + $0x38] sm:$0xff]
  %v74 = vld [vmem:[%s0 + $0x40] sm:$0xff]
  %75 = vst [vmem:[#allocation2 + $0x80] sm:$0xff] %v71
  %76 = vst [vmem:[#allocation2 + $0xa0] sm:$0xff] %v72
  %77 = vst [vmem:[#allocation2 + $0xc0] sm:$0xff] %v73
  %78 = vst [vmem:[#allocation2 + $0xe0] sm:$0xff] %v74
  %v79 = vld [vmem:[%s0 + $0x30] sm:$0xff]
  %v80 = vld [vmem:[%s0 + $0x38] sm:$0xff]
  %v81 = vld [vmem:[%s0 + $0x40] sm:$0xff]
  %v82 = vld [vmem:[%s0 + $0x48] sm:$0xff]
  %83 = vst [vmem:[#allocation2 + $0x88] sm:$0xff] %v79
  %84 = vst [vmem:[#allocation2 + $0xa8] sm:$0xff] %v80
  %85 = vst [vmem:[#allocation2 + $0xc8] sm:$0xff] %v81
  %86 = vst [vmem:[#allocation2 + $0xe8] sm:$0xff] %v82
  %v87 = vld [vmem:[%s0 + $0x50] sm:$0xff]
  %v88 = vld [vmem:[%s0 + $0x58] sm:$0xff]
  %v89 = vld [vmem:[%s0 + $0x60] sm:$0xff]
  %v90 = vld [vmem:[%s0 + $0x68] sm:$0xff]
  %91 = vst [vmem:[#allocation2 + $0x90] sm:$0xff] %v87
  %92 = vst [vmem:[#allocation2 + $0xb0] sm:$0xff] %v88
  %93 = vst [vmem:[#allocation2 + $0xd0] sm:$0xff] %v89
  %94 = vst [vmem:[#allocation2 + $0xf0] sm:$0xff] %v90
  %v95 = vld [vmem:[%s0 + $0x58] sm:$0xff]
  %v96 = vld [vmem:[%s0 + $0x60] sm:$0xff]
  %v97 = vld [vmem:[%s0 + $0x68] sm:$0xff]
  %v98 = vld [vmem:[%s0 + $0x70] sm:$0xff]
  %99 = vst [vmem:[#allocation2 + $0x98] sm:$0xff] %v95
  %100 = vst [vmem:[#allocation2 + $0xb8] sm:$0xff] %v96
  %101 = vst [vmem:[#allocation2 + $0xd8] sm:$0xff] %v97
  %102 = vst [vmem:[#allocation2 + $0xf8] sm:$0xff] %v98
  %v103 = vld [vmem:[%s0 + $0x50] sm:$0xff]
  %v104 = vld [vmem:[%s0 + $0x58] sm:$0xff]
  %v105 = vld [vmem:[%s0 + $0x60] sm:$0xff]
  %v106 = vld [vmem:[%s0 + $0x68] sm:$0xff]
  %107 = vst [vmem:[#allocation2 + $0x100] sm:$0xff] %v103
  %108 = vst [vmem:[#allocation2 + $0x120] sm:$0xff] %v104
  %109 = vst [vmem:[#allocation2 + $0x140] sm:$0xff] %v105
  %110 = vst [vmem:[#allocation2 + $0x160] sm:$0xff] %v106
  %v111 = vld [vmem:[%s0 + $0x58] sm:$0xff]
  %v112 = vld [vmem:[%s0 + $0x60] sm:$0xff]
  %v113 = vld [vmem:[%s0 + $0x68] sm:$0xff]
  %v114 = vld [vmem:[%s0 + $0x70] sm:$0xff]
  %115 = vst [vmem:[#allocation2 + $0x108] sm:$0xff] %v111
  %116 = vst [vmem:[#allocation2 + $0x128] sm:$0xff] %v112
  %117 = vst [vmem:[#allocation2 + $0x148] sm:$0xff] %v113
  %118 = vst [vmem:[#allocation2 + $0x168] sm:$0xff] %v114
  %v119 = vld [vmem:[%s0 + $0x78] sm:$0xff]
  %v120 = vld [vmem:[%s0 + $0x80] sm:$0xff]
  %v121 = vld [vmem:[%s0 + $0x88] sm:$0xff]
  %v122 = vld [vmem:[%s0 + $0x90] sm:$0xff]
  %123 = vst [vmem:[#allocation2 + $0x110] sm:$0xff] %v119
  %124 = vst [vmem:[#allocation2 + $0x130] sm:$0xff] %v120
  %125 = vst [vmem:[#allocation2 + $0x150] sm:$0xff] %v121
  %126 = vst [vmem:[#allocation2 + $0x170] sm:$0xff] %v122
  %v127 = vld [vmem:[%s0 + $0x80] sm:$0xff]
  %v128 = vld [vmem:[%s0 + $0x88] sm:$0xff]
  %v129 = vld [vmem:[%s0 + $0x90] sm:$0xff]
  %v130 = vld [vmem:[%s0 + $0x98] sm:$0xff]
  %131 = vst [vmem:[#allocation2 + $0x118] sm:$0xff] %v127
  %132 = vst [vmem:[#allocation2 + $0x138] sm:$0xff] %v128
  %133 = vst [vmem:[#allocation2 + $0x158] sm:$0xff] %v129
  %134 = vst [vmem:[#allocation2 + $0x178] sm:$0xff] %v130
  %v135 = vld [vmem:[%s0 + $0x78] sm:$0xff]
  %v136 = vld [vmem:[%s0 + $0x80] sm:$0xff]
  %v137 = vld [vmem:[%s0 + $0x88] sm:$0xff]
  %v138 = vld [vmem:[%s0 + $0x90] sm:$0xff]
  %139 = vst [vmem:[#allocation2 + $0x180] sm:$0xff] %v135
  %140 = vst [vmem:[#allocation2 + $0x1a0] sm:$0xff] %v136
  %141 = vst [vmem:[#allocation2 + $0x1c0] sm:$0xff] %v137
  %142 = vst [vmem:[#allocation2 + $0x1e0] sm:$0xff] %v138
  %v143 = vld [vmem:[%s0 + $0x80] sm:$0xff]
  %v144 = vld [vmem:[%s0 + $0x88] sm:$0xff]
  %v145 = vld [vmem:[%s0 + $0x90] sm:$0xff]
  %v146 = vld [vmem:[%s0 + $0x98] sm:$0xff]
  %147 = vst [vmem:[#allocation2 + $0x188] sm:$0xff] %v143
  %148 = vst [vmem:[#allocation2 + $0x1a8] sm:$0xff] %v144
  %149 = vst [vmem:[#allocation2 + $0x1c8] sm:$0xff] %v145
  %150 = vst [vmem:[#allocation2 + $0x1e8] sm:$0xff] %v146
  %v151 = vld [vmem:[%s0 + $0xa0] sm:$0xff]
  %v152 = vld [vmem:[%s0 + $0xa8] sm:$0xff]
  %v153 = vld [vmem:[%s0 + $0xb0] sm:$0xff]
  %v154 = vld [vmem:[%s0 + $0xb8] sm:$0xff]
  %155 = vst [vmem:[#allocation2 + $0x190] sm:$0xff] %v151
  %156 = vst [vmem:[#allocation2 + $0x1b0] sm:$0xff] %v152
  %157 = vst [vmem:[#allocation2 + $0x1d0] sm:$0xff] %v153
  %158 = vst [vmem:[#allocation2 + $0x1f0] sm:$0xff] %v154
  %v159 = vld [vmem:[%s0 + $0xa8] sm:$0xff]
  %v160 = vld [vmem:[%s0 + $0xb0] sm:$0xff]
  %v161 = vld [vmem:[%s0 + $0xb8] sm:$0xff]
  %v162 = vld [vmem:[%s0 + $0xc0] sm:$0xff]
  %163 = vst [vmem:[#allocation2 + $0x198] sm:$0xff] %v159
  %164 = vst [vmem:[#allocation2 + $0x1b8] sm:$0xff] %v160
  %165 = vst [vmem:[#allocation2 + $0x1d8] sm:$0xff] %v161
  %166 = vst [vmem:[#allocation2 + $0x1f8] sm:$0xff] %v162
  %v167 = vld [vmem:[#allocation2] sm:$0xff]
  %v168 = vld [vmem:[#allocation2 + $0x20] sm:$0xff]
  %v169 = vld [vmem:[#allocation2 + $0x40] sm:$0xff]
  %v170 = vld [vmem:[#allocation2 + $0x60] sm:$0xff]
  %v171 = vld [vmem:[#allocation2 + $0x80] sm:$0xff]
  %v172 = vld [vmem:[#allocation2 + $0xa0] sm:$0xff]
  %v173 = vld [vmem:[#allocation2 + $0xc0] sm:$0xff]
  %v174 = vld [vmem:[#allocation2 + $0xe0] sm:$0xff]
  %v175 = vld [vmem:[#allocation2 + $0x100] sm:$0xff]
  %v176 = vld [vmem:[#allocation2 + $0x120] sm:$0xff]
  %v177 = vld [vmem:[#allocation2 + $0x140] sm:$0xff]
  %v178 = vld [vmem:[#allocation2 + $0x160] sm:$0xff]
  %v179 = vld [vmem:[#allocation2 + $0x180] sm:$0xff]
  %v180 = vld [vmem:[#allocation2 + $0x1a0] sm:$0xff]
  %v181 = vld [vmem:[#allocation2 + $0x1c0] sm:$0xff]
  %v182 = vld [vmem:[#allocation2 + $0x1e0] sm:$0xff]
  %v183 = vld [vmem:[%s1] sm:$0xf]
  %v184 = vld [vmem:[%s1 + $0x4] sm:$0xf]
  %v185 = vld [vmem:[%s1 + $0x8] sm:$0xf]
  %v186 = vld [vmem:[%s1 + $0xc] sm:$0xf]
  %v187 = vld [vmem:[%s1 + $0x10] sm:$0xf]
  %v188 = vld [vmem:[%s1 + $0x14] sm:$0xf]
  %v189 = vld [vmem:[%s1 + $0x18] sm:$0xf]
  %v190 = vld [vmem:[%s1 + $0x1c] sm:$0xf]
  %v191 = vld [vmem:[%s1 + $0x20] sm:$0xf]
  %v192 = vld [vmem:[%s1 + $0x24] sm:$0xf]
  %v193 = vld [vmem:[%s1 + $0x28] sm:$0xf]
  %v194 = vld [vmem:[%s1 + $0x2c] sm:$0xf]
  %v195 = vld [vmem:[%s1 + $0x30] sm:$0xf]
  %v196 = vld [vmem:[%s1 + $0x34] sm:$0xf]
  %v197 = vld [vmem:[%s1 + $0x38] sm:$0xf]
  %v198 = vld [vmem:[%s1 + $0x3c] sm:$0xf]
  %v199 = vld [vmem:[%s1 + $0x40] sm:$0xf]
  %v200 = vld [vmem:[%s1 + $0x44] sm:$0xf]
  %v201 = vld [vmem:[%s1 + $0x48] sm:$0xf]
  %v202 = vld [vmem:[%s1 + $0x4c] sm:$0xf]
  %v203 = vld [vmem:[%s1 + $0x50] sm:$0xf]
  %v204 = vld [vmem:[%s1 + $0x54] sm:$0xf]
  %v205 = vld [vmem:[%s1 + $0x58] sm:$0xf]
  %v206 = vld [vmem:[%s1 + $0x5c] sm:$0xf]
  %v207 = vld [vmem:[%s1 + $0x60] sm:$0xf]
  %v208 = vld [vmem:[%s1 + $0x64] sm:$0xf]
  %v209 = vld [vmem:[%s1 + $0x68] sm:$0xf]
  %v210 = vld [vmem:[%s1 + $0x6c] sm:$0xf]
  %v211 = vld [vmem:[%s1 + $0x70] sm:$0xf]
  %v212 = vld [vmem:[%s1 + $0x74] sm:$0xf]
  %v213 = vld [vmem:[%s1 + $0x78] sm:$0xf]
  %v214 = vld [vmem:[%s1 + $0x7c] sm:$0xf]
  %v215 = vld [vmem:[#allocation2 + $0x8] sm:$0xff]
  %v216 = vld [vmem:[#allocation2 + $0x28] sm:$0xff]
  %v217 = vld [vmem:[#allocation2 + $0x48] sm:$0xff]
  %v218 = vld [vmem:[#allocation2 + $0x68] sm:$0xff]
  %v219 = vld [vmem:[#allocation2 + $0x88] sm:$0xff]
  %v220 = vld [vmem:[#allocation2 + $0xa8] sm:$0xff]
  %v221 = vld [vmem:[#allocation2 + $0xc8] sm:$0xff]
  %v222 = vld [vmem:[#allocation2 + $0xe8] sm:$0xff]
  %v223 = vld [vmem:[#allocation2 + $0x108] sm:$0xff]
  %v224 = vld [vmem:[#allocation2 + $0x128] sm:$0xff]
  %v225 = vld [vmem:[#allocation2 + $0x148] sm:$0xff]
  %v226 = vld [vmem:[#allocation2 + $0x168] sm:$0xff]
  %v227 = vld [vmem:[#allocation2 + $0x188] sm:$0xff]
  %v228 = vld [vmem:[#allocation2 + $0x1a8] sm:$0xff]
  %v229 = vld [vmem:[#allocation2 + $0x1c8] sm:$0xff]
  %v230 = vld [vmem:[#allocation2 + $0x1e8] sm:$0xff]
  %v231 = vld [vmem:[%s1 + $0x80] sm:$0xf]
  %v232 = vld [vmem:[%s1 + $0x84] sm:$0xf]
  %v233 = vld [vmem:[%s1 + $0x88] sm:$0xf]
  %v234 = vld [vmem:[%s1 + $0x8c] sm:$0xf]
  %v235 = vld [vmem:[%s1 + $0x90] sm:$0xf]
  %v236 = vld [vmem:[%s1 + $0x94] sm:$0xf]
  %v237 = vld [vmem:[%s1 + $0x98] sm:$0xf]
  %v238 = vld [vmem:[%s1 + $0x9c] sm:$0xf]
  %v239 = vld [vmem:[%s1 + $0xa0] sm:$0xf]
  %v240 = vld [vmem:[%s1 + $0xa4] sm:$0xf]
  %v241 = vld [vmem:[%s1 + $0xa8] sm:$0xf]
  %v242 = vld [vmem:[%s1 + $0xac] sm:$0xf]
  %v243 = vld [vmem:[%s1 + $0xb0] sm:$0xf]
  %v244 = vld [vmem:[%s1 + $0xb4] sm:$0xf]
  %v245 = vld [vmem:[%s1 + $0xb8] sm:$0xf]
  %v246 = vld [vmem:[%s1 + $0xbc] sm:$0xf]
  %v247 = vld [vmem:[%s1 + $0xc0] sm:$0xf]
  %v248 = vld [vmem:[%s1 + $0xc4] sm:$0xf]
  %v249 = vld [vmem:[%s1 + $0xc8] sm:$0xf]
  %v250 = vld [vmem:[%s1 + $0xcc] sm:$0xf]
  %v251 = vld [vmem:[%s1 + $0xd0] sm:$0xf]
  %v252 = vld [vmem:[%s1 + $0xd4] sm:$0xf]
  %v253 = vld [vmem:[%s1 + $0xd8] sm:$0xf]
  %v254 = vld [vmem:[%s1 + $0xdc] sm:$0xf]
  %v255 = vld [vmem:[%s1 + $0xe0] sm:$0xf]
  %v256 = vld [vmem:[%s1 + $0xe4] sm:$0xf]
  %v257 = vld [vmem:[%s1 + $0xe8] sm:$0xf]
  %v258 = vld [vmem:[%s1 + $0xec] sm:$0xf]
  %v259 = vld [vmem:[%s1 + $0xf0] sm:$0xf]
  %v260 = vld [vmem:[%s1 + $0xf4] sm:$0xf]
  %v261 = vld [vmem:[%s1 + $0xf8] sm:$0xf]
  %v262 = vld [vmem:[%s1 + $0xfc] sm:$0xf]
  %v279 = vunpack.c.l.b16 %v215
  %v280 = vunpack.c.h.b16 %v215
  %v281 = vunpack.c.l.b16 %v216
  %v282 = vunpack.c.h.b16 %v216
  %v283 = vunpack.c.l.b16 %v217
  %v284 = vunpack.c.h.b16 %v217
  %v285 = vunpack.c.l.b16 %v218
  %v286 = vunpack.c.h.b16 %v218
  %v287 = vunpack.c.l.b16 %v219
  %v288 = vunpack.c.h.b16 %v219
  %v289 = vunpack.c.l.b16 %v220
  %v290 = vunpack.c.h.b16 %v220
  %v291 = vunpack.c.l.b16 %v221
  %v292 = vunpack.c.h.b16 %v221
  %v293 = vunpack.c.l.b16 %v222
  %v294 = vunpack.c.h.b16 %v222
  %v295 = vunpack.c.l.b16 %v223
  %v296 = vunpack.c.h.b16 %v223
  %v297 = vunpack.c.l.b16 %v224
  %v298 = vunpack.c.h.b16 %v224
  %v299 = vunpack.c.l.b16 %v225
  %v300 = vunpack.c.h.b16 %v225
  %v301 = vunpack.c.l.b16 %v226
  %v302 = vunpack.c.h.b16 %v226
  %v303 = vunpack.c.l.b16 %v227
  %v304 = vunpack.c.h.b16 %v227
  %v305 = vunpack.c.l.b16 %v228
  %v306 = vunpack.c.h.b16 %v228
  %v307 = vunpack.c.l.b16 %v229
  %v308 = vunpack.c.h.b16 %v229
  %v309 = vunpack.c.l.b16 %v230
  %v310 = vunpack.c.h.b16 %v230
  %v311 = vpack.c.b16 %v281, %v279
  %v312 = vpack.c.b16 %v282, %v280
  %v313 = vpack.c.b16 %v285, %v283
  %v314 = vpack.c.b16 %v286, %v284
  %v315 = vpack.c.b16 %v289, %v287
  %v316 = vpack.c.b16 %v290, %v288
  %v317 = vpack.c.b16 %v293, %v291
  %v318 = vpack.c.b16 %v294, %v292
  %v319 = vpack.c.b16 %v297, %v295
  %v320 = vpack.c.b16 %v298, %v296
  %v321 = vpack.c.b16 %v301, %v299
  %v322 = vpack.c.b16 %v302, %v300
  %v323 = vpack.c.b16 %v305, %v303
  %v324 = vpack.c.b16 %v306, %v304
  %v325 = vpack.c.b16 %v309, %v307
  %v326 = vpack.c.b16 %v310, %v308
  %v375 = vunpack.c.l.b16 %v231
  %v376 = vunpack.c.l.b16 %v232
  %v377 = vunpack.c.l.b16 %v233
  %v378 = vunpack.c.l.b16 %v234
  %v379 = vunpack.c.l.b16 %v235
  %v380 = vunpack.c.l.b16 %v236
  %v381 = vunpack.c.l.b16 %v237
  %v382 = vunpack.c.l.b16 %v238
  %v383 = vunpack.c.l.b16 %v239
  %v384 = vunpack.c.l.b16 %v240
  %v385 = vunpack.c.l.b16 %v241
  %v386 = vunpack.c.l.b16 %v242
  %v387 = vunpack.c.l.b16 %v243
  %v388 = vunpack.c.l.b16 %v244
  %v389 = vunpack.c.l.b16 %v245
  %v390 = vunpack.c.l.b16 %v246
  %v391 = vunpack.c.l.b16 %v247
  %v392 = vunpack.c.l.b16 %v248
  %v393 = vunpack.c.l.b16 %v249
  %v394 = vunpack.c.l.b16 %v250
  %v395 = vunpack.c.l.b16 %v251
  %v396 = vunpack.c.l.b16 %v252
  %v397 = vunpack.c.l.b16 %v253
  %v398 = vunpack.c.l.b16 %v254
  %v399 = vunpack.c.l.b16 %v255
  %v400 = vunpack.c.l.b16 %v256
  %v401 = vunpack.c.l.b16 %v257
  %v402 = vunpack.c.l.b16 %v258
  %v403 = vunpack.c.l.b16 %v259
  %v404 = vunpack.c.l.b16 %v260
  %v405 = vunpack.c.l.b16 %v261
  %v406 = vunpack.c.l.b16 %v262
  %v407 = vpack.c.b16 %v376, %v375
  %v408 = vpack.c.b16 %v378, %v377
  %v409 = vpack.c.b16 %v380, %v379
  %v410 = vpack.c.b16 %v382, %v381
  %v411 = vpack.c.b16 %v384, %v383
  %v412 = vpack.c.b16 %v386, %v385
  %v413 = vpack.c.b16 %v388, %v387
  %v414 = vpack.c.b16 %v390, %v389
  %v415 = vpack.c.b16 %v392, %v391
  %v416 = vpack.c.b16 %v394, %v393
  %v417 = vpack.c.b16 %v396, %v395
  %v418 = vpack.c.b16 %v398, %v397
  %v419 = vpack.c.b16 %v400, %v399
  %v420 = vpack.c.b16 %v402, %v401
  %v421 = vpack.c.b16 %v404, %v403
  %v422 = vpack.c.b16 %v406, %v405
  %439 = vmatprep.subr.bf16.mxu0 0
  %440 = vmatpush1.bf16.msra.mxu0 %v414
  %441 = vmatprep.subr.bf16.mxu0 0
  %442 = vmatpush1.bf16.msra.mxu0 %v413
  %443 = vmatprep.subr.bf16.mxu0 0
  %444 = vmatpush1.bf16.msra.mxu0 %v412
  %445 = vmatprep.subr.bf16.mxu0 0
  %446 = vmatpush1.bf16.msra.mxu0 %v411
  %447 = vmatprep.subr.bf16.mxu0 0
  %448 = vmatpush1.bf16.msra.mxu0 %v410
  %449 = vmatprep.subr.bf16.mxu0 0
  %450 = vmatpush1.bf16.msra.mxu0 %v409
  %451 = vmatprep.subr.bf16.mxu0 0
  %452 = vmatpush1.bf16.msra.mxu0 %v408
  %453 = vmatprep.subr.bf16.mxu0 0
  %454 = vmatpush1.bf16.msra.mxu0 %v407
  %455 = vmatprep.subr.bf16.mxu0 0
  %456 = vmatpush2.bf16.msra.mxu0 %v422
  %457 = vmatprep.subr.bf16.mxu0 0
  %458 = vmatpush2.bf16.msra.mxu0 %v421
  %459 = vmatprep.subr.bf16.mxu0 0
  %460 = vmatpush2.bf16.msra.mxu0 %v420
  %461 = vmatprep.subr.bf16.mxu0 0
  %462 = vmatpush2.bf16.msra.mxu0 %v419
  %463 = vmatprep.subr.bf16.mxu0 0
  %464 = vmatpush2.bf16.msra.mxu0 %v418
  %465 = vmatprep.subr.bf16.mxu0 0
  %466 = vmatpush2.bf16.msra.mxu0 %v417
  %467 = vmatprep.subr.bf16.mxu0 0
  %468 = vmatpush2.bf16.msra.mxu0 %v416
  %469 = vmatprep.subr.bf16.mxu0 0
  %470 = vmatpush2.bf16.msra.mxu0 %v415
  %471 = vmatprep.mubr.bf16.mxu0 %v312
  %472 = vmatmul.mubr.bf16.gmra.mxu0 %v311
  %v473 = vpop.f32.mrf.mxu0
  %v474 = vadd.f32 0.0, %v473
  %v475 = vpop.f32.mrf.mxu0
  %v476 = vpop.f32.mrf.mxu0
  %v477 = vadd.f32 0.0, %v476
  %v478 = vpop.f32.mrf.mxu0
  %479 = vmatprep.mubr.bf16.mxu0 %v314
  %480 = vmatmul.mubr.bf16.gmra.mxu0 %v313
  %v481 = vpop.f32.mrf.mxu0
  %v482 = vadd.f32 0.0, %v481
  %v483 = vpop.f32.mrf.mxu0
  %v484 = vpop.f32.mrf.mxu0
  %v485 = vadd.f32 0.0, %v484
  %v486 = vpop.f32.mrf.mxu0
  %487 = vmatprep.mubr.bf16.mxu0 %v316
  %488 = vmatmul.mubr.bf16.gmra.mxu0 %v315
  %v489 = vpop.f32.mrf.mxu0
  %v490 = vadd.f32 0.0, %v489
  %v491 = vpop.f32.mrf.mxu0
  %v492 = vpop.f32.mrf.mxu0
  %v493 = vadd.f32 0.0, %v492
  %v494 = vpop.f32.mrf.mxu0
  %495 = vmatprep.mubr.bf16.mxu0 %v318
  %496 = vmatmul.mubr.bf16.gmra.mxu0 %v317
  %v497 = vpop.f32.mrf.mxu0
  %v498 = vadd.f32 0.0, %v497
  %v499 = vpop.f32.mrf.mxu0
  %v500 = vpop.f32.mrf.mxu0
  %v501 = vadd.f32 0.0, %v500
  %v502 = vpop.f32.mrf.mxu0
  %503 = vmatprep.mubr.bf16.mxu0 %v320
  %504 = vmatmul.mubr.bf16.gmra.mxu0 %v319
  %v505 = vpop.f32.mrf.mxu0
  %v506 = vadd.f32 0.0, %v505
  %v507 = vpop.f32.mrf.mxu0
  %v508 = vpop.f32.mrf.mxu0
  %v509 = vadd.f32 0.0, %v508
  %v510 = vpop.f32.mrf.mxu0
  %511 = vmatprep.mubr.bf16.mxu0 %v322
  %512 = vmatmul.mubr.bf16.gmra.mxu0 %v321
  %v513 = vpop.f32.mrf.mxu0
  %v514 = vadd.f32 0.0, %v513
  %v515 = vpop.f32.mrf.mxu0
  %v516 = vpop.f32.mrf.mxu0
  %v517 = vadd.f32 0.0, %v516
  %v518 = vpop.f32.mrf.mxu0
  %519 = vmatprep.mubr.bf16.mxu0 %v324
  %520 = vmatmul.mubr.bf16.gmra.mxu0 %v323
  %v521 = vpop.f32.mrf.mxu0
  %v522 = vadd.f32 0.0, %v521
  %v523 = vpop.f32.mrf.mxu0
  %v524 = vpop.f32.mrf.mxu0
  %v525 = vadd.f32 0.0, %v524
  %v526 = vpop.f32.mrf.mxu0
  %527 = vmatprep.mubr.bf16.mxu0 %v326
  %528 = vmatmul.mubr.bf16.gmra.mxu0 %v325
  %v529 = vpop.f32.mrf.mxu0
  %v530 = vadd.f32 0.0, %v529
  %v531 = vpop.f32.mrf.mxu0
  %v532 = vpop.f32.mrf.mxu0
  %v533 = vadd.f32 0.0, %v532
  %v534 = vpop.f32.mrf.mxu0
  %535 = vdwg.mxu0
  %v552 = vunpack.c.l.b16 %v167
  %v553 = vunpack.c.h.b16 %v167
  %v554 = vunpack.c.l.b16 %v168
  %v555 = vunpack.c.h.b16 %v168
  %v556 = vunpack.c.l.b16 %v169
  %v557 = vunpack.c.h.b16 %v169
  %v558 = vunpack.c.l.b16 %v170
  %v559 = vunpack.c.h.b16 %v170
  %v560 = vunpack.c.l.b16 %v171
  %v561 = vunpack.c.h.b16 %v171
  %v562 = vunpack.c.l.b16 %v172
  %v563 = vunpack.c.h.b16 %v172
  %v564 = vunpack.c.l.b16 %v173
  %v565 = vunpack.c.h.b16 %v173
  %v566 = vunpack.c.l.b16 %v174
  %v567 = vunpack.c.h.b16 %v174
  %v568 = vunpack.c.l.b16 %v175
  %v569 = vunpack.c.h.b16 %v175
  %v570 = vunpack.c.l.b16 %v176
  %v571 = vunpack.c.h.b16 %v176
  %v572 = vunpack.c.l.b16 %v177
  %v573 = vunpack.c.h.b16 %v177
  %v574 = vunpack.c.l.b16 %v178
  %v575 = vunpack.c.h.b16 %v178
  %v576 = vunpack.c.l.b16 %v179
  %v577 = vunpack.c.h.b16 %v179
  %v578 = vunpack.c.l.b16 %v180
  %v579 = vunpack.c.h.b16 %v180
  %v580 = vunpack.c.l.b16 %v181
  %v581 = vunpack.c.h.b16 %v181
  %v582 = vunpack.c.l.b16 %v182
  %v583 = vunpack.c.h.b16 %v182
  %v584 = vpack.c.b16 %v554, %v552
  %v585 = vpack.c.b16 %v555, %v553
  %v586 = vpack.c.b16 %v558, %v556
  %v587 = vpack.c.b16 %v559, %v557
  %v588 = vpack.c.b16 %v562, %v560
  %v589 = vpack.c.b16 %v563, %v561
  %v590 = vpack.c.b16 %v566, %v564
  %v591 = vpack.c.b16 %v567, %v565
  %v592 = vpack.c.b16 %v570, %v568
  %v593 = vpack.c.b16 %v571, %v569
  %v594 = vpack.c.b16 %v574, %v572
  %v595 = vpack.c.b16 %v575, %v573
  %v596 = vpack.c.b16 %v578, %v576
  %v597 = vpack.c.b16 %v579, %v577
  %v598 = vpack.c.b16 %v582, %v580
  %v599 = vpack.c.b16 %v583, %v581
  %v648 = vunpack.c.l.b16 %v183
  %v649 = vunpack.c.l.b16 %v184
  %v650 = vunpack.c.l.b16 %v185
  %v651 = vunpack.c.l.b16 %v186
  %v652 = vunpack.c.l.b16 %v187
  %v653 = vunpack.c.l.b16 %v188
  %v654 = vunpack.c.l.b16 %v189
  %v655 = vunpack.c.l.b16 %v190
  %v656 = vunpack.c.l.b16 %v191
  %v657 = vunpack.c.l.b16 %v192
  %v658 = vunpack.c.l.b16 %v193
  %v659 = vunpack.c.l.b16 %v194
  %v660 = vunpack.c.l.b16 %v195
  %v661 = vunpack.c.l.b16 %v196
  %v662 = vunpack.c.l.b16 %v197
  %v663 = vunpack.c.l.b16 %v198
  %v664 = vunpack.c.l.b16 %v199
  %v665 = vunpack.c.l.b16 %v200
  %v666 = vunpack.c.l.b16 %v201
  %v667 = vunpack.c.l.b16 %v202
  %v668 = vunpack.c.l.b16 %v203
  %v669 = vunpack.c.l.b16 %v204
  %v670 = vunpack.c.l.b16 %v205
  %v671 = vunpack.c.l.b16 %v206
  %v672 = vunpack.c.l.b16 %v207
  %v673 = vunpack.c.l.b16 %v208
  %v674 = vunpack.c.l.b16 %v209
  %v675 = vunpack.c.l.b16 %v210
  %v676 = vunpack.c.l.b16 %v211
  %v677 = vunpack.c.l.b16 %v212
  %v678 = vunpack.c.l.b16 %v213
  %v679 = vunpack.c.l.b16 %v214
  %v680 = vpack.c.b16 %v649, %v648
  %v681 = vpack.c.b16 %v651, %v650
  %v682 = vpack.c.b16 %v653, %v652
  %v683 = vpack.c.b16 %v655, %v654
  %v684 = vpack.c.b16 %v657, %v656
  %v685 = vpack.c.b16 %v659, %v658
  %v686 = vpack.c.b16 %v661, %v660
  %v687 = vpack.c.b16 %v663, %v662
  %v688 = vpack.c.b16 %v665, %v664
  %v689 = vpack.c.b16 %v667, %v666
  %v690 = vpack.c.b16 %v669, %v668
  %v691 = vpack.c.b16 %v671, %v670
  %v692 = vpack.c.b16 %v673, %v672
  %v693 = vpack.c.b16 %v675, %v674
  %v694 = vpack.c.b16 %v677, %v676
  %v695 = vpack.c.b16 %v679, %v678
  %712 = vmatprep.subr.bf16.mxu0 0
  %713 = vmatpush1.bf16.msra.mxu0 %v687
  %714 = vmatprep.subr.bf16.mxu0 0
  %715 = vmatpush1.bf16.msra.mxu0 %v686
  %716 = vmatprep.subr.bf16.mxu0 0
  %717 = vmatpush1.bf16.msra.mxu0 %v685
  %718 = vmatprep.subr.bf16.mxu0 0
  %719 = vmatpush1.bf16.msra.mxu0 %v684
  %720 = vmatprep.subr.bf16.mxu0 0
  %721 = vmatpush1.bf16.msra.mxu0 %v683
  %722 = vmatprep.subr.bf16.mxu0 0
  %723 = vmatpush1.bf16.msra.mxu0 %v682
  %724 = vmatprep.subr.bf16.mxu0 0
  %725 = vmatpush1.bf16.msra.mxu0 %v681
  %726 = vmatprep.subr.bf16.mxu0 0
  %727 = vmatpush1.bf16.msra.mxu0 %v680
  %728 = vmatprep.subr.bf16.mxu0 0
  %729 = vmatpush2.bf16.msra.mxu0 %v695
  %730 = vmatprep.subr.bf16.mxu0 0
  %731 = vmatpush2.bf16.msra.mxu0 %v694
  %732 = vmatprep.subr.bf16.mxu0 0
  %733 = vmatpush2.bf16.msra.mxu0 %v693
  %734 = vmatprep.subr.bf16.mxu0 0
  %735 = vmatpush2.bf16.msra.mxu0 %v692
  %736 = vmatprep.subr.bf16.mxu0 0
  %737 = vmatpush2.bf16.msra.mxu0 %v691
  %738 = vmatprep.subr.bf16.mxu0 0
  %739 = vmatpush2.bf16.msra.mxu0 %v690
  %740 = vmatprep.subr.bf16.mxu0 0
  %741 = vmatpush2.bf16.msra.mxu0 %v689
  %742 = vmatprep.subr.bf16.mxu0 0
  %743 = vmatpush2.bf16.msra.mxu0 %v688
  %744 = vmatprep.mubr.bf16.mxu0 %v585
  %745 = vmatmul.mubr.bf16.gmra.mxu0 %v584
  %v746 = vpop.f32.mrf.mxu0
  %v747 = vadd.f32 %v474, %v746
  %v748 = vpop.f32.mrf.mxu0
  %v749 = vpop.f32.mrf.mxu0
  %v750 = vadd.f32 %v477, %v749
  %v751 = vpop.f32.mrf.mxu0
  %752 = vmatprep.mubr.bf16.mxu0 %v587
  %753 = vmatmul.mubr.bf16.gmra.mxu0 %v586
  %v754 = vpop.f32.mrf.mxu0
  %v755 = vadd.f32 %v482, %v754
  %v756 = vpop.f32.mrf.mxu0
  %v757 = vpop.f32.mrf.mxu0
  %v758 = vadd.f32 %v485, %v757
  %v759 = vpop.f32.mrf.mxu0
  %760 = vmatprep.mubr.bf16.mxu0 %v589
  %761 = vmatmul.mubr.bf16.gmra.mxu0 %v588
  %v762 = vpop.f32.mrf.mxu0
  %v763 = vadd.f32 %v490, %v762
  %v764 = vpop.f32.mrf.mxu0
  %v765 = vpop.f32.mrf.mxu0
  %v766 = vadd.f32 %v493, %v765
  %v767 = vpop.f32.mrf.mxu0
  %768 = vmatprep.mubr.bf16.mxu0 %v591
  %769 = vmatmul.mubr.bf16.gmra.mxu0 %v590
  %v770 = vpop.f32.mrf.mxu0
  %v771 = vadd.f32 %v498, %v770
  %v772 = vpop.f32.mrf.mxu0
  %v773 = vpop.f32.mrf.mxu0
  %v774 = vadd.f32 %v501, %v773
  %v775 = vpop.f32.mrf.mxu0
  %776 = vmatprep.mubr.bf16.mxu0 %v593
  %777 = vmatmul.mubr.bf16.gmra.mxu0 %v592
  %v778 = vpop.f32.mrf.mxu0
  %v779 = vadd.f32 %v506, %v778
  %v780 = vpop.f32.mrf.mxu0
  %v781 = vpop.f32.mrf.mxu0
  %v782 = vadd.f32 %v509, %v781
  %v783 = vpop.f32.mrf.mxu0
  %784 = vmatprep.mubr.bf16.mxu0 %v595
  %785 = vmatmul.mubr.bf16.gmra.mxu0 %v594
  %v786 = vpop.f32.mrf.mxu0
  %v787 = vadd.f32 %v514, %v786
  %v788 = vpop.f32.mrf.mxu0
  %v789 = vpop.f32.mrf.mxu0
  %v790 = vadd.f32 %v517, %v789
  %v791 = vpop.f32.mrf.mxu0
  %792 = vmatprep.mubr.bf16.mxu0 %v597
  %793 = vmatmul.mubr.bf16.gmra.mxu0 %v596
  %v794 = vpop.f32.mrf.mxu0
  %v795 = vadd.f32 %v522, %v794
  %v796 = vpop.f32.mrf.mxu0
  %v797 = vpop.f32.mrf.mxu0
  %v798 = vadd.f32 %v525, %v797
  %v799 = vpop.f32.mrf.mxu0
  %800 = vmatprep.mubr.bf16.mxu0 %v599
  %801 = vmatmul.mubr.bf16.gmra.mxu0 %v598
  %v802 = vpop.f32.mrf.mxu0
  %v803 = vadd.f32 %v530, %v802
  %v804 = vpop.f32.mrf.mxu0
  %v805 = vpop.f32.mrf.mxu0
  %v806 = vadd.f32 %v533, %v805
  %v807 = vpop.f32.mrf.mxu0
  %808 = vdwg.mxu0
  %v809 = vld [vmem:[#allocation2 + $0x10] sm:$0xff]
  %v810 = vld [vmem:[#allocation2 + $0x30] sm:$0xff]
  %v811 = vld [vmem:[#allocation2 + $0x50] sm:$0xff]
  %v812 = vld [vmem:[#allocation2 + $0x70] sm:$0xff]
  %v813 = vld [vmem:[#allocation2 + $0x90] sm:$0xff]
  %v814 = vld [vmem:[#allocation2 + $0xb0] sm:$0xff]
  %v815 = vld [vmem:[#allocation2 + $0xd0] sm:$0xff]
  %v816 = vld [vmem:[#allocation2 + $0xf0] sm:$0xff]
  %v817 = vld [vmem:[#allocation2 + $0x110] sm:$0xff]
  %v818 = vld [vmem:[#allocation2 + $0x130] sm:$0xff]
  %v819 = vld [vmem:[#allocation2 + $0x150] sm:$0xff]
  %v820 = vld [vmem:[#allocation2 + $0x170] sm:$0xff]
  %v821 = vld [vmem:[#allocation2 + $0x190] sm:$0xff]
  %v822 = vld [vmem:[#allocation2 + $0x1b0] sm:$0xff]
  %v823 = vld [vmem:[#allocation2 + $0x1d0] sm:$0xff]
  %v824 = vld [vmem:[#allocation2 + $0x1f0] sm:$0xff]
  %v825 = vld [vmem:[%s1 + $0x100] sm:$0xf]
  %v826 = vld [vmem:[%s1 + $0x104] sm:$0xf]
  %v827 = vld [vmem:[%s1 + $0x108] sm:$0xf]
  %v828 = vld [vmem:[%s1 + $0x10c] sm:$0xf]
  %v829 = vld [vmem:[%s1 + $0x110] sm:$0xf]
  %v830 = vld [vmem:[%s1 + $0x114] sm:$0xf]
  %v831 = vld [vmem:[%s1 + $0x118] sm:$0xf]
  %v832 = vld [vmem:[%s1 + $0x11c] sm:$0xf]
  %v833 = vld [vmem:[%s1 + $0x120] sm:$0xf]
  %v834 = vld [vmem:[%s1 + $0x124] sm:$0xf]
  %v835 = vld [vmem:[%s1 + $0x128] sm:$0xf]
  %v836 = vld [vmem:[%s1 + $0x12c] sm:$0xf]
  %v837 = vld [vmem:[%s1 + $0x130] sm:$0xf]
  %v838 = vld [vmem:[%s1 + $0x134] sm:$0xf]
  %v839 = vld [vmem:[%s1 + $0x138] sm:$0xf]
  %v840 = vld [vmem:[%s1 + $0x13c] sm:$0xf]
  %v841 = vld [vmem:[%s1 + $0x140] sm:$0xf]
  %v842 = vld [vmem:[%s1 + $0x144] sm:$0xf]
  %v843 = vld [vmem:[%s1 + $0x148] sm:$0xf]
  %v844 = vld [vmem:[%s1 + $0x14c] sm:$0xf]
  %v845 = vld [vmem:[%s1 + $0x150] sm:$0xf]
  %v846 = vld [vmem:[%s1 + $0x154] sm:$0xf]
  %v847 = vld [vmem:[%s1 + $0x158] sm:$0xf]
  %v848 = vld [vmem:[%s1 + $0x15c] sm:$0xf]
  %v849 = vld [vmem:[%s1 + $0x160] sm:$0xf]
  %v850 = vld [vmem:[%s1 + $0x164] sm:$0xf]
  %v851 = vld [vmem:[%s1 + $0x168] sm:$0xf]
  %v852 = vld [vmem:[%s1 + $0x16c] sm:$0xf]
  %v853 = vld [vmem:[%s1 + $0x170] sm:$0xf]
  %v854 = vld [vmem:[%s1 + $0x174] sm:$0xf]
  %v855 = vld [vmem:[%s1 + $0x178] sm:$0xf]
  %v856 = vld [vmem:[%s1 + $0x17c] sm:$0xf]
  %v873 = vunpack.c.l.b16 %v809
  %v874 = vunpack.c.h.b16 %v809
  %v875 = vunpack.c.l.b16 %v810
  %v876 = vunpack.c.h.b16 %v810
  %v877 = vunpack.c.l.b16 %v811
  %v878 = vunpack.c.h.b16 %v811
  %v879 = vunpack.c.l.b16 %v812
  %v880 = vunpack.c.h.b16 %v812
  %v881 = vunpack.c.l.b16 %v813
  %v882 = vunpack.c.h.b16 %v813
  %v883 = vunpack.c.l.b16 %v814
  %v884 = vunpack.c.h.b16 %v814
  %v885 = vunpack.c.l.b16 %v815
  %v886 = vunpack.c.h.b16 %v815
  %v887 = vunpack.c.l.b16 %v816
  %v888 = vunpack.c.h.b16 %v816
  %v889 = vunpack.c.l.b16 %v817
  %v890 = vunpack.c.h.b16 %v817
  %v891 = vunpack.c.l.b16 %v818
  %v892 = vunpack.c.h.b16 %v818
  %v893 = vunpack.c.l.b16 %v819
  %v894 = vunpack.c.h.b16 %v819
  %v895 = vunpack.c.l.b16 %v820
  %v896 = vunpack.c.h.b16 %v820
  %v897 = vunpack.c.l.b16 %v821
  %v898 = vunpack.c.h.b16 %v821
  %v899 = vunpack.c.l.b16 %v822
  %v900 = vunpack.c.h.b16 %v822
  %v901 = vunpack.c.l.b16 %v823
  %v902 = vunpack.c.h.b16 %v823
  %v903 = vunpack.c.l.b16 %v824
  %v904 = vunpack.c.h.b16 %v824
  %v905 = vpack.c.b16 %v875, %v873
  %v906 = vpack.c.b16 %v876, %v874
  %v907 = vpack.c.b16 %v879, %v877
  %v908 = vpack.c.b16 %v880, %v878
  %v909 = vpack.c.b16 %v883, %v881
  %v910 = vpack.c.b16 %v884, %v882
  %v911 = vpack.c.b16 %v887, %v885
  %v912 = vpack.c.b16 %v888, %v886
  %v913 = vpack.c.b16 %v891, %v889
  %v914 = vpack.c.b16 %v892, %v890
  %v915 = vpack.c.b16 %v895, %v893
  %v916 = vpack.c.b16 %v896, %v894
  %v917 = vpack.c.b16 %v899, %v897
  %v918 = vpack.c.b16 %v900, %v898
  %v919 = vpack.c.b16 %v903, %v901
  %v920 = vpack.c.b16 %v904, %v902
  %v969 = vunpack.c.l.b16 %v825
  %v970 = vunpack.c.l.b16 %v826
  %v971 = vunpack.c.l.b16 %v827
  %v972 = vunpack.c.l.b16 %v828
  %v973 = vunpack.c.l.b16 %v829
  %v974 = vunpack.c.l.b16 %v830
  %v975 = vunpack.c.l.b16 %v831
  %v976 = vunpack.c.l.b16 %v832
  %v977 = vunpack.c.l.b16 %v833
  %v978 = vunpack.c.l.b16 %v834
  %v979 = vunpack.c.l.b16 %v835
  %v980 = vunpack.c.l.b16 %v836
  %v981 = vunpack.c.l.b16 %v837
  %v982 = vunpack.c.l.b16 %v838
  %v983 = vunpack.c.l.b16 %v839
  %v984 = vunpack.c.l.b16 %v840
  %v985 = vunpack.c.l.b16 %v841
  %v986 = vunpack.c.l.b16 %v842
  %v987 = vunpack.c.l.b16 %v843
  %v988 = vunpack.c.l.b16 %v844
  %v989 = vunpack.c.l.b16 %v845
  %v990 = vunpack.c.l.b16 %v846
  %v991 = vunpack.c.l.b16 %v847
  %v992 = vunpack.c.l.b16 %v848
  %v993 = vunpack.c.l.b16 %v849
  %v994 = vunpack.c.l.b16 %v850
  %v995 = vunpack.c.l.b16 %v851
  %v996 = vunpack.c.l.b16 %v852
  %v997 = vunpack.c.l.b16 %v853
  %v998 = vunpack.c.l.b16 %v854
  %v999 = vunpack.c.l.b16 %v855
  %v1000 = vunpack.c.l.b16 %v856
  %v1001 = vpack.c.b16 %v970, %v969
  %v1002 = vpack.c.b16 %v972, %v971
  %v1003 = vpack.c.b16 %v974, %v973
  %v1004 = vpack.c.b16 %v976, %v975
  %v1005 = vpack.c.b16 %v978, %v977
  %v1006 = vpack.c.b16 %v980, %v979
  %v1007 = vpack.c.b16 %v982, %v981
  %v1008 = vpack.c.b16 %v984, %v983
  %v1009 = vpack.c.b16 %v986, %v985
  %v1010 = vpack.c.b16 %v988, %v987
  %v1011 = vpack.c.b16 %v990, %v989
  %v1012 = vpack.c.b16 %v992, %v991
  %v1013 = vpack.c.b16 %v994, %v993
  %v1014 = vpack.c.b16 %v996, %v995
  %v1015 = vpack.c.b16 %v998, %v997
  %v1016 = vpack.c.b16 %v1000, %v999
  %1033 = vmatprep.subr.bf16.mxu0 0
  %1034 = vmatpush1.bf16.msra.mxu0 %v1008
  %1035 = vmatprep.subr.bf16.mxu0 0
  %1036 = vmatpush1.bf16.msra.mxu0 %v1007
  %1037 = vmatprep.subr.bf16.mxu0 0
  %1038 = vmatpush1.bf16.msra.mxu0 %v1006
  %1039 = vmatprep.subr.bf16.mxu0 0
  %1040 = vmatpush1.bf16.msra.mxu0 %v1005
  %1041 = vmatprep.subr.bf16.mxu0 0
  %1042 = vmatpush1.bf16.msra.mxu0 %v1004
  %1043 = vmatprep.subr.bf16.mxu0 0
  %1044 = vmatpush1.bf16.msra.mxu0 %v1003
  %1045 = vmatprep.subr.bf16.mxu0 0
  %1046 = vmatpush1.bf16.msra.mxu0 %v1002
  %1047 = vmatprep.subr.bf16.mxu0 0
  %1048 = vmatpush1.bf16.msra.mxu0 %v1001
  %1049 = vmatprep.subr.bf16.mxu0 0
  %1050 = vmatpush2.bf16.msra.mxu0 %v1016
  %1051 = vmatprep.subr.bf16.mxu0 0
  %1052 = vmatpush2.bf16.msra.mxu0 %v1015
  %1053 = vmatprep.subr.bf16.mxu0 0
  %1054 = vmatpush2.bf16.msra.mxu0 %v1014
  %1055 = vmatprep.subr.bf16.mxu0 0
  %1056 = vmatpush2.bf16.msra.mxu0 %v1013
  %1057 = vmatprep.subr.bf16.mxu0 0
  %1058 = vmatpush2.bf16.msra.mxu0 %v1012
  %1059 = vmatprep.subr.bf16.mxu0 0
  %1060 = vmatpush2.bf16.msra.mxu0 %v1011
  %1061 = vmatprep.subr.bf16.mxu0 0
  %1062 = vmatpush2.bf16.msra.mxu0 %v1010
  %1063 = vmatprep.subr.bf16.mxu0 0
  %1064 = vmatpush2.bf16.msra.mxu0 %v1009
  %1065 = vmatprep.mubr.bf16.mxu0 %v906
  %1066 = vmatmul.mubr.bf16.gmra.mxu0 %v905
  %v1067 = vpop.f32.mrf.mxu0
  %v1068 = vadd.f32 0.0, %v1067
  %v1069 = vpop.f32.mrf.mxu0
  %v1070 = vpop.f32.mrf.mxu0
  %v1071 = vadd.f32 0.0, %v1070
  %v1072 = vpop.f32.mrf.mxu0
  %1073 = vmatprep.mubr.bf16.mxu0 %v908
  %1074 = vmatmul.mubr.bf16.gmra.mxu0 %v907
  %v1075 = vpop.f32.mrf.mxu0
  %v1076 = vadd.f32 0.0, %v1075
  %v1077 = vpop.f32.mrf.mxu0
  %v1078 = vpop.f32.mrf.mxu0
  %v1079 = vadd.f32 0.0, %v1078
  %v1080 = vpop.f32.mrf.mxu0
  %1081 = vmatprep.mubr.bf16.mxu0 %v910
  %1082 = vmatmul.mubr.bf16.gmra.mxu0 %v909
  %v1083 = vpop.f32.mrf.mxu0
  %v1084 = vadd.f32 0.0, %v1083
  %v1085 = vpop.f32.mrf.mxu0
  %v1086 = vpop.f32.mrf.mxu0
  %v1087 = vadd.f32 0.0, %v1086
  %v1088 = vpop.f32.mrf.mxu0
  %1089 = vmatprep.mubr.bf16.mxu0 %v912
  %1090 = vmatmul.mubr.bf16.gmra.mxu0 %v911
  %v1091 = vpop.f32.mrf.mxu0
  %v1092 = vadd.f32 0.0, %v1091
  %v1093 = vpop.f32.mrf.mxu0
  %v1094 = vpop.f32.mrf.mxu0
  %v1095 = vadd.f32 0.0, %v1094
  %v1096 = vpop.f32.mrf.mxu0
  %1097 = vmatprep.mubr.bf16.mxu0 %v914
  %1098 = vmatmul.mubr.bf16.gmra.mxu0 %v913
  %v1099 = vpop.f32.mrf.mxu0
  %v1100 = vadd.f32 0.0, %v1099
  %v1101 = vpop.f32.mrf.mxu0
  %v1102 = vpop.f32.mrf.mxu0
  %v1103 = vadd.f32 0.0, %v1102
  %v1104 = vpop.f32.mrf.mxu0
  %1105 = vmatprep.mubr.bf16.mxu0 %v916
  %1106 = vmatmul.mubr.bf16.gmra.mxu0 %v915
  %v1107 = vpop.f32.mrf.mxu0
  %v1108 = vadd.f32 0.0, %v1107
  %v1109 = vpop.f32.mrf.mxu0
  %v1110 = vpop.f32.mrf.mxu0
  %v1111 = vadd.f32 0.0, %v1110
  %v1112 = vpop.f32.mrf.mxu0
  %1113 = vmatprep.mubr.bf16.mxu0 %v918
  %1114 = vmatmul.mubr.bf16.gmra.mxu0 %v917
  %v1115 = vpop.f32.mrf.mxu0
  %v1116 = vadd.f32 0.0, %v1115
  %v1117 = vpop.f32.mrf.mxu0
  %v1118 = vpop.f32.mrf.mxu0
  %v1119 = vadd.f32 0.0, %v1118
  %v1120 = vpop.f32.mrf.mxu0
  %1121 = vmatprep.mubr.bf16.mxu0 %v920
  %1122 = vmatmul.mubr.bf16.gmra.mxu0 %v919
  %v1123 = vpop.f32.mrf.mxu0
  %v1124 = vadd.f32 0.0, %v1123
  %v1125 = vpop.f32.mrf.mxu0
  %v1126 = vpop.f32.mrf.mxu0
  %v1127 = vadd.f32 0.0, %v1126
  %v1128 = vpop.f32.mrf.mxu0
  %1129 = vdwg.mxu0
  %v1130 = vadd.f32 %v747, %v1068
  %v1131 = vadd.f32 %v750, %v1071
  %v1132 = vadd.f32 %v755, %v1076
  %v1133 = vadd.f32 %v758, %v1079
  %v1134 = vadd.f32 %v763, %v1084
  %v1135 = vadd.f32 %v766, %v1087
  %v1136 = vadd.f32 %v771, %v1092
  %v1137 = vadd.f32 %v774, %v1095
  %v1138 = vadd.f32 %v779, %v1100
  %v1139 = vadd.f32 %v782, %v1103
  %v1140 = vadd.f32 %v787, %v1108
  %v1141 = vadd.f32 %v790, %v1111
  %v1142 = vadd.f32 %v795, %v1116
  %v1143 = vadd.f32 %v798, %v1119
  %v1144 = vadd.f32 %v803, %v1124
  %v1145 = vadd.f32 %v806, %v1127
  %v1146 = vld [vmem:[#allocation2 + $0x18] sm:$0xff]
  %v1147 = vld [vmem:[#allocation2 + $0x38] sm:$0xff]
  %v1148 = vld [vmem:[#allocation2 + $0x58] sm:$0xff]
  %v1149 = vld [vmem:[#allocation2 + $0x78] sm:$0xff]
  %v1150 = vld [vmem:[#allocation2 + $0x98] sm:$0xff]
  %v1151 = vld [vmem:[#allocation2 + $0xb8] sm:$0xff]
  %v1152 = vld [vmem:[#allocation2 + $0xd8] sm:$0xff]
  %v1153 = vld [vmem:[#allocation2 + $0xf8] sm:$0xff]
  %v1154 = vld [vmem:[#allocation2 + $0x118] sm:$0xff]
  %v1155 = vld [vmem:[#allocation2 + $0x138] sm:$0xff]
  %v1156 = vld [vmem:[#allocation2 + $0x158] sm:$0xff]
  %v1157 = vld [vmem:[#allocation2 + $0x178] sm:$0xff]
  %v1158 = vld [vmem:[#allocation2 + $0x198] sm:$0xff]
  %v1159 = vld [vmem:[#allocation2 + $0x1b8] sm:$0xff]
  %v1160 = vld [vmem:[#allocation2 + $0x1d8] sm:$0xff]
  %v1161 = vld [vmem:[#allocation2 + $0x1f8] sm:$0xff]
  %v1162 = vld [vmem:[%s1 + $0x180] sm:$0xf]
  %v1163 = vld [vmem:[%s1 + $0x184] sm:$0xf]
  %v1164 = vld [vmem:[%s1 + $0x188] sm:$0xf]
  %v1165 = vld [vmem:[%s1 + $0x18c] sm:$0xf]
  %v1166 = vld [vmem:[%s1 + $0x190] sm:$0xf]
  %v1167 = vld [vmem:[%s1 + $0x194] sm:$0xf]
  %v1168 = vld [vmem:[%s1 + $0x198] sm:$0xf]
  %v1169 = vld [vmem:[%s1 + $0x19c] sm:$0xf]
  %v1170 = vld [vmem:[%s1 + $0x1a0] sm:$0xf]
  %v1171 = vld [vmem:[%s1 + $0x1a4] sm:$0xf]
  %v1172 = vld [vmem:[%s1 + $0x1a8] sm:$0xf]
  %v1173 = vld [vmem:[%s1 + $0x1ac] sm:$0xf]
  %v1174 = vld [vmem:[%s1 + $0x1b0] sm:$0xf]
  %v1175 = vld [vmem:[%s1 + $0x1b4] sm:$0xf]
  %v1176 = vld [vmem:[%s1 + $0x1b8] sm:$0xf]
  %v1177 = vld [vmem:[%s1 + $0x1bc] sm:$0xf]
  %v1178 = vld [vmem:[%s1 + $0x1c0] sm:$0xf]
  %v1179 = vld [vmem:[%s1 + $0x1c4] sm:$0xf]
  %v1180 = vld [vmem:[%s1 + $0x1c8] sm:$0xf]
  %v1181 = vld [vmem:[%s1 + $0x1cc] sm:$0xf]
  %v1182 = vld [vmem:[%s1 + $0x1d0] sm:$0xf]
  %v1183 = vld [vmem:[%s1 + $0x1d4] sm:$0xf]
  %v1184 = vld [vmem:[%s1 + $0x1d8] sm:$0xf]
  %v1185 = vld [vmem:[%s1 + $0x1dc] sm:$0xf]
  %v1186 = vld [vmem:[%s1 + $0x1e0] sm:$0xf]
  %v1187 = vld [vmem:[%s1 + $0x1e4] sm:$0xf]
  %v1188 = vld [vmem:[%s1 + $0x1e8] sm:$0xf]
  %v1189 = vld [vmem:[%s1 + $0x1ec] sm:$0xf]
  %v1190 = vld [vmem:[%s1 + $0x1f0] sm:$0xf]
  %v1191 = vld [vmem:[%s1 + $0x1f4] sm:$0xf]
  %v1192 = vld [vmem:[%s1 + $0x1f8] sm:$0xf]
  %v1193 = vld [vmem:[%s1 + $0x1fc] sm:$0xf]
  %v1210 = vunpack.c.l.b16 %v1146
  %v1211 = vunpack.c.h.b16 %v1146
  %v1212 = vunpack.c.l.b16 %v1147
  %v1213 = vunpack.c.h.b16 %v1147
  %v1214 = vunpack.c.l.b16 %v1148
  %v1215 = vunpack.c.h.b16 %v1148
  %v1216 = vunpack.c.l.b16 %v1149
  %v1217 = vunpack.c.h.b16 %v1149
  %v1218 = vunpack.c.l.b16 %v1150
  %v1219 = vunpack.c.h.b16 %v1150
  %v1220 = vunpack.c.l.b16 %v1151
  %v1221 = vunpack.c.h.b16 %v1151
  %v1222 = vunpack.c.l.b16 %v1152
  %v1223 = vunpack.c.h.b16 %v1152
  %v1224 = vunpack.c.l.b16 %v1153
  %v1225 = vunpack.c.h.b16 %v1153
  %v1226 = vunpack.c.l.b16 %v1154
  %v1227 = vunpack.c.h.b16 %v1154
  %v1228 = vunpack.c.l.b16 %v1155
  %v1229 = vunpack.c.h.b16 %v1155
  %v1230 = vunpack.c.l.b16 %v1156
  %v1231 = vunpack.c.h.b16 %v1156
  %v1232 = vunpack.c.l.b16 %v1157
  %v1233 = vunpack.c.h.b16 %v1157
  %v1234 = vunpack.c.l.b16 %v1158
  %v1235 = vunpack.c.h.b16 %v1158
  %v1236 = vunpack.c.l.b16 %v1159
  %v1237 = vunpack.c.h.b16 %v1159
  %v1238 = vunpack.c.l.b16 %v1160
  %v1239 = vunpack.c.h.b16 %v1160
  %v1240 = vunpack.c.l.b16 %v1161
  %v1241 = vunpack.c.h.b16 %v1161
  %v1242 = vpack.c.b16 %v1212, %v1210
  %v1243 = vpack.c.b16 %v1213, %v1211
  %v1244 = vpack.c.b16 %v1216, %v1214
  %v1245 = vpack.c.b16 %v1217, %v1215
  %v1246 = vpack.c.b16 %v1220, %v1218
  %v1247 = vpack.c.b16 %v1221, %v1219
  %v1248 = vpack.c.b16 %v1224, %v1222
  %v1249 = vpack.c.b16 %v1225, %v1223
  %v1250 = vpack.c.b16 %v1228, %v1226
  %v1251 = vpack.c.b16 %v1229, %v1227
  %v1252 = vpack.c.b16 %v1232, %v1230
  %v1253 = vpack.c.b16 %v1233, %v1231
  %v1254 = vpack.c.b16 %v1236, %v1234
  %v1255 = vpack.c.b16 %v1237, %v1235
  %v1256 = vpack.c.b16 %v1240, %v1238
  %v1257 = vpack.c.b16 %v1241, %v1239
  %v1306 = vunpack.c.l.b16 %v1162
  %v1307 = vunpack.c.l.b16 %v1163
  %v1308 = vunpack.c.l.b16 %v1164
  %v1309 = vunpack.c.l.b16 %v1165
  %v1310 = vunpack.c.l.b16 %v1166
  %v1311 = vunpack.c.l.b16 %v1167
  %v1312 = vunpack.c.l.b16 %v1168
  %v1313 = vunpack.c.l.b16 %v1169
  %v1314 = vunpack.c.l.b16 %v1170
  %v1315 = vunpack.c.l.b16 %v1171
  %v1316 = vunpack.c.l.b16 %v1172
  %v1317 = vunpack.c.l.b16 %v1173
  %v1318 = vunpack.c.l.b16 %v1174
  %v1319 = vunpack.c.l.b16 %v1175
  %v1320 = vunpack.c.l.b16 %v1176
  %v1321 = vunpack.c.l.b16 %v1177
  %v1322 = vunpack.c.l.b16 %v1178
  %v1323 = vunpack.c.l.b16 %v1179
  %v1324 = vunpack.c.l.b16 %v1180
  %v1325 = vunpack.c.l.b16 %v1181
  %v1326 = vunpack.c.l.b16 %v1182
  %v1327 = vunpack.c.l.b16 %v1183
  %v1328 = vunpack.c.l.b16 %v1184
  %v1329 = vunpack.c.l.b16 %v1185
  %v1330 = vunpack.c.l.b16 %v1186
  %v1331 = vunpack.c.l.b16 %v1187
  %v1332 = vunpack.c.l.b16 %v1188
  %v1333 = vunpack.c.l.b16 %v1189
  %v1334 = vunpack.c.l.b16 %v1190
  %v1335 = vunpack.c.l.b16 %v1191
  %v1336 = vunpack.c.l.b16 %v1192
  %v1337 = vunpack.c.l.b16 %v1193
  %v1338 = vpack.c.b16 %v1307, %v1306
  %v1339 = vpack.c.b16 %v1309, %v1308
  %v1340 = vpack.c.b16 %v1311, %v1310
  %v1341 = vpack.c.b16 %v1313, %v1312
  %v1342 = vpack.c.b16 %v1315, %v1314
  %v1343 = vpack.c.b16 %v1317, %v1316
  %v1344 = vpack.c.b16 %v1319, %v1318
  %v1345 = vpack.c.b16 %v1321, %v1320
  %v1346 = vpack.c.b16 %v1323, %v1322
  %v1347 = vpack.c.b16 %v1325, %v1324
  %v1348 = vpack.c.b16 %v1327, %v1326
  %v1349 = vpack.c.b16 %v1329, %v1328
  %v1350 = vpack.c.b16 %v1331, %v1330
  %v1351 = vpack.c.b16 %v1333, %v1332
  %v1352 = vpack.c.b16 %v1335, %v1334
  %v1353 = vpack.c.b16 %v1337, %v1336
  %1370 = vmatprep.subr.bf16.mxu0 0
  %1371 = vmatpush1.bf16.msra.mxu0 %v1345
  %1372 = vmatprep.subr.bf16.mxu0 0
  %1373 = vmatpush1.bf16.msra.mxu0 %v1344
  %1374 = vmatprep.subr.bf16.mxu0 0
  %1375 = vmatpush1.bf16.msra.mxu0 %v1343
  %1376 = vmatprep.subr.bf16.mxu0 0
  %1377 = vmatpush1.bf16.msra.mxu0 %v1342
  %1378 = vmatprep.subr.bf16.mxu0 0
  %1379 = vmatpush1.bf16.msra.mxu0 %v1341
  %1380 = vmatprep.subr.bf16.mxu0 0
  %1381 = vmatpush1.bf16.msra.mxu0 %v1340
  %1382 = vmatprep.subr.bf16.mxu0 0
  %1383 = vmatpush1.bf16.msra.mxu0 %v1339
  %1384 = vmatprep.subr.bf16.mxu0 0
  %1385 = vmatpush1.bf16.msra.mxu0 %v1338
  %1386 = vmatprep.subr.bf16.mxu0 0
  %1387 = vmatpush2.bf16.msra.mxu0 %v1353
  %1388 = vmatprep.subr.bf16.mxu0 0
  %1389 = vmatpush2.bf16.msra.mxu0 %v1352
  %1390 = vmatprep.subr.bf16.mxu0 0
  %1391 = vmatpush2.bf16.msra.mxu0 %v1351
  %1392 = vmatprep.subr.bf16.mxu0 0
  %1393 = vmatpush2.bf16.msra.mxu0 %v1350
  %1394 = vmatprep.subr.bf16.mxu0 0
  %1395 = vmatpush2.bf16.msra.mxu0 %v1349
  %1396 = vmatprep.subr.bf16.mxu0 0
  %1397 = vmatpush2.bf16.msra.mxu0 %v1348
  %1398 = vmatprep.subr.bf16.mxu0 0
  %1399 = vmatpush2.bf16.msra.mxu0 %v1347
  %1400 = vmatprep.subr.bf16.mxu0 0
  %1401 = vmatpush2.bf16.msra.mxu0 %v1346
  %1402 = vmatprep.mubr.bf16.mxu0 %v1243
  %1403 = vmatmul.mubr.bf16.gmra.mxu0 %v1242
  %v1404 = vpop.f32.mrf.mxu0
  %v1405 = vadd.f32 0.0, %v1404
  %v1406 = vpop.f32.mrf.mxu0
  %v1407 = vpop.f32.mrf.mxu0
  %v1408 = vadd.f32 0.0, %v1407
  %v1409 = vpop.f32.mrf.mxu0
  %1410 = vmatprep.mubr.bf16.mxu0 %v1245
  %1411 = vmatmul.mubr.bf16.gmra.mxu0 %v1244
  %v1412 = vpop.f32.mrf.mxu0
  %v1413 = vadd.f32 0.0, %v1412
  %v1414 = vpop.f32.mrf.mxu0
  %v1415 = vpop.f32.mrf.mxu0
  %v1416 = vadd.f32 0.0, %v1415
  %v1417 = vpop.f32.mrf.mxu0
  %1418 = vmatprep.mubr.bf16.mxu0 %v1247
  %1419 = vmatmul.mubr.bf16.gmra.mxu0 %v1246
  %v1420 = vpop.f32.mrf.mxu0
  %v1421 = vadd.f32 0.0, %v1420
  %v1422 = vpop.f32.mrf.mxu0
  %v1423 = vpop.f32.mrf.mxu0
  %v1424 = vadd.f32 0.0, %v1423
  %v1425 = vpop.f32.mrf.mxu0
  %1426 = vmatprep.mubr.bf16.mxu0 %v1249
  %1427 = vmatmul.mubr.bf16.gmra.mxu0 %v1248
  %v1428 = vpop.f32.mrf.mxu0
  %v1429 = vadd.f32 0.0, %v1428
  %v1430 = vpop.f32.mrf.mxu0
  %v1431 = vpop.f32.mrf.mxu0
  %v1432 = vadd.f32 0.0, %v1431
  %v1433 = vpop.f32.mrf.mxu0
  %1434 = vmatprep.mubr.bf16.mxu0 %v1251
  %1435 = vmatmul.mubr.bf16.gmra.mxu0 %v1250
  %v1436 = vpop.f32.mrf.mxu0
  %v1437 = vadd.f32 0.0, %v1436
  %v1438 = vpop.f32.mrf.mxu0
  %v1439 = vpop.f32.mrf.mxu0
  %v1440 = vadd.f32 0.0, %v1439
  %v1441 = vpop.f32.mrf.mxu0
  %1442 = vmatprep.mubr.bf16.mxu0 %v1253
  %1443 = vmatmul.mubr.bf16.gmra.mxu0 %v1252
  %v1444 = vpop.f32.mrf.mxu0
  %v1445 = vadd.f32 0.0, %v1444
  %v1446 = vpop.f32.mrf.mxu0
  %v1447 = vpop.f32.mrf.mxu0
  %v1448 = vadd.f32 0.0, %v1447
  %v1449 = vpop.f32.mrf.mxu0
  %1450 = vmatprep.mubr.bf16.mxu0 %v1255
  %1451 = vmatmul.mubr.bf16.gmra.mxu0 %v1254
  %v1452 = vpop.f32.mrf.mxu0
  %v1453 = vadd.f32 0.0, %v1452
  %v1454 = vpop.f32.mrf.mxu0
  %v1455 = vpop.f32.mrf.mxu0
  %v1456 = vadd.f32 0.0, %v1455
  %v1457 = vpop.f32.mrf.mxu0
  %1458 = vmatprep.mubr.bf16.mxu0 %v1257
  %1459 = vmatmul.mubr.bf16.gmra.mxu0 %v1256
  %v1460 = vpop.f32.mrf.mxu0
  %v1461 = vadd.f32 0.0, %v1460
  %v1462 = vpop.f32.mrf.mxu0
  %v1463 = vpop.f32.mrf.mxu0
  %v1464 = vadd.f32 0.0, %v1463
  %v1465 = vpop.f32.mrf.mxu0
  %1466 = vdwg.mxu0
  %v1467 = vadd.f32 %v1130, %v1405
  %v1468 = vadd.f32 %v1131, %v1408
  %v1469 = vadd.f32 %v1132, %v1413
  %v1470 = vadd.f32 %v1133, %v1416
  %v1471 = vadd.f32 %v1134, %v1421
  %v1472 = vadd.f32 %v1135, %v1424
  %v1473 = vadd.f32 %v1136, %v1429
  %v1474 = vadd.f32 %v1137, %v1432
  %v1475 = vadd.f32 %v1138, %v1437
  %v1476 = vadd.f32 %v1139, %v1440
  %v1477 = vadd.f32 %v1140, %v1445
  %v1478 = vadd.f32 %v1141, %v1448
  %v1479 = vadd.f32 %v1142, %v1453
  %v1480 = vadd.f32 %v1143, %v1456
  %v1481 = vadd.f32 %v1144, %v1461
  %v1482 = vadd.f32 %v1145, %v1464
  %v1483 = vld [vmem:[%s2] sm:$0x1]
  %v1485 = vlaneseq
  %v1486 = vshrl.u32 %v1485, 7
  %v1487 = vsub.s32 0, %v1486
  %v1488 = vrot.slane %v1483, %v1487
  %v1490 = vadd.f32 %v1467, %v1488
  %v1491 = vadd.f32 %v1468, %v1488
  %v1492 = vadd.f32 %v1469, %v1488
  %v1493 = vadd.f32 %v1470, %v1488
  %v1494 = vadd.f32 %v1471, %v1488
  %v1495 = vadd.f32 %v1472, %v1488
  %v1496 = vadd.f32 %v1473, %v1488
  %v1497 = vadd.f32 %v1474, %v1488
  %v1498 = vadd.f32 %v1475, %v1488
  %v1499 = vadd.f32 %v1476, %v1488
  %v1500 = vadd.f32 %v1477, %v1488
  %v1501 = vadd.f32 %v1478, %v1488
  %v1502 = vadd.f32 %v1479, %v1488
  %v1503 = vadd.f32 %v1480, %v1488
  %v1504 = vadd.f32 %v1481, %v1488
  %v1505 = vadd.f32 %v1482, %v1488
  %v1506 = vmax.f32 %v1490, 0.0
  %v1507 = vmax.f32 %v1491, 0.0
  %v1508 = vmax.f32 %v1492, 0.0
  %v1509 = vmax.f32 %v1493, 0.0
  %v1510 = vmax.f32 %v1494, 0.0
  %v1511 = vmax.f32 %v1495, 0.0
  %v1512 = vmax.f32 %v1496, 0.0
  %v1513 = vmax.f32 %v1497, 0.0
  %v1514 = vmax.f32 %v1498, 0.0
  %v1515 = vmax.f32 %v1499, 0.0
  %v1516 = vmax.f32 %v1500, 0.0
  %v1517 = vmax.f32 %v1501, 0.0
  %v1518 = vmax.f32 %v1502, 0.0
  %v1519 = vmax.f32 %v1503, 0.0
  %v1520 = vmax.f32 %v1504, 0.0
  %v1521 = vmax.f32 %v1505, 0.0
  %v1522 = vpack.c.bf16 %v1507, %v1506
  %v1523 = vpack.c.bf16 %v1509, %v1508
  %v1524 = vpack.c.bf16 %v1511, %v1510
  %v1525 = vpack.c.bf16 %v1513, %v1512
  %v1526 = vpack.c.bf16 %v1515, %v1514
  %v1527 = vpack.c.bf16 %v1517, %v1516
  %v1528 = vpack.c.bf16 %v1519, %v1518
  %v1529 = vpack.c.bf16 %v1521, %v1520
  %v1538 = vunpack.c.l.b16 %v1522
  %v1539 = vunpack.c.h.b16 %v1522
  %v1540 = vunpack.c.l.b16 %v1523
  %v1541 = vunpack.c.h.b16 %v1523
  %v1542 = vunpack.c.l.b16 %v1524
  %v1543 = vunpack.c.h.b16 %v1524
  %v1544 = vunpack.c.l.b16 %v1525
  %v1545 = vunpack.c.h.b16 %v1525
  %v1546 = vunpack.c.l.b16 %v1526
  %v1547 = vunpack.c.h.b16 %v1526
  %v1548 = vunpack.c.l.b16 %v1527
  %v1549 = vunpack.c.h.b16 %v1527
  %v1550 = vunpack.c.l.b16 %v1528
  %v1551 = vunpack.c.h.b16 %v1528
  %v1552 = vunpack.c.l.b16 %v1529
  %v1553 = vunpack.c.h.b16 %v1529
  %v1554 = vpack.c.b16 %v1538, %v1538
  %v1555 = vpack.c.b16 %v1539, %v1539
  %v1556 = vpack.c.b16 %v1540, %v1540
  %v1557 = vpack.c.b16 %v1541, %v1541
  %v1558 = vpack.c.b16 %v1542, %v1542
  %v1559 = vpack.c.b16 %v1543, %v1543
  %v1560 = vpack.c.b16 %v1544, %v1544
  %v1561 = vpack.c.b16 %v1545, %v1545
  %v1562 = vpack.c.b16 %v1546, %v1546
  %v1563 = vpack.c.b16 %v1547, %v1547
  %v1564 = vpack.c.b16 %v1548, %v1548
  %v1565 = vpack.c.b16 %v1549, %v1549
  %v1566 = vpack.c.b16 %v1550, %v1550
  %v1567 = vpack.c.b16 %v1551, %v1551
  %v1568 = vpack.c.b16 %v1552, %v1552
  %v1569 = vpack.c.b16 %v1553, %v1553
  %1586 = vst [vmem:[#allocation3] sm:$0xf] %v1554
  %1587 = vst [vmem:[#allocation3 + $0x4] sm:$0xf] %v1555
  %1588 = vst [vmem:[#allocation3 + $0x8] sm:$0xf] %v1556
  %1589 = vst [vmem:[#allocation3 + $0xc] sm:$0xf] %v1557
  %1590 = vst [vmem:[#allocation3 + $0x10] sm:$0xf] %v1558
  %1591 = vst [vmem:[#allocation3 + $0x14] sm:$0xf] %v1559
  %1592 = vst [vmem:[#allocation3 + $0x18] sm:$0xf] %v1560
  %1593 = vst [vmem:[#allocation3 + $0x1c] sm:$0xf] %v1561
  %1594 = vst [vmem:[#allocation3 + $0x20] sm:$0xf] %v1562
  %1595 = vst [vmem:[#allocation3 + $0x24] sm:$0xf] %v1563
  %1596 = vst [vmem:[#allocation3 + $0x28] sm:$0xf] %v1564
  %1597 = vst [vmem:[#allocation3 + $0x2c] sm:$0xf] %v1565
  %1598 = vst [vmem:[#allocation3 + $0x30] sm:$0xf] %v1566
  %1599 = vst [vmem:[#allocation3 + $0x34] sm:$0xf] %v1567
  %1600 = vst [vmem:[#allocation3 + $0x38] sm:$0xf] %v1568
  %1601 = vst [vmem:[#allocation3 + $0x3c] sm:$0xf] %v1569
  %v1602 = vld [vmem:[#allocation3] sm:$0xf]
  %v1603 = vld [vmem:[#allocation3 + $0x4] sm:$0xf]
  %v1604 = vld [vmem:[#allocation3 + $0x8] sm:$0xf]
  %1605 = vst [vmem:[#allocation4] sm:$0xf] %v1602
  %1606 = vst [vmem:[#allocation4 + $0x10] sm:$0xf] %v1603
  %1607 = vst [vmem:[#allocation4 + $0x20] sm:$0xf] %v1604
  %v1608 = vld [vmem:[#allocation3 + $0x4] sm:$0xf]
  %v1609 = vld [vmem:[#allocation3 + $0x8] sm:$0xf]
  %v1610 = vld [vmem:[#allocation3 + $0xc] sm:$0xf]
  %1611 = vst [vmem:[#allocation4 + $0x4] sm:$0xf] %v1608
  %1612 = vst [vmem:[#allocation4 + $0x14] sm:$0xf] %v1609
  %1613 = vst [vmem:[#allocation4 + $0x24] sm:$0xf] %v1610
  %v1614 = vld [vmem:[#allocation3 + $0x10] sm:$0xf]
  %v1615 = vld [vmem:[#allocation3 + $0x14] sm:$0xf]
  %v1616 = vld [vmem:[#allocation3 + $0x18] sm:$0xf]
  %1617 = vst [vmem:[#allocation4 + $0x8] sm:$0xf] %v1614
  %1618 = vst [vmem:[#allocation4 + $0x18] sm:$0xf] %v1615
  %1619 = vst [vmem:[#allocation4 + $0x28] sm:$0xf] %v1616
  %v1620 = vld [vmem:[#allocation3 + $0x14] sm:$0xf]
  %v1621 = vld [vmem:[#allocation3 + $0x18] sm:$0xf]
  %v1622 = vld [vmem:[#allocation3 + $0x1c] sm:$0xf]
  %1623 = vst [vmem:[#allocation4 + $0xc] sm:$0xf] %v1620
  %1624 = vst [vmem:[#allocation4 + $0x1c] sm:$0xf] %v1621
  %1625 = vst [vmem:[#allocation4 + $0x2c] sm:$0xf] %v1622
  %v1626 = vld [vmem:[#allocation3 + $0x10] sm:$0xf]
  %v1627 = vld [vmem:[#allocation3 + $0x14] sm:$0xf]
  %v1628 = vld [vmem:[#allocation3 + $0x18] sm:$0xf]
  %1629 = vst [vmem:[#allocation4 + $0x30] sm:$0xf] %v1626
  %1630 = vst [vmem:[#allocation4 + $0x40] sm:$0xf] %v1627
  %1631 = vst [vmem:[#allocation4 + $0x50] sm:$0xf] %v1628
  %v1632 = vld [vmem:[#allocation3 + $0x14] sm:$0xf]
  %v1633 = vld [vmem:[#allocation3 + $0x18] sm:$0xf]
  %v1634 = vld [vmem:[#allocation3 + $0x1c] sm:$0xf]
  %1635 = vst [vmem:[#allocation4 + $0x34] sm:$0xf] %v1632
  %1636 = vst [vmem:[#allocation4 + $0x44] sm:$0xf] %v1633
  %1637 = vst [vmem:[#allocation4 + $0x54] sm:$0xf] %v1634
  %v1638 = vld [vmem:[#allocation3 + $0x20] sm:$0xf]
  %v1639 = vld [vmem:[#allocation3 + $0x24] sm:$0xf]
  %v1640 = vld [vmem:[#allocation3 + $0x28] sm:$0xf]
  %1641 = vst [vmem:[#allocation4 + $0x38] sm:$0xf] %v1638
  %1642 = vst [vmem:[#allocation4 + $0x48] sm:$0xf] %v1639
  %1643 = vst [vmem:[#allocation4 + $0x58] sm:$0xf] %v1640
  %v1644 = vld [vmem:[#allocation3 + $0x24] sm:$0xf]
  %v1645 = vld [vmem:[#allocation3 + $0x28] sm:$0xf]
  %v1646 = vld [vmem:[#allocation3 + $0x2c] sm:$0xf]
  %1647 = vst [vmem:[#allocation4 + $0x3c] sm:$0xf] %v1644
  %1648 = vst [vmem:[#allocation4 + $0x4c] sm:$0xf] %v1645
  %1649 = vst [vmem:[#allocation4 + $0x5c] sm:$0xf] %v1646
  %v1650 = vld [vmem:[#allocation3 + $0x20] sm:$0xf]
  %v1651 = vld [vmem:[#allocation3 + $0x24] sm:$0xf]
  %v1652 = vld [vmem:[#allocation3 + $0x28] sm:$0xf]
  %1653 = vst [vmem:[#allocation4 + $0x60] sm:$0xf] %v1650
  %1654 = vst [vmem:[#allocation4 + $0x70] sm:$0xf] %v1651
  %1655 = vst [vmem:[#allocation4 + $0x80] sm:$0xf] %v1652
  %v1656 = vld [vmem:[#allocation3 + $0x24] sm:$0xf]
  %v1657 = vld [vmem:[#allocation3 + $0x28] sm:$0xf]
  %v1658 = vld [vmem:[#allocation3 + $0x2c] sm:$0xf]
  %1659 = vst [vmem:[#allocation4 + $0x64] sm:$0xf] %v1656
  %1660 = vst [vmem:[#allocation4 + $0x74] sm:$0xf] %v1657
  %1661 = vst [vmem:[#allocation4 + $0x84] sm:$0xf] %v1658
  %v1662 = vld [vmem:[#allocation3 + $0x30] sm:$0xf]
  %v1663 = vld [vmem:[#allocation3 + $0x34] sm:$0xf]
  %v1664 = vld [vmem:[#allocation3 + $0x38] sm:$0xf]
  %1665 = vst [vmem:[#allocation4 + $0x68] sm:$0xf] %v1662
  %1666 = vst [vmem:[#allocation4 + $0x78] sm:$0xf] %v1663
  %1667 = vst [vmem:[#allocation4 + $0x88] sm:$0xf] %v1664
  %v1668 = vld [vmem:[#allocation3 + $0x34] sm:$0xf]
  %v1669 = vld [vmem:[#allocation3 + $0x38] sm:$0xf]
  %v1670 = vld [vmem:[#allocation3 + $0x3c] sm:$0xf]
  %1671 = vst [vmem:[#allocation4 + $0x6c] sm:$0xf] %v1668
  %1672 = vst [vmem:[#allocation4 + $0x7c] sm:$0xf] %v1669
  %1673 = vst [vmem:[#allocation4 + $0x8c] sm:$0xf] %v1670
  %v1674 = vld [vmem:[#allocation4] sm:$0xff]
  %v1675 = vld [vmem:[#allocation4 + $0x8] sm:$0xff]
  %v1676 = vld [vmem:[#allocation4 + $0x10] sm:$0xff]
  %v1677 = vld [vmem:[#allocation4 + $0x18] sm:$0xff]
  %v1678 = vld [vmem:[#allocation4 + $0x20] sm:$0xff]
  %v1679 = vld [vmem:[#allocation4 + $0x28] sm:$0xff]
  %v1680 = vld [vmem:[#allocation4 + $0x30] sm:$0xff]
  %v1681 = vld [vmem:[#allocation4 + $0x38] sm:$0xff]
  %v1682 = vld [vmem:[#allocation4 + $0x40] sm:$0xff]
  %v1683 = vld [vmem:[#allocation4 + $0x48] sm:$0xff]
  %v1684 = vld [vmem:[#allocation4 + $0x50] sm:$0xff]
  %v1685 = vld [vmem:[#allocation4 + $0x58] sm:$0xff]
  %v1686 = vld [vmem:[#allocation4 + $0x60] sm:$0xff]
  %v1687 = vld [vmem:[#allocation4 + $0x68] sm:$0xff]
  %v1688 = vld [vmem:[#allocation4 + $0x70] sm:$0xff]
  %v1689 = vld [vmem:[#allocation4 + $0x78] sm:$0xff]
  %v1690 = vld [vmem:[#allocation4 + $0x80] sm:$0xff]
  %v1691 = vld [vmem:[#allocation4 + $0x88] sm:$0xff]
  %v1692 = vld [vmem:[%s3] sm:$0xf]
  %v1693 = vld [vmem:[%s3 + $0x4] sm:$0xf]
  %v1694 = vld [vmem:[%s3 + $0x8] sm:$0xf]
  %v1695 = vld [vmem:[%s3 + $0xc] sm:$0xf]
  %v1696 = vld [vmem:[%s3 + $0x10] sm:$0xf]
  %v1697 = vld [vmem:[%s3 + $0x14] sm:$0xf]
  %v1698 = vld [vmem:[%s3 + $0x18] sm:$0xf]
  %v1699 = vld [vmem:[%s3 + $0x1c] sm:$0xf]
  %v1700 = vld [vmem:[%s3 + $0x20] sm:$0xf]
  %v1701 = vld [vmem:[%s3 + $0x24] sm:$0xf]
  %v1702 = vld [vmem:[%s3 + $0x28] sm:$0xf]
  %v1703 = vld [vmem:[%s3 + $0x2c] sm:$0xf]
  %v1704 = vld [vmem:[%s3 + $0x30] sm:$0xf]
  %v1705 = vld [vmem:[%s3 + $0x34] sm:$0xf]
  %v1706 = vld [vmem:[%s3 + $0x38] sm:$0xf]
  %v1707 = vld [vmem:[%s3 + $0x3c] sm:$0xf]
  %v1708 = vld [vmem:[%s3 + $0x40] sm:$0xf]
  %v1709 = vld [vmem:[%s3 + $0x44] sm:$0xf]
  %v1710 = vld [vmem:[%s3 + $0x48] sm:$0xf]
  %v1711 = vld [vmem:[%s3 + $0x4c] sm:$0xf]
  %v1712 = vld [vmem:[%s3 + $0x50] sm:$0xf]
  %v1713 = vld [vmem:[%s3 + $0x54] sm:$0xf]
  %v1714 = vld [vmem:[%s3 + $0x58] sm:$0xf]
  %v1715 = vld [vmem:[%s3 + $0x5c] sm:$0xf]
  %v1716 = vld [vmem:[%s3 + $0x60] sm:$0xf]
  %v1717 = vld [vmem:[%s3 + $0x64] sm:$0xf]
  %v1718 = vld [vmem:[%s3 + $0x68] sm:$0xf]
  %v1719 = vld [vmem:[%s3 + $0x6c] sm:$0xf]
  %v1720 = vld [vmem:[%s3 + $0x70] sm:$0xf]
  %v1721 = vld [vmem:[%s3 + $0x74] sm:$0xf]
  %v1722 = vld [vmem:[%s3 + $0x78] sm:$0xf]
  %v1723 = vld [vmem:[%s3 + $0x7c] sm:$0xf]
  %v1724 = vld [vmem:[%s3 + $0x80] sm:$0xf]
  %v1725 = vld [vmem:[%s3 + $0x84] sm:$0xf]
  %v1726 = vld [vmem:[%s3 + $0x88] sm:$0xf]
  %v1727 = vld [vmem:[%s3 + $0x8c] sm:$0xf]
  %v1728 = vld [vmem:[%s3 + $0x90] sm:$0xf]
  %v1729 = vld [vmem:[%s3 + $0x94] sm:$0xf]
  %v1730 = vld [vmem:[%s3 + $0x98] sm:$0xf]
  %v1731 = vld [vmem:[%s3 + $0x9c] sm:$0xf]
  %v1732 = vld [vmem:[%s3 + $0xa0] sm:$0xf]
  %v1733 = vld [vmem:[%s3 + $0xa4] sm:$0xf]
  %v1734 = vld [vmem:[%s3 + $0xa8] sm:$0xf]
  %v1735 = vld [vmem:[%s3 + $0xac] sm:$0xf]
  %v1736 = vld [vmem:[%s3 + $0xb0] sm:$0xf]
  %v1737 = vld [vmem:[%s3 + $0xb4] sm:$0xf]
  %v1738 = vld [vmem:[%s3 + $0xb8] sm:$0xf]
  %v1739 = vld [vmem:[%s3 + $0xbc] sm:$0xf]
  %v1740 = vld [vmem:[%s3 + $0xc0] sm:$0xf]
  %v1741 = vld [vmem:[%s3 + $0xc4] sm:$0xf]
  %v1742 = vld [vmem:[%s3 + $0xc8] sm:$0xf]
  %v1743 = vld [vmem:[%s3 + $0xcc] sm:$0xf]
  %v1744 = vld [vmem:[%s3 + $0xd0] sm:$0xf]
  %v1745 = vld [vmem:[%s3 + $0xd4] sm:$0xf]
  %v1746 = vld [vmem:[%s3 + $0xd8] sm:$0xf]
  %v1747 = vld [vmem:[%s3 + $0xdc] sm:$0xf]
  %v1748 = vld [vmem:[%s3 + $0xe0] sm:$0xf]
  %v1749 = vld [vmem:[%s3 + $0xe4] sm:$0xf]
  %v1750 = vld [vmem:[%s3 + $0xe8] sm:$0xf]
  %v1751 = vld [vmem:[%s3 + $0xec] sm:$0xf]
  %v1752 = vld [vmem:[%s3 + $0xf0] sm:$0xf]
  %v1753 = vld [vmem:[%s3 + $0xf4] sm:$0xf]
  %v1754 = vld [vmem:[%s3 + $0xf8] sm:$0xf]
  %v1755 = vld [vmem:[%s3 + $0xfc] sm:$0xf]
  %v1756 = vld [vmem:[%s4] sm:$0x1]
  %v1758 = vlaneseq
  %v1759 = vshrl.u32 %v1758, 7
  %v1760 = vsub.s32 0, %v1759
  %v1761 = vrot.slane %v1756, %v1760
  %v1781 = vunpack.c.l.b16 %v1674
  %v1782 = vunpack.c.h.b16 %v1674
  %v1783 = vunpack.c.l.b16 %v1675
  %v1784 = vunpack.c.h.b16 %v1675
  %v1785 = vunpack.c.l.b16 %v1676
  %v1786 = vunpack.c.h.b16 %v1676
  %v1787 = vunpack.c.l.b16 %v1677
  %v1788 = vunpack.c.h.b16 %v1677
  %v1789 = vunpack.c.l.b16 %v1678
  %v1790 = vunpack.c.h.b16 %v1678
  %v1791 = vunpack.c.l.b16 %v1679
  %v1792 = vunpack.c.h.b16 %v1679
  %v1793 = vunpack.c.l.b16 %v1680
  %v1794 = vunpack.c.h.b16 %v1680
  %v1795 = vunpack.c.l.b16 %v1681
  %v1796 = vunpack.c.h.b16 %v1681
  %v1797 = vunpack.c.l.b16 %v1682
  %v1798 = vunpack.c.h.b16 %v1682
  %v1799 = vunpack.c.l.b16 %v1683
  %v1800 = vunpack.c.h.b16 %v1683
  %v1801 = vunpack.c.l.b16 %v1684
  %v1802 = vunpack.c.h.b16 %v1684
  %v1803 = vunpack.c.l.b16 %v1685
  %v1804 = vunpack.c.h.b16 %v1685
  %v1805 = vunpack.c.l.b16 %v1686
  %v1806 = vunpack.c.h.b16 %v1686
  %v1807 = vunpack.c.l.b16 %v1687
  %v1808 = vunpack.c.h.b16 %v1687
  %v1809 = vunpack.c.l.b16 %v1688
  %v1810 = vunpack.c.h.b16 %v1688
  %v1811 = vunpack.c.l.b16 %v1689
  %v1812 = vunpack.c.h.b16 %v1689
  %v1813 = vunpack.c.l.b16 %v1690
  %v1814 = vunpack.c.h.b16 %v1690
  %v1815 = vunpack.c.l.b16 %v1691
  %v1816 = vunpack.c.h.b16 %v1691
  %v1817 = vpack.c.b16 %v1785, %v1781
  %v1818 = vpack.c.b16 %v1786, %v1782
  %v1819 = vpack.c.b16 %v1787, %v1783
  %v1820 = vpack.c.b16 %v1788, %v1784
  %v1821 = vpack.c.b16 %v1793, %v1789
  %v1822 = vpack.c.b16 %v1794, %v1790
  %v1823 = vpack.c.b16 %v1795, %v1791
  %v1824 = vpack.c.b16 %v1796, %v1792
  %v1825 = vpack.c.b16 %v1801, %v1797
  %v1826 = vpack.c.b16 %v1802, %v1798
  %v1827 = vpack.c.b16 %v1803, %v1799
  %v1828 = vpack.c.b16 %v1804, %v1800
  %v1829 = vpack.c.b16 %v1809, %v1805
  %v1830 = vpack.c.b16 %v1810, %v1806
  %v1831 = vpack.c.b16 %v1811, %v1807
  %v1832 = vpack.c.b16 %v1812, %v1808
  %v1833 = vpack.c.b16 %v1813, %v1813
  %v1834 = vpack.c.b16 %v1814, %v1814
  %v1835 = vpack.c.b16 %v1815, %v1815
  %v1836 = vpack.c.b16 %v1816, %v1816
  %v1921 = vunpack.c.l.b16 %v1692
  %v1922 = vunpack.c.l.b16 %v1693
  %v1923 = vunpack.c.l.b16 %v1694
  %v1924 = vunpack.c.l.b16 %v1695
  %v1925 = vunpack.c.l.b16 %v1696
  %v1926 = vunpack.c.l.b16 %v1697
  %v1927 = vunpack.c.l.b16 %v1698
  %v1928 = vunpack.c.l.b16 %v1699
  %v1929 = vunpack.c.l.b16 %v1700
  %v1930 = vunpack.c.l.b16 %v1701
  %v1931 = vunpack.c.l.b16 %v1702
  %v1932 = vunpack.c.l.b16 %v1703
  %v1933 = vunpack.c.l.b16 %v1704
  %v1934 = vunpack.c.l.b16 %v1705
  %v1935 = vunpack.c.l.b16 %v1706
  %v1936 = vunpack.c.l.b16 %v1707
  %v1937 = vunpack.c.l.b16 %v1708
  %v1938 = vunpack.c.l.b16 %v1709
  %v1939 = vunpack.c.l.b16 %v1710
  %v1940 = vunpack.c.l.b16 %v1711
  %v1941 = vunpack.c.l.b16 %v1712
  %v1942 = vunpack.c.l.b16 %v1713
  %v1943 = vunpack.c.l.b16 %v1714
  %v1944 = vunpack.c.l.b16 %v1715
  %v1945 = vunpack.c.l.b16 %v1716
  %v1946 = vunpack.c.l.b16 %v1717
  %v1947 = vunpack.c.l.b16 %v1718
  %v1948 = vunpack.c.l.b16 %v1719
  %v1949 = vunpack.c.l.b16 %v1720
  %v1950 = vunpack.c.l.b16 %v1721
  %v1951 = vunpack.c.l.b16 %v1722
  %v1952 = vunpack.c.l.b16 %v1723
  %v1953 = vunpack.c.l.b16 %v1724
  %v1954 = vunpack.c.l.b16 %v1725
  %v1955 = vunpack.c.l.b16 %v1726
  %v1956 = vunpack.c.l.b16 %v1727
  %v1957 = vunpack.c.l.b16 %v1728
  %v1958 = vunpack.c.l.b16 %v1729
  %v1959 = vunpack.c.l.b16 %v1730
  %v1960 = vunpack.c.l.b16 %v1731
  %v1961 = vunpack.c.l.b16 %v1732
  %v1962 = vunpack.c.l.b16 %v1733
  %v1963 = vunpack.c.l.b16 %v1734
  %v1964 = vunpack.c.l.b16 %v1735
  %v1965 = vunpack.c.l.b16 %v1736
  %v1966 = vunpack.c.l.b16 %v1737
  %v1967 = vunpack.c.l.b16 %v1738
  %v1968 = vunpack.c.l.b16 %v1739
  %v1969 = vunpack.c.l.b16 %v1740
  %v1970 = vunpack.c.l.b16 %v1741
  %v1971 = vunpack.c.l.b16 %v1742
  %v1972 = vunpack.c.l.b16 %v1743
  %v1973 = vunpack.c.l.b16 %v1744
  %v1974 = vunpack.c.l.b16 %v1745
  %v1975 = vunpack.c.l.b16 %v1746
  %v1976 = vunpack.c.l.b16 %v1747
  %v1977 = vunpack.c.l.b16 %v1748
  %v1978 = vunpack.c.l.b16 %v1749
  %v1979 = vunpack.c.l.b16 %v1750
  %v1980 = vunpack.c.l.b16 %v1751
  %v1981 = vunpack.c.l.b16 %v1752
  %v1982 = vunpack.c.l.b16 %v1753
  %v1983 = vunpack.c.l.b16 %v1754
  %v1984 = vunpack.c.l.b16 %v1755
  %v1985 = vpack.c.b16 %v1922, %v1921
  %v1986 = vpack.c.b16 %v1924, %v1923
  %v1987 = vpack.c.b16 %v1926, %v1925
  %v1988 = vpack.c.b16 %v1928, %v1927
  %v1989 = vpack.c.b16 %v1930, %v1929
  %v1990 = vpack.c.b16 %v1932, %v1931
  %v1991 = vpack.c.b16 %v1934, %v1933
  %v1992 = vpack.c.b16 %v1936, %v1935
  %v1993 = vpack.c.b16 %v1938, %v1937
  %v1994 = vpack.c.b16 %v1940, %v1939
  %v1995 = vpack.c.b16 %v1942, %v1941
  %v1996 = vpack.c.b16 %v1944, %v1943
  %v1997 = vpack.c.b16 %v1946, %v1945
  %v1998 = vpack.c.b16 %v1948, %v1947
  %v1999 = vpack.c.b16 %v1950, %v1949
  %v2000 = vpack.c.b16 %v1952, %v1951
  %v2001 = vpack.c.b16 %v1954, %v1953
  %v2002 = vpack.c.b16 %v1956, %v1955
  %v2003 = vpack.c.b16 %v1958, %v1957
  %v2004 = vpack.c.b16 %v1960, %v1959
  %v2005 = vpack.c.b16 %v1962, %v1961
  %v2006 = vpack.c.b16 %v1964, %v1963
  %v2007 = vpack.c.b16 %v1966, %v1965
  %v2008 = vpack.c.b16 %v1968, %v1967
  %v2009 = vpack.c.b16 %v1970, %v1969
  %v2010 = vpack.c.b16 %v1972, %v1971
  %v2011 = vpack.c.b16 %v1974, %v1973
  %v2012 = vpack.c.b16 %v1976, %v1975
  %v2013 = vpack.c.b16 %v1978, %v1977
  %v2014 = vpack.c.b16 %v1980, %v1979
  %v2015 = vpack.c.b16 %v1982, %v1981
  %v2016 = vpack.c.b16 %v1984, %v1983
  %2049 = vmatprep.subr.bf16.mxu0 0
  %2050 = vmatpush1.bf16.msra.mxu0 %v1992
  %2051 = vmatprep.subr.bf16.mxu0 0
  %2052 = vmatpush1.bf16.msra.mxu0 %v1991
  %2053 = vmatprep.subr.bf16.mxu0 0
  %2054 = vmatpush1.bf16.msra.mxu0 %v1990
  %2055 = vmatprep.subr.bf16.mxu0 0
  %2056 = vmatpush1.bf16.msra.mxu0 %v1989
  %2057 = vmatprep.subr.bf16.mxu0 0
  %2058 = vmatpush1.bf16.msra.mxu0 %v1988
  %2059 = vmatprep.subr.bf16.mxu0 0
  %2060 = vmatpush1.bf16.msra.mxu0 %v1987
  %2061 = vmatprep.subr.bf16.mxu0 0
  %2062 = vmatpush1.bf16.msra.mxu0 %v1986
  %2063 = vmatprep.subr.bf16.mxu0 0
  %2064 = vmatpush1.bf16.msra.mxu0 %v1985
  %2065 = vmatprep.subr.bf16.mxu0 0
  %2066 = vmatpush2.bf16.msra.mxu0 %v2000
  %2067 = vmatprep.subr.bf16.mxu0 0
  %2068 = vmatpush2.bf16.msra.mxu0 %v1999
  %2069 = vmatprep.subr.bf16.mxu0 0
  %2070 = vmatpush2.bf16.msra.mxu0 %v1998
  %2071 = vmatprep.subr.bf16.mxu0 0
  %2072 = vmatpush2.bf16.msra.mxu0 %v1997
  %2073 = vmatprep.subr.bf16.mxu0 0
  %2074 = vmatpush2.bf16.msra.mxu0 %v1996
  %2075 = vmatprep.subr.bf16.mxu0 0
  %2076 = vmatpush2.bf16.msra.mxu0 %v1995
  %2077 = vmatprep.subr.bf16.mxu0 0
  %2078 = vmatpush2.bf16.msra.mxu0 %v1994
  %2079 = vmatprep.subr.bf16.mxu0 0
  %2080 = vmatpush2.bf16.msra.mxu0 %v1993
  %2081 = vmatprep.mubr.bf16.mxu0 %v1818
  %2082 = vmatmul.mubr.bf16.gmra.mxu0 %v1817
  %v2083 = vpop.f32.mrf.mxu0
  %v2084 = vadd.f32 %v1761, %v2083
  %v2085 = vpop.f32.mrf.mxu0
  %v2086 = vpop.f32.mrf.mxu0
  %v2087 = vadd.f32 %v1761, %v2086
  %v2088 = vpop.f32.mrf.mxu0
  %2089 = vmatprep.mubr.bf16.mxu0 %v1822
  %2090 = vmatmul.mubr.bf16.gmra.mxu0 %v1821
  %v2091 = vpop.f32.mrf.mxu0
  %v2092 = vadd.f32 %v1761, %v2091
  %v2093 = vpop.f32.mrf.mxu0
  %v2094 = vpop.f32.mrf.mxu0
  %v2095 = vadd.f32 %v1761, %v2094
  %v2096 = vpop.f32.mrf.mxu0
  %2097 = vmatprep.mubr.bf16.mxu0 %v1826
  %2098 = vmatmul.mubr.bf16.gmra.mxu0 %v1825
  %v2099 = vpop.f32.mrf.mxu0
  %v2100 = vadd.f32 %v1761, %v2099
  %v2101 = vpop.f32.mrf.mxu0
  %v2102 = vpop.f32.mrf.mxu0
  %v2103 = vadd.f32 %v1761, %v2102
  %v2104 = vpop.f32.mrf.mxu0
  %2105 = vmatprep.mubr.bf16.mxu0 %v1830
  %2106 = vmatmul.mubr.bf16.gmra.mxu0 %v1829
  %v2107 = vpop.f32.mrf.mxu0
  %v2108 = vadd.f32 %v1761, %v2107
  %v2109 = vpop.f32.mrf.mxu0
  %v2110 = vpop.f32.mrf.mxu0
  %v2111 = vadd.f32 %v1761, %v2110
  %v2112 = vpop.f32.mrf.mxu0
  %2113 = vmatprep.mubr.bf16.mxu0 %v1834
  %2114 = vmatmul.mubr.bf16.gmra.mxu0 %v1833
  %v2115 = vpop.f32.mrf.mxu0
  %v2116 = vadd.f32 %v1761, %v2115
  %v2117 = vpop.f32.mrf.mxu0
  %v2118 = vpop.f32.mrf.mxu0
  %v2119 = vpop.f32.mrf.mxu0
  %2120 = vdwg.mxu0
  %2121 = vmatprep.subr.bf16.mxu0 0
  %2122 = vmatpush1.bf16.msra.mxu0 %v2008
  %2123 = vmatprep.subr.bf16.mxu0 0
  %2124 = vmatpush1.bf16.msra.mxu0 %v2007
  %2125 = vmatprep.subr.bf16.mxu0 0
  %2126 = vmatpush1.bf16.msra.mxu0 %v2006
  %2127 = vmatprep.subr.bf16.mxu0 0
  %2128 = vmatpush1.bf16.msra.mxu0 %v2005
  %2129 = vmatprep.subr.bf16.mxu0 0
  %2130 = vmatpush1.bf16.msra.mxu0 %v2004
  %2131 = vmatprep.subr.bf16.mxu0 0
  %2132 = vmatpush1.bf16.msra.mxu0 %v2003
  %2133 = vmatprep.subr.bf16.mxu0 0
  %2134 = vmatpush1.bf16.msra.mxu0 %v2002
  %2135 = vmatprep.subr.bf16.mxu0 0
  %2136 = vmatpush1.bf16.msra.mxu0 %v2001
  %2137 = vmatprep.subr.bf16.mxu0 0
  %2138 = vmatpush2.bf16.msra.mxu0 %v2016
  %2139 = vmatprep.subr.bf16.mxu0 0
  %2140 = vmatpush2.bf16.msra.mxu0 %v2015
  %2141 = vmatprep.subr.bf16.mxu0 0
  %2142 = vmatpush2.bf16.msra.mxu0 %v2014
  %2143 = vmatprep.subr.bf16.mxu0 0
  %2144 = vmatpush2.bf16.msra.mxu0 %v2013
  %2145 = vmatprep.subr.bf16.mxu0 0
  %2146 = vmatpush2.bf16.msra.mxu0 %v2012
  %2147 = vmatprep.subr.bf16.mxu0 0
  %2148 = vmatpush2.bf16.msra.mxu0 %v2011
  %2149 = vmatprep.subr.bf16.mxu0 0
  %2150 = vmatpush2.bf16.msra.mxu0 %v2010
  %2151 = vmatprep.subr.bf16.mxu0 0
  %2152 = vmatpush2.bf16.msra.mxu0 %v2009
  %2153 = vmatprep.mubr.bf16.mxu0 %v1820
  %2154 = vmatmul.mubr.bf16.gmra.mxu0 %v1819
  %v2155 = vpop.f32.mrf.mxu0
  %v2156 = vadd.f32 %v2084, %v2155
  %v2157 = vpop.f32.mrf.mxu0
  %v2158 = vpop.f32.mrf.mxu0
  %v2159 = vadd.f32 %v2087, %v2158
  %v2160 = vpop.f32.mrf.mxu0
  %2161 = vmatprep.mubr.bf16.mxu0 %v1824
  %2162 = vmatmul.mubr.bf16.gmra.mxu0 %v1823
  %v2163 = vpop.f32.mrf.mxu0
  %v2164 = vadd.f32 %v2092, %v2163
  %v2165 = vpop.f32.mrf.mxu0
  %v2166 = vpop.f32.mrf.mxu0
  %v2167 = vadd.f32 %v2095, %v2166
  %v2168 = vpop.f32.mrf.mxu0
  %2169 = vmatprep.mubr.bf16.mxu0 %v1828
  %2170 = vmatmul.mubr.bf16.gmra.mxu0 %v1827
  %v2171 = vpop.f32.mrf.mxu0
  %v2172 = vadd.f32 %v2100, %v2171
  %v2173 = vpop.f32.mrf.mxu0
  %v2174 = vpop.f32.mrf.mxu0
  %v2175 = vadd.f32 %v2103, %v2174
  %v2176 = vpop.f32.mrf.mxu0
  %2177 = vmatprep.mubr.bf16.mxu0 %v1832
  %2178 = vmatmul.mubr.bf16.gmra.mxu0 %v1831
  %v2179 = vpop.f32.mrf.mxu0
  %v2180 = vadd.f32 %v2108, %v2179
  %v2181 = vpop.f32.mrf.mxu0
  %v2182 = vpop.f32.mrf.mxu0
  %v2183 = vadd.f32 %v2111, %v2182
  %v2184 = vpop.f32.mrf.mxu0
  %2185 = vmatprep.mubr.bf16.mxu0 %v1836
  %2186 = vmatmul.mubr.bf16.gmra.mxu0 %v1835
  %v2187 = vpop.f32.mrf.mxu0
  %v2188 = vadd.f32 %v2116, %v2187
  %v2189 = vpop.f32.mrf.mxu0
  %v2190 = vpop.f32.mrf.mxu0
  %v2191 = vpop.f32.mrf.mxu0
  %2192 = vdwg.mxu0
  %v2193 = vmax.f32 %v2156, 0.0
  %v2194 = vmax.f32 %v2159, 0.0
  %v2195 = vmax.f32 %v2164, 0.0
  %v2196 = vmax.f32 %v2167, 0.0
  %v2197 = vmax.f32 %v2172, 0.0
  %v2198 = vmax.f32 %v2175, 0.0
  %v2199 = vmax.f32 %v2180, 0.0
  %v2200 = vmax.f32 %v2183, 0.0
  %v2201 = vmax.f32 %v2188, 0.0
  %v2202 = vpack.c.bf16 %v2194, %v2193
  %v2203 = vpack.c.bf16 %v2196, %v2195
  %v2204 = vpack.c.bf16 %v2198, %v2197
  %v2205 = vpack.c.bf16 %v2200, %v2199
  %v2206 = vpack.c.bf16 %v2201, %v2201
  %v2212 = vunpack.c.l.b16 %v2202
  %v2213 = vunpack.c.h.b16 %v2202
  %v2214 = vunpack.c.l.b16 %v2203
  %v2215 = vunpack.c.h.b16 %v2203
  %v2216 = vunpack.c.l.b16 %v2204
  %v2217 = vunpack.c.h.b16 %v2204
  %v2218 = vunpack.c.l.b16 %v2205
  %v2219 = vunpack.c.h.b16 %v2205
  %v2220 = vunpack.c.l.b16 %v2206
  %v2221 = vpack.c.b16 %v2212, %v2212
  %v2222 = vpack.c.b16 %v2213, %v2213
  %v2223 = vpack.c.b16 %v2214, %v2214
  %v2224 = vpack.c.b16 %v2215, %v2215
  %v2225 = vpack.c.b16 %v2216, %v2216
  %v2226 = vpack.c.b16 %v2217, %v2217
  %v2227 = vpack.c.b16 %v2218, %v2218
  %v2228 = vpack.c.b16 %v2219, %v2219
  %v2229 = vpack.c.b16 %v2220, %v2220
  %2239 = vst [vmem:[#allocation5] sm:$0xf] %v2221
  %2240 = vst [vmem:[#allocation5 + $0x4] sm:$0xf] %v2222
  %2241 = vst [vmem:[#allocation5 + $0x8] sm:$0xf] %v2223
  %2242 = vst [vmem:[#allocation5 + $0xc] sm:$0xf] %v2224
  %2243 = vst [vmem:[#allocation5 + $0x10] sm:$0xf] %v2225
  %2244 = vst [vmem:[#allocation5 + $0x14] sm:$0xf] %v2226
  %2245 = vst [vmem:[#allocation5 + $0x18] sm:$0xf] %v2227
  %2246 = vst [vmem:[#allocation5 + $0x1c] sm:$0xf] %v2228
  %2247 = vst [vmem:[#allocation5 + $0x20] sm:$0xf] %v2229
  %v2248 = vld [vmem:[#allocation5] sm:$0xf]
  %2249 = vst [vmem:[#allocation6] sm:$0xf] %v2248
  %v2250 = vld [vmem:[#allocation5 + $0x4] sm:$0xf]
  %2251 = vst [vmem:[#allocation6 + $0x4] sm:$0xf] %v2250
  %v2252 = vld [vmem:[#allocation5 + $0x8] sm:$0xf]
  %2253 = vst [vmem:[#allocation6 + $0x8] sm:$0xf] %v2252
  %v2254 = vld [vmem:[#allocation5 + $0xc] sm:$0xf]
  %2255 = vst [vmem:[#allocation6 + $0xc] sm:$0xf] %v2254
  %v2256 = vld [vmem:[#allocation5 + $0x10] sm:$0xf]
  %2257 = vst [vmem:[#allocation6 + $0x10] sm:$0xf] %v2256
  %v2258 = vld [vmem:[#allocation5 + $0x14] sm:$0xf]
  %2259 = vst [vmem:[#allocation6 + $0x14] sm:$0xf] %v2258
  %v2260 = vld [vmem:[#allocation5 + $0x18] sm:$0xf]
  %2261 = vst [vmem:[#allocation6 + $0x18] sm:$0xf] %v2260
  %v2262 = vld [vmem:[#allocation5 + $0x1c] sm:$0xf]
  %2263 = vst [vmem:[#allocation6 + $0x1c] sm:$0xf] %v2262
  %v2264 = vld [vmem:[#allocation5 + $0x20] sm:$0xf]
  %2265 = vst [vmem:[#allocation6 + $0x20] sm:$0xf] %v2264
  %v2266 = vld [vmem:[#allocation6] sm:$0xff]
  %v2267 = vld [vmem:[#allocation6 + $0x8] sm:$0xff]
  %v2268 = vld [vmem:[#allocation6 + $0x10] sm:$0xff]
  %v2269 = vld [vmem:[#allocation6 + $0x18] sm:$0xff]
  %v2270 = vld [vmem:[#allocation6 + $0x20] sm:$0xf]
  %v2271 = vld [vmem:[%s5] sm:$0xf]
  %v2272 = vld [vmem:[%s5 + $0x4] sm:$0xf]
  %v2273 = vld [vmem:[%s5 + $0x8] sm:$0xf]
  %v2274 = vld [vmem:[%s5 + $0xc] sm:$0xf]
  %v2275 = vld [vmem:[%s5 + $0x10] sm:$0xf]
  %v2276 = vld [vmem:[%s5 + $0x14] sm:$0xf]
  %v2277 = vld [vmem:[%s5 + $0x18] sm:$0xf]
  %v2278 = vld [vmem:[%s5 + $0x1c] sm:$0xf]
  %v2279 = vld [vmem:[%s5 + $0x20] sm:$0xf]
  %v2280 = vld [vmem:[%s5 + $0x24] sm:$0xf]
  %v2281 = vld [vmem:[%s5 + $0x28] sm:$0xf]
  %v2282 = vld [vmem:[%s5 + $0x2c] sm:$0xf]
  %v2283 = vld [vmem:[%s5 + $0x30] sm:$0xf]
  %v2284 = vld [vmem:[%s5 + $0x34] sm:$0xf]
  %v2285 = vld [vmem:[%s5 + $0x38] sm:$0xf]
  %v2286 = vld [vmem:[%s5 + $0x3c] sm:$0xf]
  %v2287 = vld [vmem:[%s5 + $0x40] sm:$0xf]
  %v2288 = vld [vmem:[%s5 + $0x44] sm:$0xf]
  %v2289 = vld [vmem:[%s5 + $0x48] sm:$0xf]
  %v2290 = vld [vmem:[%s5 + $0x4c] sm:$0xf]
  %v2291 = vld [vmem:[%s5 + $0x50] sm:$0xf]
  %v2292 = vld [vmem:[%s5 + $0x54] sm:$0xf]
  %v2293 = vld [vmem:[%s5 + $0x58] sm:$0xf]
  %v2294 = vld [vmem:[%s5 + $0x5c] sm:$0xf]
  %v2295 = vld [vmem:[%s5 + $0x60] sm:$0xf]
  %v2296 = vld [vmem:[%s5 + $0x64] sm:$0xf]
  %v2297 = vld [vmem:[%s5 + $0x68] sm:$0xf]
  %v2298 = vld [vmem:[%s5 + $0x6c] sm:$0xf]
  %v2299 = vld [vmem:[%s5 + $0x70] sm:$0xf]
  %v2300 = vld [vmem:[%s5 + $0x74] sm:$0xf]
  %v2301 = vld [vmem:[%s5 + $0x78] sm:$0xf]
  %v2302 = vld [vmem:[%s5 + $0x7c] sm:$0xf]
  %v2303 = vld [vmem:[%s5 + $0x80] sm:$0xf]
  %v2304 = vld [vmem:[%s5 + $0x84] sm:$0xf]
  %v2305 = vld [vmem:[%s5 + $0x88] sm:$0xf]
  %v2306 = vld [vmem:[%s5 + $0x8c] sm:$0xf]
  %v2307 = vld [vmem:[%s5 + $0x90] sm:$0xf]
  %v2308 = vld [vmem:[%s5 + $0x94] sm:$0xf]
  %v2309 = vld [vmem:[%s5 + $0x98] sm:$0xf]
  %v2310 = vld [vmem:[%s5 + $0x9c] sm:$0xf]
  %v2311 = vld [vmem:[%s5 + $0xa0] sm:$0xf]
  %v2312 = vld [vmem:[%s5 + $0xa4] sm:$0xf]
  %v2313 = vld [vmem:[%s5 + $0xa8] sm:$0xf]
  %v2314 = vld [vmem:[%s5 + $0xac] sm:$0xf]
  %v2315 = vld [vmem:[%s5 + $0xb0] sm:$0xf]
  %v2316 = vld [vmem:[%s5 + $0xb4] sm:$0xf]
  %v2317 = vld [vmem:[%s5 + $0xb8] sm:$0xf]
  %v2318 = vld [vmem:[%s5 + $0xbc] sm:$0xf]
  %v2319 = vld [vmem:[%s5 + $0xc0] sm:$0xf]
  %v2320 = vld [vmem:[%s5 + $0xc4] sm:$0xf]
  %v2321 = vld [vmem:[%s5 + $0xc8] sm:$0xf]
  %v2322 = vld [vmem:[%s5 + $0xcc] sm:$0xf]
  %v2323 = vld [vmem:[%s5 + $0xd0] sm:$0xf]
  %v2324 = vld [vmem:[%s5 + $0xd4] sm:$0xf]
  %v2325 = vld [vmem:[%s5 + $0xd8] sm:$0xf]
  %v2326 = vld [vmem:[%s5 + $0xdc] sm:$0xf]
  %v2327 = vld [vmem:[%s5 + $0xe0] sm:$0xf]
  %v2328 = vld [vmem:[%s5 + $0xe4] sm:$0xf]
  %v2329 = vld [vmem:[%s5 + $0xe8] sm:$0xf]
  %v2330 = vld [vmem:[%s5 + $0xec] sm:$0xf]
  %v2331 = vld [vmem:[%s5 + $0xf0] sm:$0xf]
  %v2332 = vld [vmem:[%s5 + $0xf4] sm:$0xf]
  %v2333 = vld [vmem:[%s5 + $0xf8] sm:$0xf]
  %v2334 = vld [vmem:[%s5 + $0xfc] sm:$0xf]
  %v2335 = vld [vmem:[%s5 + $0x100] sm:$0xf]
  %v2336 = vld [vmem:[%s5 + $0x104] sm:$0xf]
  %v2337 = vld [vmem:[%s5 + $0x108] sm:$0xf]
  %v2338 = vld [vmem:[%s5 + $0x10c] sm:$0xf]
  %v2339 = vld [vmem:[%s5 + $0x110] sm:$0xf]
  %v2340 = vld [vmem:[%s5 + $0x114] sm:$0xf]
  %v2341 = vld [vmem:[%s5 + $0x118] sm:$0xf]
  %v2342 = vld [vmem:[%s5 + $0x11c] sm:$0xf]
  %v2343 = vld [vmem:[%s5 + $0x120] sm:$0xf]
  %v2344 = vld [vmem:[%s5 + $0x124] sm:$0xf]
  %v2345 = vld [vmem:[%s5 + $0x128] sm:$0xf]
  %v2346 = vld [vmem:[%s5 + $0x12c] sm:$0xf]
  %v2347 = vld [vmem:[%s5 + $0x130] sm:$0xf]
  %v2348 = vld [vmem:[%s5 + $0x134] sm:$0xf]
  %v2349 = vld [vmem:[%s5 + $0x138] sm:$0xf]
  %v2350 = vld [vmem:[%s5 + $0x13c] sm:$0xf]
  %v2351 = vld [vmem:[%s5 + $0x140] sm:$0xf]
  %v2352 = vld [vmem:[%s5 + $0x144] sm:$0xf]
  %v2353 = vld [vmem:[%s5 + $0x148] sm:$0xf]
  %v2354 = vld [vmem:[%s5 + $0x14c] sm:$0xf]
  %v2355 = vld [vmem:[%s5 + $0x150] sm:$0xf]
  %v2356 = vld [vmem:[%s5 + $0x154] sm:$0xf]
  %v2357 = vld [vmem:[%s5 + $0x158] sm:$0xf]
  %v2358 = vld [vmem:[%s5 + $0x15c] sm:$0xf]
  %v2359 = vld [vmem:[%s5 + $0x160] sm:$0xf]
  %v2360 = vld [vmem:[%s5 + $0x164] sm:$0xf]
  %v2361 = vld [vmem:[%s5 + $0x168] sm:$0xf]
  %v2362 = vld [vmem:[%s5 + $0x16c] sm:$0xf]
  %v2363 = vld [vmem:[%s5 + $0x170] sm:$0xf]
  %v2364 = vld [vmem:[%s5 + $0x174] sm:$0xf]
  %v2365 = vld [vmem:[%s5 + $0x178] sm:$0xf]
  %v2366 = vld [vmem:[%s5 + $0x17c] sm:$0xf]
  %v2367 = vld [vmem:[%s5 + $0x180] sm:$0xf]
  %v2368 = vld [vmem:[%s5 + $0x184] sm:$0xf]
  %v2369 = vld [vmem:[%s5 + $0x188] sm:$0xf]
  %v2370 = vld [vmem:[%s5 + $0x18c] sm:$0xf]
  %v2371 = vld [vmem:[%s5 + $0x190] sm:$0xf]
  %v2372 = vld [vmem:[%s5 + $0x194] sm:$0xf]
  %v2373 = vld [vmem:[%s5 + $0x198] sm:$0xf]
  %v2374 = vld [vmem:[%s5 + $0x19c] sm:$0xf]
  %v2375 = vld [vmem:[%s5 + $0x1a0] sm:$0xf]
  %v2376 = vld [vmem:[%s5 + $0x1a4] sm:$0xf]
  %v2377 = vld [vmem:[%s5 + $0x1a8] sm:$0xf]
  %v2378 = vld [vmem:[%s5 + $0x1ac] sm:$0xf]
  %v2379 = vld [vmem:[%s5 + $0x1b0] sm:$0xf]
  %v2380 = vld [vmem:[%s5 + $0x1b4] sm:$0xf]
  %v2381 = vld [vmem:[%s5 + $0x1b8] sm:$0xf]
  %v2382 = vld [vmem:[%s5 + $0x1bc] sm:$0xf]
  %v2383 = vld [vmem:[%s5 + $0x1c0] sm:$0xf]
  %v2384 = vld [vmem:[%s5 + $0x1c4] sm:$0xf]
  %v2385 = vld [vmem:[%s5 + $0x1c8] sm:$0xf]
  %v2386 = vld [vmem:[%s5 + $0x1cc] sm:$0xf]
  %v2387 = vld [vmem:[%s5 + $0x1d0] sm:$0xf]
  %v2388 = vld [vmem:[%s5 + $0x1d4] sm:$0xf]
  %v2389 = vld [vmem:[%s5 + $0x1d8] sm:$0xf]
  %v2390 = vld [vmem:[%s5 + $0x1dc] sm:$0xf]
  %v2391 = vld [vmem:[%s5 + $0x1e0] sm:$0xf]
  %v2392 = vld [vmem:[%s5 + $0x1e4] sm:$0xf]
  %v2393 = vld [vmem:[%s5 + $0x1e8] sm:$0xf]
  %v2394 = vld [vmem:[%s5 + $0x1ec] sm:$0xf]
  %v2395 = vld [vmem:[%s5 + $0x1f0] sm:$0xf]
  %v2396 = vld [vmem:[%s5 + $0x1f4] sm:$0xf]
  %v2397 = vld [vmem:[%s5 + $0x1f8] sm:$0xf]
  %v2398 = vld [vmem:[%s5 + $0x1fc] sm:$0xf]
  %v2399 = vld [vmem:[%s5 + $0x200] sm:$0xf]
  %v2400 = vld [vmem:[%s5 + $0x204] sm:$0xf]
  %v2401 = vld [vmem:[%s5 + $0x208] sm:$0xf]
  %v2402 = vld [vmem:[%s5 + $0x20c] sm:$0xf]
  %v2403 = vld [vmem:[%s5 + $0x210] sm:$0xf]
  %v2404 = vld [vmem:[%s5 + $0x214] sm:$0xf]
  %v2405 = vld [vmem:[%s5 + $0x218] sm:$0xf]
  %v2406 = vld [vmem:[%s5 + $0x21c] sm:$0xf]
  %v2407 = vld [vmem:[%s5 + $0x220] sm:$0xf]
  %v2408 = vld [vmem:[%s5 + $0x224] sm:$0xf]
  %v2409 = vld [vmem:[%s5 + $0x228] sm:$0xf]
  %v2410 = vld [vmem:[%s5 + $0x22c] sm:$0xf]
  %v2411 = vld [vmem:[%s5 + $0x230] sm:$0xf]
  %v2412 = vld [vmem:[%s5 + $0x234] sm:$0xf]
  %v2413 = vld [vmem:[%s5 + $0x238] sm:$0xf]
  %v2414 = vld [vmem:[%s5 + $0x23c] sm:$0xf]
  %v2415 = vld [vmem:[%s6] sm:$0x1]
  %v2417 = vlaneseq
  %v2418 = vshrl.u32 %v2417, 7
  %v2419 = vsub.s32 0, %v2418
  %v2420 = vrot.slane %v2415, %v2419
  %v2427 = vunpack.c.l.b16 %v2266
  %v2428 = vunpack.c.h.b16 %v2266
  %v2429 = vunpack.c.l.b16 %v2267
  %v2430 = vunpack.c.h.b16 %v2267
  %v2431 = vunpack.c.l.b16 %v2268
  %v2432 = vunpack.c.h.b16 %v2268
  %v2433 = vunpack.c.l.b16 %v2269
  %v2434 = vunpack.c.h.b16 %v2269
  %v2435 = vunpack.c.l.b16 %v2270
  %v2436 = vpack.c.b16 %v2427, %v2427
  %v2437 = vpack.c.b16 %v2428, %v2428
  %v2438 = vpack.c.b16 %v2429, %v2429
  %v2439 = vpack.c.b16 %v2430, %v2430
  %v2440 = vpack.c.b16 %v2431, %v2431
  %v2441 = vpack.c.b16 %v2432, %v2432
  %v2442 = vpack.c.b16 %v2433, %v2433
  %v2443 = vpack.c.b16 %v2434, %v2434
  %v2444 = vpack.c.b16 %v2435, %v2435
  %v2598 = vunpack.c.l.b16 %v2271
  %v2599 = vunpack.c.l.b16 %v2272
  %v2600 = vunpack.c.l.b16 %v2273
  %v2601 = vunpack.c.l.b16 %v2274
  %v2602 = vunpack.c.l.b16 %v2275
  %v2603 = vunpack.c.l.b16 %v2276
  %v2604 = vunpack.c.l.b16 %v2277
  %v2605 = vunpack.c.l.b16 %v2278
  %v2606 = vunpack.c.l.b16 %v2279
  %v2607 = vunpack.c.l.b16 %v2280
  %v2608 = vunpack.c.l.b16 %v2281
  %v2609 = vunpack.c.l.b16 %v2282
  %v2610 = vunpack.c.l.b16 %v2283
  %v2611 = vunpack.c.l.b16 %v2284
  %v2612 = vunpack.c.l.b16 %v2285
  %v2613 = vunpack.c.l.b16 %v2286
  %v2614 = vunpack.c.l.b16 %v2287
  %v2615 = vunpack.c.l.b16 %v2288
  %v2616 = vunpack.c.l.b16 %v2289
  %v2617 = vunpack.c.l.b16 %v2290
  %v2618 = vunpack.c.l.b16 %v2291
  %v2619 = vunpack.c.l.b16 %v2292
  %v2620 = vunpack.c.l.b16 %v2293
  %v2621 = vunpack.c.l.b16 %v2294
  %v2622 = vunpack.c.l.b16 %v2295
  %v2623 = vunpack.c.l.b16 %v2296
  %v2624 = vunpack.c.l.b16 %v2297
  %v2625 = vunpack.c.l.b16 %v2298
  %v2626 = vunpack.c.l.b16 %v2299
  %v2627 = vunpack.c.l.b16 %v2300
  %v2628 = vunpack.c.l.b16 %v2301
  %v2629 = vunpack.c.l.b16 %v2302
  %v2630 = vunpack.c.l.b16 %v2303
  %v2631 = vunpack.c.l.b16 %v2304
  %v2632 = vunpack.c.l.b16 %v2305
  %v2633 = vunpack.c.l.b16 %v2306
  %v2634 = vunpack.c.l.b16 %v2307
  %v2635 = vunpack.c.l.b16 %v2308
  %v2636 = vunpack.c.l.b16 %v2309
  %v2637 = vunpack.c.l.b16 %v2310
  %v2638 = vunpack.c.l.b16 %v2311
  %v2639 = vunpack.c.l.b16 %v2312
  %v2640 = vunpack.c.l.b16 %v2313
  %v2641 = vunpack.c.l.b16 %v2314
  %v2642 = vunpack.c.l.b16 %v2315
  %v2643 = vunpack.c.l.b16 %v2316
  %v2644 = vunpack.c.l.b16 %v2317
  %v2645 = vunpack.c.l.b16 %v2318
  %v2646 = vunpack.c.l.b16 %v2319
  %v2647 = vunpack.c.l.b16 %v2320
  %v2648 = vunpack.c.l.b16 %v2321
  %v2649 = vunpack.c.l.b16 %v2322
  %v2650 = vunpack.c.l.b16 %v2323
  %v2651 = vunpack.c.l.b16 %v2324
  %v2652 = vunpack.c.l.b16 %v2325
  %v2653 = vunpack.c.l.b16 %v2326
  %v2654 = vunpack.c.l.b16 %v2327
  %v2655 = vunpack.c.l.b16 %v2328
  %v2656 = vunpack.c.l.b16 %v2329
  %v2657 = vunpack.c.l.b16 %v2330
  %v2658 = vunpack.c.l.b16 %v2331
  %v2659 = vunpack.c.l.b16 %v2332
  %v2660 = vunpack.c.l.b16 %v2333
  %v2661 = vunpack.c.l.b16 %v2334
  %v2662 = vunpack.c.l.b16 %v2335
  %v2663 = vunpack.c.l.b16 %v2336
  %v2664 = vunpack.c.l.b16 %v2337
  %v2665 = vunpack.c.l.b16 %v2338
  %v2666 = vunpack.c.l.b16 %v2339
  %v2667 = vunpack.c.l.b16 %v2340
  %v2668 = vunpack.c.l.b16 %v2341
  %v2669 = vunpack.c.l.b16 %v2342
  %v2670 = vunpack.c.l.b16 %v2343
  %v2671 = vunpack.c.l.b16 %v2344
  %v2672 = vunpack.c.l.b16 %v2345
  %v2673 = vunpack.c.l.b16 %v2346
  %v2674 = vunpack.c.l.b16 %v2347
  %v2675 = vunpack.c.l.b16 %v2348
  %v2676 = vunpack.c.l.b16 %v2349
  %v2677 = vunpack.c.l.b16 %v2350
  %v2678 = vunpack.c.l.b16 %v2351
  %v2679 = vunpack.c.l.b16 %v2352
  %v2680 = vunpack.c.l.b16 %v2353
  %v2681 = vunpack.c.l.b16 %v2354
  %v2682 = vunpack.c.l.b16 %v2355
  %v2683 = vunpack.c.l.b16 %v2356
  %v2684 = vunpack.c.l.b16 %v2357
  %v2685 = vunpack.c.l.b16 %v2358
  %v2686 = vunpack.c.l.b16 %v2359
  %v2687 = vunpack.c.l.b16 %v2360
  %v2688 = vunpack.c.l.b16 %v2361
  %v2689 = vunpack.c.l.b16 %v2362
  %v2690 = vunpack.c.l.b16 %v2363
  %v2691 = vunpack.c.l.b16 %v2364
  %v2692 = vunpack.c.l.b16 %v2365
  %v2693 = vunpack.c.l.b16 %v2366
  %v2694 = vunpack.c.l.b16 %v2367
  %v2695 = vunpack.c.l.b16 %v2368
  %v2696 = vunpack.c.l.b16 %v2369
  %v2697 = vunpack.c.l.b16 %v2370
  %v2698 = vunpack.c.l.b16 %v2371
  %v2699 = vunpack.c.l.b16 %v2372
  %v2700 = vunpack.c.l.b16 %v2373
  %v2701 = vunpack.c.l.b16 %v2374
  %v2702 = vunpack.c.l.b16 %v2375
  %v2703 = vunpack.c.l.b16 %v2376
  %v2704 = vunpack.c.l.b16 %v2377
  %v2705 = vunpack.c.l.b16 %v2378
  %v2706 = vunpack.c.l.b16 %v2379
  %v2707 = vunpack.c.l.b16 %v2380
  %v2708 = vunpack.c.l.b16 %v2381
  %v2709 = vunpack.c.l.b16 %v2382
  %v2710 = vunpack.c.l.b16 %v2383
  %v2711 = vunpack.c.l.b16 %v2384
  %v2712 = vunpack.c.l.b16 %v2385
  %v2713 = vunpack.c.l.b16 %v2386
  %v2714 = vunpack.c.l.b16 %v2387
  %v2715 = vunpack.c.l.b16 %v2388
  %v2716 = vunpack.c.l.b16 %v2389
  %v2717 = vunpack.c.l.b16 %v2390
  %v2718 = vunpack.c.l.b16 %v2391
  %v2719 = vunpack.c.l.b16 %v2392
  %v2720 = vunpack.c.l.b16 %v2393
  %v2721 = vunpack.c.l.b16 %v2394
  %v2722 = vunpack.c.l.b16 %v2395
  %v2723 = vunpack.c.l.b16 %v2396
  %v2724 = vunpack.c.l.b16 %v2397
  %v2725 = vunpack.c.l.b16 %v2398
  %v2726 = vunpack.c.l.b16 %v2399
  %v2727 = vunpack.c.l.b16 %v2400
  %v2728 = vunpack.c.l.b16 %v2401
  %v2729 = vunpack.c.l.b16 %v2402
  %v2730 = vunpack.c.l.b16 %v2403
  %v2731 = vunpack.c.l.b16 %v2404
  %v2732 = vunpack.c.l.b16 %v2405
  %v2733 = vunpack.c.l.b16 %v2406
  %v2734 = vunpack.c.l.b16 %v2407
  %v2735 = vunpack.c.l.b16 %v2408
  %v2736 = vunpack.c.l.b16 %v2409
  %v2737 = vunpack.c.l.b16 %v2410
  %v2738 = vunpack.c.l.b16 %v2411
  %v2739 = vunpack.c.l.b16 %v2412
  %v2740 = vunpack.c.l.b16 %v2413
  %v2741 = vunpack.c.l.b16 %v2414
  %v2742 = vpack.c.b16 %v2599, %v2598
  %v2743 = vpack.c.b16 %v2601, %v2600
  %v2744 = vpack.c.b16 %v2603, %v2602
  %v2745 = vpack.c.b16 %v2605, %v2604
  %v2746 = vpack.c.b16 %v2607, %v2606
  %v2747 = vpack.c.b16 %v2609, %v2608
  %v2748 = vpack.c.b16 %v2611, %v2610
  %v2749 = vpack.c.b16 %v2613, %v2612
  %v2750 = vpack.c.b16 %v2615, %v2614
  %v2751 = vpack.c.b16 %v2617, %v2616
  %v2752 = vpack.c.b16 %v2619, %v2618
  %v2753 = vpack.c.b16 %v2621, %v2620
  %v2754 = vpack.c.b16 %v2623, %v2622
  %v2755 = vpack.c.b16 %v2625, %v2624
  %v2756 = vpack.c.b16 %v2627, %v2626
  %v2757 = vpack.c.b16 %v2629, %v2628
  %v2758 = vpack.c.b16 %v2631, %v2630
  %v2759 = vpack.c.b16 %v2633, %v2632
  %v2760 = vpack.c.b16 %v2635, %v2634
  %v2761 = vpack.c.b16 %v2637, %v2636
  %v2762 = vpack.c.b16 %v2639, %v2638
  %v2763 = vpack.c.b16 %v2641, %v2640
  %v2764 = vpack.c.b16 %v2643, %v2642
  %v2765 = vpack.c.b16 %v2645, %v2644
  %v2766 = vpack.c.b16 %v2647, %v2646
  %v2767 = vpack.c.b16 %v2649, %v2648
  %v2768 = vpack.c.b16 %v2651, %v2650
  %v2769 = vpack.c.b16 %v2653, %v2652
  %v2770 = vpack.c.b16 %v2655, %v2654
  %v2771 = vpack.c.b16 %v2657, %v2656
  %v2772 = vpack.c.b16 %v2659, %v2658
  %v2773 = vpack.c.b16 %v2661, %v2660
  %v2774 = vpack.c.b16 %v2663, %v2662
  %v2775 = vpack.c.b16 %v2665, %v2664
  %v2776 = vpack.c.b16 %v2667, %v2666
  %v2777 = vpack.c.b16 %v2669, %v2668
  %v2778 = vpack.c.b16 %v2671, %v2670
  %v2779 = vpack.c.b16 %v2673, %v2672
  %v2780 = vpack.c.b16 %v2675, %v2674
  %v2781 = vpack.c.b16 %v2677, %v2676
  %v2782 = vpack.c.b16 %v2679, %v2678
  %v2783 = vpack.c.b16 %v2681, %v2680
  %v2784 = vpack.c.b16 %v2683, %v2682
  %v2785 = vpack.c.b16 %v2685, %v2684
  %v2786 = vpack.c.b16 %v2687, %v2686
  %v2787 = vpack.c.b16 %v2689, %v2688
  %v2788 = vpack.c.b16 %v2691, %v2690
  %v2789 = vpack.c.b16 %v2693, %v2692
  %v2790 = vpack.c.b16 %v2695, %v2694
  %v2791 = vpack.c.b16 %v2697, %v2696
  %v2792 = vpack.c.b16 %v2699, %v2698
  %v2793 = vpack.c.b16 %v2701, %v2700
  %v2794 = vpack.c.b16 %v2703, %v2702
  %v2795 = vpack.c.b16 %v2705, %v2704
  %v2796 = vpack.c.b16 %v2707, %v2706
  %v2797 = vpack.c.b16 %v2709, %v2708
  %v2798 = vpack.c.b16 %v2711, %v2710
  %v2799 = vpack.c.b16 %v2713, %v2712
  %v2800 = vpack.c.b16 %v2715, %v2714
  %v2801 = vpack.c.b16 %v2717, %v2716
  %v2802 = vpack.c.b16 %v2719, %v2718
  %v2803 = vpack.c.b16 %v2721, %v2720
  %v2804 = vpack.c.b16 %v2723, %v2722
  %v2805 = vpack.c.b16 %v2725, %v2724
  %v2806 = vpack.c.b16 %v2727, %v2726
  %v2807 = vpack.c.b16 %v2729, %v2728
  %v2808 = vpack.c.b16 %v2731, %v2730
  %v2809 = vpack.c.b16 %v2733, %v2732
  %v2810 = vpack.c.b16 %v2735, %v2734
  %v2811 = vpack.c.b16 %v2737, %v2736
  %v2812 = vpack.c.b16 %v2739, %v2738
  %v2813 = vpack.c.b16 %v2741, %v2740
  %2886 = vmatprep.subr.bf16.mxu0 0
  %2887 = vmatpush1.bf16.msra.mxu0 %v2749
  %2888 = vmatprep.subr.bf16.mxu0 0
  %2889 = vmatpush1.bf16.msra.mxu0 %v2748
  %2890 = vmatprep.subr.bf16.mxu0 0
  %2891 = vmatpush1.bf16.msra.mxu0 %v2747
  %2892 = vmatprep.subr.bf16.mxu0 0
  %2893 = vmatpush1.bf16.msra.mxu0 %v2746
  %2894 = vmatprep.subr.bf16.mxu0 0
  %2895 = vmatpush1.bf16.msra.mxu0 %v2745
  %2896 = vmatprep.subr.bf16.mxu0 0
  %2897 = vmatpush1.bf16.msra.mxu0 %v2744
  %2898 = vmatprep.subr.bf16.mxu0 0
  %2899 = vmatpush1.bf16.msra.mxu0 %v2743
  %2900 = vmatprep.subr.bf16.mxu0 0
  %2901 = vmatpush1.bf16.msra.mxu0 %v2742
  %2902 = vmatprep.subr.bf16.mxu0 0
  %2903 = vmatpush2.bf16.msra.mxu0 %v2757
  %2904 = vmatprep.subr.bf16.mxu0 0
  %2905 = vmatpush2.bf16.msra.mxu0 %v2756
  %2906 = vmatprep.subr.bf16.mxu0 0
  %2907 = vmatpush2.bf16.msra.mxu0 %v2755
  %2908 = vmatprep.subr.bf16.mxu0 0
  %2909 = vmatpush2.bf16.msra.mxu0 %v2754
  %2910 = vmatprep.subr.bf16.mxu0 0
  %2911 = vmatpush2.bf16.msra.mxu0 %v2753
  %2912 = vmatprep.subr.bf16.mxu0 0
  %2913 = vmatpush2.bf16.msra.mxu0 %v2752
  %2914 = vmatprep.subr.bf16.mxu0 0
  %2915 = vmatpush2.bf16.msra.mxu0 %v2751
  %2916 = vmatprep.subr.bf16.mxu0 0
  %2917 = vmatpush2.bf16.msra.mxu0 %v2750
  %2918 = vmatprep.mubr.bf16.mxu0 %v2437
  %2919 = vmatmul.mubr.bf16.gmra.mxu0 %v2436
  %v2920 = vpop.f32.mrf.mxu0
  %v2921 = vadd.f32 %v2420, %v2920
  %v2922 = vpop.f32.mrf.mxu0
  %v2923 = vpop.f32.mrf.mxu0
  %v2924 = vpop.f32.mrf.mxu0
  %2925 = vdwg.mxu0
  %2926 = vmatprep.subr.bf16.mxu0 0
  %2927 = vmatpush1.bf16.msra.mxu0 %v2765
  %2928 = vmatprep.subr.bf16.mxu0 0
  %2929 = vmatpush1.bf16.msra.mxu0 %v2764
  %2930 = vmatprep.subr.bf16.mxu0 0
  %2931 = vmatpush1.bf16.msra.mxu0 %v2763
  %2932 = vmatprep.subr.bf16.mxu0 0
  %2933 = vmatpush1.bf16.msra.mxu0 %v2762
  %2934 = vmatprep.subr.bf16.mxu0 0
  %2935 = vmatpush1.bf16.msra.mxu0 %v2761
  %2936 = vmatprep.subr.bf16.mxu0 0
  %2937 = vmatpush1.bf16.msra.mxu0 %v2760
  %2938 = vmatprep.subr.bf16.mxu0 0
  %2939 = vmatpush1.bf16.msra.mxu0 %v2759
  %2940 = vmatprep.subr.bf16.mxu0 0
  %2941 = vmatpush1.bf16.msra.mxu0 %v2758
  %2942 = vmatprep.subr.bf16.mxu0 0
  %2943 = vmatpush2.bf16.msra.mxu0 %v2773
  %2944 = vmatprep.subr.bf16.mxu0 0
  %2945 = vmatpush2.bf16.msra.mxu0 %v2772
  %2946 = vmatprep.subr.bf16.mxu0 0
  %2947 = vmatpush2.bf16.msra.mxu0 %v2771
  %2948 = vmatprep.subr.bf16.mxu0 0
  %2949 = vmatpush2.bf16.msra.mxu0 %v2770
  %2950 = vmatprep.subr.bf16.mxu0 0
  %2951 = vmatpush2.bf16.msra.mxu0 %v2769
  %2952 = vmatprep.subr.bf16.mxu0 0
  %2953 = vmatpush2.bf16.msra.mxu0 %v2768
  %2954 = vmatprep.subr.bf16.mxu0 0
  %2955 = vmatpush2.bf16.msra.mxu0 %v2767
  %2956 = vmatprep.subr.bf16.mxu0 0
  %2957 = vmatpush2.bf16.msra.mxu0 %v2766
  %2958 = vmatprep.mubr.bf16.mxu0 %v2439
  %2959 = vmatmul.mubr.bf16.gmra.mxu0 %v2438
  %v2960 = vpop.f32.mrf.mxu0
  %v2961 = vadd.f32 %v2921, %v2960
  %v2962 = vpop.f32.mrf.mxu0
  %v2963 = vpop.f32.mrf.mxu0
  %v2964 = vpop.f32.mrf.mxu0
  %2965 = vdwg.mxu0
  %2966 = vmatprep.subr.bf16.mxu0 0
  %2967 = vmatpush1.bf16.msra.mxu0 %v2781
  %2968 = vmatprep.subr.bf16.mxu0 0
  %2969 = vmatpush1.bf16.msra.mxu0 %v2780
  %2970 = vmatprep.subr.bf16.mxu0 0
  %2971 = vmatpush1.bf16.msra.mxu0 %v2779
  %2972 = vmatprep.subr.bf16.mxu0 0
  %2973 = vmatpush1.bf16.msra.mxu0 %v2778
  %2974 = vmatprep.subr.bf16.mxu0 0
  %2975 = vmatpush1.bf16.msra.mxu0 %v2777
  %2976 = vmatprep.subr.bf16.mxu0 0
  %2977 = vmatpush1.bf16.msra.mxu0 %v2776
  %2978 = vmatprep.subr.bf16.mxu0 0
  %2979 = vmatpush1.bf16.msra.mxu0 %v2775
  %2980 = vmatprep.subr.bf16.mxu0 0
  %2981 = vmatpush1.bf16.msra.mxu0 %v2774
  %2982 = vmatprep.subr.bf16.mxu0 0
  %2983 = vmatpush2.bf16.msra.mxu0 %v2789
  %2984 = vmatprep.subr.bf16.mxu0 0
  %2985 = vmatpush2.bf16.msra.mxu0 %v2788
  %2986 = vmatprep.subr.bf16.mxu0 0
  %2987 = vmatpush2.bf16.msra.mxu0 %v2787
  %2988 = vmatprep.subr.bf16.mxu0 0
  %2989 = vmatpush2.bf16.msra.mxu0 %v2786
  %2990 = vmatprep.subr.bf16.mxu0 0
  %2991 = vmatpush2.bf16.msra.mxu0 %v2785
  %2992 = vmatprep.subr.bf16.mxu0 0
  %2993 = vmatpush2.bf16.msra.mxu0 %v2784
  %2994 = vmatprep.subr.bf16.mxu0 0
  %2995 = vmatpush2.bf16.msra.mxu0 %v2783
  %2996 = vmatprep.subr.bf16.mxu0 0
  %2997 = vmatpush2.bf16.msra.mxu0 %v2782
  %2998 = vmatprep.mubr.bf16.mxu0 %v2441
  %2999 = vmatmul.mubr.bf16.gmra.mxu0 %v2440
  %v3000 = vpop.f32.mrf.mxu0
  %v3001 = vadd.f32 %v2961, %v3000
  %v3002 = vpop.f32.mrf.mxu0
  %v3003 = vpop.f32.mrf.mxu0
  %v3004 = vpop.f32.mrf.mxu0
  %3005 = vdwg.mxu0
  %3006 = vmatprep.subr.bf16.mxu0 0
  %3007 = vmatpush1.bf16.msra.mxu0 %v2797
  %3008 = vmatprep.subr.bf16.mxu0 0
  %3009 = vmatpush1.bf16.msra.mxu0 %v2796
  %3010 = vmatprep.subr.bf16.mxu0 0
  %3011 = vmatpush1.bf16.msra.mxu0 %v2795
  %3012 = vmatprep.subr.bf16.mxu0 0
  %3013 = vmatpush1.bf16.msra.mxu0 %v2794
  %3014 = vmatprep.subr.bf16.mxu0 0
  %3015 = vmatpush1.bf16.msra.mxu0 %v2793
  %3016 = vmatprep.subr.bf16.mxu0 0
  %3017 = vmatpush1.bf16.msra.mxu0 %v2792
  %3018 = vmatprep.subr.bf16.mxu0 0
  %3019 = vmatpush1.bf16.msra.mxu0 %v2791
  %3020 = vmatprep.subr.bf16.mxu0 0
  %3021 = vmatpush1.bf16.msra.mxu0 %v2790
  %3022 = vmatprep.subr.bf16.mxu0 0
  %3023 = vmatpush2.bf16.msra.mxu0 %v2805
  %3024 = vmatprep.subr.bf16.mxu0 0
  %3025 = vmatpush2.bf16.msra.mxu0 %v2804
  %3026 = vmatprep.subr.bf16.mxu0 0
  %3027 = vmatpush2.bf16.msra.mxu0 %v2803
  %3028 = vmatprep.subr.bf16.mxu0 0
  %3029 = vmatpush2.bf16.msra.mxu0 %v2802
  %3030 = vmatprep.subr.bf16.mxu0 0
  %3031 = vmatpush2.bf16.msra.mxu0 %v2801
  %3032 = vmatprep.subr.bf16.mxu0 0
  %3033 = vmatpush2.bf16.msra.mxu0 %v2800
  %3034 = vmatprep.subr.bf16.mxu0 0
  %3035 = vmatpush2.bf16.msra.mxu0 %v2799
  %3036 = vmatprep.subr.bf16.mxu0 0
  %3037 = vmatpush2.bf16.msra.mxu0 %v2798
  %3038 = vmatprep.mubr.bf16.mxu0 %v2443
  %3039 = vmatmul.mubr.bf16.gmra.mxu0 %v2442
  %v3040 = vpop.f32.mrf.mxu0
  %v3041 = vadd.f32 %v3001, %v3040
  %v3042 = vpop.f32.mrf.mxu0
  %v3043 = vpop.f32.mrf.mxu0
  %v3044 = vpop.f32.mrf.mxu0
  %3045 = vdwg.mxu0
  %3046 = vmatprep.subr.bf16.mxu0 0
  %3047 = vmatpush1.bf16.msra.mxu0 %v2813
  %3048 = vmatprep.subr.bf16.mxu0 0
  %3049 = vmatpush1.bf16.msra.mxu0 %v2812
  %3050 = vmatprep.subr.bf16.mxu0 0
  %3051 = vmatpush1.bf16.msra.mxu0 %v2811
  %3052 = vmatprep.subr.bf16.mxu0 0
  %3053 = vmatpush1.bf16.msra.mxu0 %v2810
  %3054 = vmatprep.subr.bf16.mxu0 0
  %3055 = vmatpush1.bf16.msra.mxu0 %v2809
  %3056 = vmatprep.subr.bf16.mxu0 0
  %3057 = vmatpush1.bf16.msra.mxu0 %v2808
  %3058 = vmatprep.subr.bf16.mxu0 0
  %3059 = vmatpush1.bf16.msra.mxu0 %v2807
  %3060 = vmatprep.subr.bf16.mxu0 0
  %3061 = vmatpush1.bf16.msra.mxu0 %v2806
  %3062 = vmatprep.subr.bf16.mxu0 0
  %3063 = vmatpush2.bf16.msra.mxu0 0
  %3064 = vmatprep.subr.bf16.mxu0 0
  %3065 = vmatpush2.bf16.msra.mxu0 0
  %3066 = vmatprep.subr.bf16.mxu0 0
  %3067 = vmatpush2.bf16.msra.mxu0 0
  %3068 = vmatprep.subr.bf16.mxu0 0
  %3069 = vmatpush2.bf16.msra.mxu0 0
  %3070 = vmatprep.subr.bf16.mxu0 0
  %3071 = vmatpush2.bf16.msra.mxu0 0
  %3072 = vmatprep.subr.bf16.mxu0 0
  %3073 = vmatpush2.bf16.msra.mxu0 0
  %3074 = vmatprep.subr.bf16.mxu0 0
  %3075 = vmatpush2.bf16.msra.mxu0 0
  %3076 = vmatprep.subr.bf16.mxu0 0
  %3077 = vmatpush2.bf16.msra.mxu0 0
  %3078 = vmatprep.mubr.bf16.mxu0 0
  %3079 = vmatmul.mubr.bf16.gmra.mxu0 %v2444
  %v3080 = vpop.f32.mrf.mxu0
  %v3081 = vadd.f32 %v3041, %v3080
  %v3082 = vpop.f32.mrf.mxu0
  %v3083 = vpop.f32.mrf.mxu0
  %v3084 = vpop.f32.mrf.mxu0
  %3085 = vdwg.mxu0
  %v3086 = vmax.f32 %v3081, 0.0
  %v3087 = vpack.c.bf16 %v3086, %v3086
  %3088 = vst [vmem:[#allocation7] sm:$0xf] %v3087
  %v3089 = vld [vmem:[#allocation7] sm:$0xf]
  %v3090 = vld [vmem:[%s7] sm:$0xff]
  %v3091 = vld [vmem:[%s7 + $0x8] sm:$0xff]
  %v3092 = vld [vmem:[%s7 + $0x10] sm:$0xff]
  %v3093 = vld [vmem:[%s7 + $0x18] sm:$0xff]
  %v3094 = vld [vmem:[%s7 + $0x20] sm:$0xff]
  %v3095 = vld [vmem:[%s7 + $0x28] sm:$0xff]
  %v3096 = vld [vmem:[%s7 + $0x30] sm:$0xff]
  %v3097 = vld [vmem:[%s7 + $0x38] sm:$0xff]
  %v3098 = vld [vmem:[%s7 + $0x40] sm:$0xff]
  %v3099 = vld [vmem:[%s7 + $0x48] sm:$0xff]
  %v3100 = vld [vmem:[%s7 + $0x50] sm:$0xff]
  %v3101 = vld [vmem:[%s7 + $0x58] sm:$0xff]
  %v3102 = vld [vmem:[%s7 + $0x60] sm:$0xff]
  %v3103 = vld [vmem:[%s7 + $0x68] sm:$0xff]
  %v3104 = vld [vmem:[%s7 + $0x70] sm:$0xff]
  %v3105 = vld [vmem:[%s7 + $0x78] sm:$0xff]
  %v3106 = vld [vmem:[%s7 + $0x80] sm:$0xff]
  %v3107 = vld [vmem:[%s7 + $0x88] sm:$0xff]
  %v3108 = vld [vmem:[%s7 + $0x90] sm:$0xff]
  %v3109 = vld [vmem:[%s7 + $0x98] sm:$0xff]
  %v3110 = vld [vmem:[%s7 + $0xa0] sm:$0xff]
  %v3111 = vld [vmem:[%s7 + $0xa8] sm:$0xff]
  %v3112 = vld [vmem:[%s7 + $0xb0] sm:$0xff]
  %v3113 = vld [vmem:[%s7 + $0xb8] sm:$0xff]
  %v3114 = vld [vmem:[%s7 + $0xc0] sm:$0xff]
  %v3115 = vld [vmem:[%s7 + $0xc8] sm:$0xff]
  %v3116 = vld [vmem:[%s7 + $0xd0] sm:$0xff]
  %v3117 = vld [vmem:[%s7 + $0xd8] sm:$0xff]
  %v3118 = vld [vmem:[%s7 + $0xe0] sm:$0xff]
  %v3119 = vld [vmem:[%s7 + $0xe8] sm:$0xff]
  %v3120 = vld [vmem:[%s7 + $0xf0] sm:$0xff]
  %v3121 = vld [vmem:[%s7 + $0xf8] sm:$0xff]
  %v3122 = vld [vmem:[%s8] sm:$0xf]
  %v3124 = vlaneseq
  %v3125 = vshrl.u32 %v3124, 7
  %v3126 = vsub.s32 0, %v3125
  %v3127 = vrot.slane %v3122, %v3126
  %v3128 = vlaneseq
  %v3129 = vshrl.u32 %v3128, 7
  %v3130 = vsub.s32 1, %v3129
  %v3131 = vrot.slane %v3122, %v3130
  %v3132 = vlaneseq
  %v3133 = vshrl.u32 %v3132, 7
  %v3134 = vsub.s32 2, %v3133
  %v3135 = vrot.slane %v3122, %v3134
  %v3136 = vlaneseq
  %v3137 = vshrl.u32 %v3136, 7
  %v3138 = vsub.s32 3, %v3137
  %v3139 = vrot.slane %v3122, %v3138
  %v3176 = vunpack.c.l.b16 %v3090
  %v3177 = vunpack.c.h.b16 %v3090
  %v3178 = vunpack.c.l.b16 %v3091
  %v3179 = vunpack.c.h.b16 %v3091
  %v3180 = vunpack.c.l.b16 %v3092
  %v3181 = vunpack.c.h.b16 %v3092
  %v3182 = vunpack.c.l.b16 %v3093
  %v3183 = vunpack.c.h.b16 %v3093
  %v3184 = vunpack.c.l.b16 %v3094
  %v3185 = vunpack.c.h.b16 %v3094
  %v3186 = vunpack.c.l.b16 %v3095
  %v3187 = vunpack.c.h.b16 %v3095
  %v3188 = vunpack.c.l.b16 %v3096
  %v3189 = vunpack.c.h.b16 %v3096
  %v3190 = vunpack.c.l.b16 %v3097
  %v3191 = vunpack.c.h.b16 %v3097
  %v3192 = vunpack.c.l.b16 %v3098
  %v3193 = vunpack.c.h.b16 %v3098
  %v3194 = vunpack.c.l.b16 %v3099
  %v3195 = vunpack.c.h.b16 %v3099
  %v3196 = vunpack.c.l.b16 %v3100
  %v3197 = vunpack.c.h.b16 %v3100
  %v3198 = vunpack.c.l.b16 %v3101
  %v3199 = vunpack.c.h.b16 %v3101
  %v3200 = vunpack.c.l.b16 %v3102
  %v3201 = vunpack.c.h.b16 %v3102
  %v3202 = vunpack.c.l.b16 %v3103
  %v3203 = vunpack.c.h.b16 %v3103
  %v3204 = vunpack.c.l.b16 %v3104
  %v3205 = vunpack.c.h.b16 %v3104
  %v3206 = vunpack.c.l.b16 %v3105
  %v3207 = vunpack.c.h.b16 %v3105
  %v3208 = vunpack.c.l.b16 %v3106
  %v3209 = vunpack.c.h.b16 %v3106
  %v3210 = vunpack.c.l.b16 %v3107
  %v3211 = vunpack.c.h.b16 %v3107
  %v3212 = vunpack.c.l.b16 %v3108
  %v3213 = vunpack.c.h.b16 %v3108
  %v3214 = vunpack.c.l.b16 %v3109
  %v3215 = vunpack.c.h.b16 %v3109
  %v3216 = vunpack.c.l.b16 %v3110
  %v3217 = vunpack.c.h.b16 %v3110
  %v3218 = vunpack.c.l.b16 %v3111
  %v3219 = vunpack.c.h.b16 %v3111
  %v3220 = vunpack.c.l.b16 %v3112
  %v3221 = vunpack.c.h.b16 %v3112
  %v3222 = vunpack.c.l.b16 %v3113
  %v3223 = vunpack.c.h.b16 %v3113
  %v3224 = vunpack.c.l.b16 %v3114
  %v3225 = vunpack.c.h.b16 %v3114
  %v3226 = vunpack.c.l.b16 %v3115
  %v3227 = vunpack.c.h.b16 %v3115
  %v3228 = vunpack.c.l.b16 %v3116
  %v3229 = vunpack.c.h.b16 %v3116
  %v3230 = vunpack.c.l.b16 %v3117
  %v3231 = vunpack.c.h.b16 %v3117
  %v3232 = vunpack.c.l.b16 %v3118
  %v3233 = vunpack.c.h.b16 %v3118
  %v3234 = vunpack.c.l.b16 %v3119
  %v3235 = vunpack.c.h.b16 %v3119
  %v3236 = vunpack.c.l.b16 %v3120
  %v3237 = vunpack.c.h.b16 %v3120
  %v3238 = vunpack.c.l.b16 %v3121
  %v3239 = vunpack.c.h.b16 %v3121
  %v3240 = vpack.c.b16 %v3180, %v3176
  %v3241 = vpack.c.b16 %v3181, %v3177
  %v3242 = vpack.c.b16 %v3182, %v3178
  %v3243 = vpack.c.b16 %v3183, %v3179
  %v3244 = vpack.c.b16 %v3188, %v3184
  %v3245 = vpack.c.b16 %v3189, %v3185
  %v3246 = vpack.c.b16 %v3190, %v3186
  %v3247 = vpack.c.b16 %v3191, %v3187
  %v3248 = vpack.c.b16 %v3196, %v3192
  %v3249 = vpack.c.b16 %v3197, %v3193
  %v3250 = vpack.c.b16 %v3198, %v3194
  %v3251 = vpack.c.b16 %v3199, %v3195
  %v3252 = vpack.c.b16 %v3204, %v3200
  %v3253 = vpack.c.b16 %v3205, %v3201
  %v3254 = vpack.c.b16 %v3206, %v3202
  %v3255 = vpack.c.b16 %v3207, %v3203
  %v3256 = vpack.c.b16 %v3212, %v3208
  %v3257 = vpack.c.b16 %v3213, %v3209
  %v3258 = vpack.c.b16 %v3214, %v3210
  %v3259 = vpack.c.b16 %v3215, %v3211
  %v3260 = vpack.c.b16 %v3220, %v3216
  %v3261 = vpack.c.b16 %v3221, %v3217
  %v3262 = vpack.c.b16 %v3222, %v3218
  %v3263 = vpack.c.b16 %v3223, %v3219
  %v3264 = vpack.c.b16 %v3228, %v3224
  %v3265 = vpack.c.b16 %v3229, %v3225
  %v3266 = vpack.c.b16 %v3230, %v3226
  %v3267 = vpack.c.b16 %v3231, %v3227
  %v3268 = vpack.c.b16 %v3236, %v3232
  %v3269 = vpack.c.b16 %v3237, %v3233
  %v3270 = vpack.c.b16 %v3238, %v3234
  %v3271 = vpack.c.b16 %v3239, %v3235
  %3304 = vmatprep.subr.bf16.mxu0 %v3269
  %3305 = vmatpush1.bf16.msra.mxu0 %v3268
  %3306 = vmatprep.subr.bf16.mxu0 %v3265
  %3307 = vmatpush1.bf16.msra.mxu0 %v3264
  %3308 = vmatprep.subr.bf16.mxu0 %v3261
  %3309 = vmatpush1.bf16.msra.mxu0 %v3260
  %3310 = vmatprep.subr.bf16.mxu0 %v3257
  %3311 = vmatpush1.bf16.msra.mxu0 %v3256
  %3312 = vmatprep.subr.bf16.mxu0 %v3253
  %3313 = vmatpush1.bf16.msra.mxu0 %v3252
  %3314 = vmatprep.subr.bf16.mxu0 %v3249
  %3315 = vmatpush1.bf16.msra.mxu0 %v3248
  %3316 = vmatprep.subr.bf16.mxu0 %v3245
  %3317 = vmatpush1.bf16.msra.mxu0 %v3244
  %3318 = vmatprep.subr.bf16.mxu0 %v3241
  %3319 = vmatpush1.bf16.msra.mxu0 %v3240
  %3320 = vmatprep.subr.bf16.mxu0 0
  %3321 = vmatpush2.bf16.msra.mxu0 0
  %3322 = vmatprep.subr.bf16.mxu0 0
  %3323 = vmatpush2.bf16.msra.mxu0 0
  %3324 = vmatprep.subr.bf16.mxu0 0
  %3325 = vmatpush2.bf16.msra.mxu0 0
  %3326 = vmatprep.subr.bf16.mxu0 0
  %3327 = vmatpush2.bf16.msra.mxu0 0
  %3328 = vmatprep.subr.bf16.mxu0 0
  %3329 = vmatpush2.bf16.msra.mxu0 0
  %3330 = vmatprep.subr.bf16.mxu0 0
  %3331 = vmatpush2.bf16.msra.mxu0 0
  %3332 = vmatprep.subr.bf16.mxu0 0
  %3333 = vmatpush2.bf16.msra.mxu0 0
  %3334 = vmatprep.subr.bf16.mxu0 0
  %3335 = vmatpush2.bf16.msra.mxu0 0
  %3336 = vmatprep.mubr.bf16.mxu0 0
  %3337 = vmatmul.mubr.bf16.gmra.mxu0 %v3089
  %v3338 = vpop.f32.mrf.mxu0
  %v3339 = vadd.f32 %v3127, %v3338
  %v3340 = vpop.f32.mrf.mxu0
  %v3341 = vadd.f32 %v3131, %v3340
  %v3342 = vpop.f32.mrf.mxu0
  %v3343 = vpop.f32.mrf.mxu0
  %3344 = vdwg.mxu0
  %3345 = vmatprep.subr.bf16.mxu0 %v3271
  %3346 = vmatpush1.bf16.msra.mxu0 %v3270
  %3347 = vmatprep.subr.bf16.mxu0 %v3267
  %3348 = vmatpush1.bf16.msra.mxu0 %v3266
  %3349 = vmatprep.subr.bf16.mxu0 %v3263
  %3350 = vmatpush1.bf16.msra.mxu0 %v3262
  %3351 = vmatprep.subr.bf16.mxu0 %v3259
  %3352 = vmatpush1.bf16.msra.mxu0 %v3258
  %3353 = vmatprep.subr.bf16.mxu0 %v3255
  %3354 = vmatpush1.bf16.msra.mxu0 %v3254
  %3355 = vmatprep.subr.bf16.mxu0 %v3251
  %3356 = vmatpush1.bf16.msra.mxu0 %v3250
  %3357 = vmatprep.subr.bf16.mxu0 %v3247
  %3358 = vmatpush1.bf16.msra.mxu0 %v3246
  %3359 = vmatprep.subr.bf16.mxu0 %v3243
  %3360 = vmatpush1.bf16.msra.mxu0 %v3242
  %3361 = vmatprep.subr.bf16.mxu0 0
  %3362 = vmatpush2.bf16.msra.mxu0 0
  %3363 = vmatprep.subr.bf16.mxu0 0
  %3364 = vmatpush2.bf16.msra.mxu0 0
  %3365 = vmatprep.subr.bf16.mxu0 0
  %3366 = vmatpush2.bf16.msra.mxu0 0
  %3367 = vmatprep.subr.bf16.mxu0 0
  %3368 = vmatpush2.bf16.msra.mxu0 0
  %3369 = vmatprep.subr.bf16.mxu0 0
  %3370 = vmatpush2.bf16.msra.mxu0 0
  %3371 = vmatprep.subr.bf16.mxu0 0
  %3372 = vmatpush2.bf16.msra.mxu0 0
  %3373 = vmatprep.subr.bf16.mxu0 0
  %3374 = vmatpush2.bf16.msra.mxu0 0
  %3375 = vmatprep.subr.bf16.mxu0 0
  %3376 = vmatpush2.bf16.msra.mxu0 0
  %3377 = vmatprep.mubr.bf16.mxu0 0
  %3378 = vmatmul.mubr.bf16.gmra.mxu0 %v3089
  %v3379 = vpop.f32.mrf.mxu0
  %v3380 = vadd.f32 %v3135, %v3379
  %v3381 = vpop.f32.mrf.mxu0
  %v3382 = vadd.f32 %v3139, %v3381
  %v3383 = vpop.f32.mrf.mxu0
  %v3384 = vpop.f32.mrf.mxu0
  %3385 = vdwg.mxu0
  %v3386 = vmax.f32 %v3339, 0.0
  %v3387 = vmax.f32 %v3341, 0.0
  %v3388 = vmax.f32 %v3380, 0.0
  %v3389 = vmax.f32 %v3382, 0.0
  %v3390 = vpack.c.bf16 %v3386, %v3386
  %v3391 = vpack.c.bf16 %v3387, %v3387
  %v3392 = vpack.c.bf16 %v3388, %v3388
  %v3393 = vpack.c.bf16 %v3389, %v3389
  %v3394 = vld [vmem:[%s9] sm:$0xf]
  %v3395 = vld [vmem:[%s9 + $0x4] sm:$0xf]
  %v3396 = vld [vmem:[%s9 + $0x8] sm:$0xf]
  %v3397 = vld [vmem:[%s9 + $0xc] sm:$0xf]
  %v3398 = vld [vmem:[%s9 + $0x10] sm:$0xf]
  %v3399 = vld [vmem:[%s9 + $0x14] sm:$0xf]
  %v3400 = vld [vmem:[%s9 + $0x18] sm:$0xf]
  %v3401 = vld [vmem:[%s9 + $0x1c] sm:$0xf]
  %v3402 = vld [vmem:[%s9 + $0x20] sm:$0xf]
  %v3403 = vld [vmem:[%s9 + $0x24] sm:$0xf]
  %v3404 = vld [vmem:[%s9 + $0x28] sm:$0xf]
  %v3405 = vld [vmem:[%s9 + $0x2c] sm:$0xf]
  %v3406 = vld [vmem:[%s9 + $0x30] sm:$0xf]
  %v3407 = vld [vmem:[%s9 + $0x34] sm:$0xf]
  %v3408 = vld [vmem:[%s9 + $0x38] sm:$0xf]
  %v3409 = vld [vmem:[%s9 + $0x3c] sm:$0xf]
  %v3410 = vld [vmem:[%s9 + $0x40] sm:$0xf]
  %v3411 = vld [vmem:[%s9 + $0x44] sm:$0xf]
  %v3412 = vld [vmem:[%s9 + $0x48] sm:$0xf]
  %v3413 = vld [vmem:[%s9 + $0x4c] sm:$0xf]
  %v3414 = vld [vmem:[%s9 + $0x50] sm:$0xf]
  %v3415 = vld [vmem:[%s9 + $0x54] sm:$0xf]
  %v3416 = vld [vmem:[%s9 + $0x58] sm:$0xf]
  %v3417 = vld [vmem:[%s9 + $0x5c] sm:$0xf]
  %v3418 = vld [vmem:[%s9 + $0x60] sm:$0xf]
  %v3419 = vld [vmem:[%s9 + $0x64] sm:$0xf]
  %v3420 = vld [vmem:[%s9 + $0x68] sm:$0xf]
  %v3421 = vld [vmem:[%s9 + $0x6c] sm:$0xf]
  %v3422 = vld [vmem:[%s9 + $0x70] sm:$0xf]
  %v3423 = vld [vmem:[%s9 + $0x74] sm:$0xf]
  %v3424 = vld [vmem:[%s9 + $0x78] sm:$0xf]
  %v3425 = vld [vmem:[%s9 + $0x7c] sm:$0xf]
  %v3426 = vld [vmem:[%s9 + $0x80] sm:$0xf]
  %v3427 = vld [vmem:[%s9 + $0x84] sm:$0xf]
  %v3428 = vld [vmem:[%s9 + $0x88] sm:$0xf]
  %v3429 = vld [vmem:[%s9 + $0x8c] sm:$0xf]
  %v3430 = vld [vmem:[%s9 + $0x90] sm:$0xf]
  %v3431 = vld [vmem:[%s9 + $0x94] sm:$0xf]
  %v3432 = vld [vmem:[%s9 + $0x98] sm:$0xf]
  %v3433 = vld [vmem:[%s9 + $0x9c] sm:$0xf]
  %v3434 = vld [vmem:[%s9 + $0xa0] sm:$0xf]
  %v3435 = vld [vmem:[%s9 + $0xa4] sm:$0xf]
  %v3436 = vld [vmem:[%s9 + $0xa8] sm:$0xf]
  %v3437 = vld [vmem:[%s9 + $0xac] sm:$0xf]
  %v3438 = vld [vmem:[%s9 + $0xb0] sm:$0xf]
  %v3439 = vld [vmem:[%s9 + $0xb4] sm:$0xf]
  %v3440 = vld [vmem:[%s9 + $0xb8] sm:$0xf]
  %v3441 = vld [vmem:[%s9 + $0xbc] sm:$0xf]
  %v3442 = vld [vmem:[%s9 + $0xc0] sm:$0xf]
  %v3443 = vld [vmem:[%s9 + $0xc4] sm:$0xf]
  %v3444 = vld [vmem:[%s9 + $0xc8] sm:$0xf]
  %v3445 = vld [vmem:[%s9 + $0xcc] sm:$0xf]
  %v3446 = vld [vmem:[%s9 + $0xd0] sm:$0xf]
  %v3447 = vld [vmem:[%s9 + $0xd4] sm:$0xf]
  %v3448 = vld [vmem:[%s9 + $0xd8] sm:$0xf]
  %v3449 = vld [vmem:[%s9 + $0xdc] sm:$0xf]
  %v3450 = vld [vmem:[%s9 + $0xe0] sm:$0xf]
  %v3451 = vld [vmem:[%s9 + $0xe4] sm:$0xf]
  %v3452 = vld [vmem:[%s9 + $0xe8] sm:$0xf]
  %v3453 = vld [vmem:[%s9 + $0xec] sm:$0xf]
  %v3454 = vld [vmem:[%s9 + $0xf0] sm:$0xf]
  %v3455 = vld [vmem:[%s9 + $0xf4] sm:$0xf]
  %v3456 = vld [vmem:[%s9 + $0xf8] sm:$0xf]
  %v3457 = vld [vmem:[%s9 + $0xfc] sm:$0xf]
  %v3458 = vld [vmem:[%s10] sm:$0x1]
  %v3460 = vlaneseq
  %v3461 = vshrl.u32 %v3460, 7
  %v3462 = vsub.s32 0, %v3461
  %v3463 = vrot.slane %v3458, %v3462
  %v3529 = vunpack.c.l.b16 %v3394
  %v3530 = vunpack.c.l.b16 %v3395
  %v3531 = vunpack.c.l.b16 %v3396
  %v3532 = vunpack.c.l.b16 %v3397
  %v3533 = vunpack.c.l.b16 %v3398
  %v3534 = vunpack.c.l.b16 %v3399
  %v3535 = vunpack.c.l.b16 %v3400
  %v3536 = vunpack.c.l.b16 %v3401
  %v3537 = vunpack.c.l.b16 %v3402
  %v3538 = vunpack.c.l.b16 %v3403
  %v3539 = vunpack.c.l.b16 %v3404
  %v3540 = vunpack.c.l.b16 %v3405
  %v3541 = vunpack.c.l.b16 %v3406
  %v3542 = vunpack.c.l.b16 %v3407
  %v3543 = vunpack.c.l.b16 %v3408
  %v3544 = vunpack.c.l.b16 %v3409
  %v3545 = vunpack.c.l.b16 %v3410
  %v3546 = vunpack.c.l.b16 %v3411
  %v3547 = vunpack.c.l.b16 %v3412
  %v3548 = vunpack.c.l.b16 %v3413
  %v3549 = vunpack.c.l.b16 %v3414
  %v3550 = vunpack.c.l.b16 %v3415
  %v3551 = vunpack.c.l.b16 %v3416
  %v3552 = vunpack.c.l.b16 %v3417
  %v3553 = vunpack.c.l.b16 %v3418
  %v3554 = vunpack.c.l.b16 %v3419
  %v3555 = vunpack.c.l.b16 %v3420
  %v3556 = vunpack.c.l.b16 %v3421
  %v3557 = vunpack.c.l.b16 %v3422
  %v3558 = vunpack.c.l.b16 %v3423
  %v3559 = vunpack.c.l.b16 %v3424
  %v3560 = vunpack.c.l.b16 %v3425
  %v3561 = vunpack.c.l.b16 %v3426
  %v3562 = vunpack.c.l.b16 %v3427
  %v3563 = vunpack.c.l.b16 %v3428
  %v3564 = vunpack.c.l.b16 %v3429
  %v3565 = vunpack.c.l.b16 %v3430
  %v3566 = vunpack.c.l.b16 %v3431
  %v3567 = vunpack.c.l.b16 %v3432
  %v3568 = vunpack.c.l.b16 %v3433
  %v3569 = vunpack.c.l.b16 %v3434
  %v3570 = vunpack.c.l.b16 %v3435
  %v3571 = vunpack.c.l.b16 %v3436
  %v3572 = vunpack.c.l.b16 %v3437
  %v3573 = vunpack.c.l.b16 %v3438
  %v3574 = vunpack.c.l.b16 %v3439
  %v3575 = vunpack.c.l.b16 %v3440
  %v3576 = vunpack.c.l.b16 %v3441
  %v3577 = vunpack.c.l.b16 %v3442
  %v3578 = vunpack.c.l.b16 %v3443
  %v3579 = vunpack.c.l.b16 %v3444
  %v3580 = vunpack.c.l.b16 %v3445
  %v3581 = vunpack.c.l.b16 %v3446
  %v3582 = vunpack.c.l.b16 %v3447
  %v3583 = vunpack.c.l.b16 %v3448
  %v3584 = vunpack.c.l.b16 %v3449
  %v3585 = vunpack.c.l.b16 %v3450
  %v3586 = vunpack.c.l.b16 %v3451
  %v3587 = vunpack.c.l.b16 %v3452
  %v3588 = vunpack.c.l.b16 %v3453
  %v3589 = vunpack.c.l.b16 %v3454
  %v3590 = vunpack.c.l.b16 %v3455
  %v3591 = vunpack.c.l.b16 %v3456
  %v3592 = vunpack.c.l.b16 %v3457
  %v3593 = vpack.c.b16 %v3530, %v3529
  %v3594 = vpack.c.b16 %v3532, %v3531
  %v3595 = vpack.c.b16 %v3534, %v3533
  %v3596 = vpack.c.b16 %v3536, %v3535
  %v3597 = vpack.c.b16 %v3538, %v3537
  %v3598 = vpack.c.b16 %v3540, %v3539
  %v3599 = vpack.c.b16 %v3542, %v3541
  %v3600 = vpack.c.b16 %v3544, %v3543
  %v3601 = vpack.c.b16 %v3546, %v3545
  %v3602 = vpack.c.b16 %v3548, %v3547
  %v3603 = vpack.c.b16 %v3550, %v3549
  %v3604 = vpack.c.b16 %v3552, %v3551
  %v3605 = vpack.c.b16 %v3554, %v3553
  %v3606 = vpack.c.b16 %v3556, %v3555
  %v3607 = vpack.c.b16 %v3558, %v3557
  %v3608 = vpack.c.b16 %v3560, %v3559
  %v3609 = vpack.c.b16 %v3562, %v3561
  %v3610 = vpack.c.b16 %v3564, %v3563
  %v3611 = vpack.c.b16 %v3566, %v3565
  %v3612 = vpack.c.b16 %v3568, %v3567
  %v3613 = vpack.c.b16 %v3570, %v3569
  %v3614 = vpack.c.b16 %v3572, %v3571
  %v3615 = vpack.c.b16 %v3574, %v3573
  %v3616 = vpack.c.b16 %v3576, %v3575
  %v3617 = vpack.c.b16 %v3578, %v3577
  %v3618 = vpack.c.b16 %v3580, %v3579
  %v3619 = vpack.c.b16 %v3582, %v3581
  %v3620 = vpack.c.b16 %v3584, %v3583
  %v3621 = vpack.c.b16 %v3586, %v3585
  %v3622 = vpack.c.b16 %v3588, %v3587
  %v3623 = vpack.c.b16 %v3590, %v3589
  %v3624 = vpack.c.b16 %v3592, %v3591
  %3657 = vmatprep.subr.bf16.mxu0 0
  %3658 = vmatpush1.bf16.msra.mxu0 %v3600
  %3659 = vmatprep.subr.bf16.mxu0 0
  %3660 = vmatpush1.bf16.msra.mxu0 %v3599
  %3661 = vmatprep.subr.bf16.mxu0 0
  %3662 = vmatpush1.bf16.msra.mxu0 %v3598
  %3663 = vmatprep.subr.bf16.mxu0 0
  %3664 = vmatpush1.bf16.msra.mxu0 %v3597
  %3665 = vmatprep.subr.bf16.mxu0 0
  %3666 = vmatpush1.bf16.msra.mxu0 %v3596
  %3667 = vmatprep.subr.bf16.mxu0 0
  %3668 = vmatpush1.bf16.msra.mxu0 %v3595
  %3669 = vmatprep.subr.bf16.mxu0 0
  %3670 = vmatpush1.bf16.msra.mxu0 %v3594
  %3671 = vmatprep.subr.bf16.mxu0 0
  %3672 = vmatpush1.bf16.msra.mxu0 %v3593
  %3673 = vmatprep.subr.bf16.mxu0 0
  %3674 = vmatpush2.bf16.msra.mxu0 %v3608
  %3675 = vmatprep.subr.bf16.mxu0 0
  %3676 = vmatpush2.bf16.msra.mxu0 %v3607
  %3677 = vmatprep.subr.bf16.mxu0 0
  %3678 = vmatpush2.bf16.msra.mxu0 %v3606
  %3679 = vmatprep.subr.bf16.mxu0 0
  %3680 = vmatpush2.bf16.msra.mxu0 %v3605
  %3681 = vmatprep.subr.bf16.mxu0 0
  %3682 = vmatpush2.bf16.msra.mxu0 %v3604
  %3683 = vmatprep.subr.bf16.mxu0 0
  %3684 = vmatpush2.bf16.msra.mxu0 %v3603
  %3685 = vmatprep.subr.bf16.mxu0 0
  %3686 = vmatpush2.bf16.msra.mxu0 %v3602
  %3687 = vmatprep.subr.bf16.mxu0 0
  %3688 = vmatpush2.bf16.msra.mxu0 %v3601
  %3689 = vmatprep.mubr.bf16.mxu0 %v3391
  %3690 = vmatmul.mubr.bf16.gmra.mxu0 %v3390
  %v3691 = vpop.f32.mrf.mxu0
  %v3692 = vadd.f32 %v3463, %v3691
  %v3693 = vpop.f32.mrf.mxu0
  %v3694 = vpop.f32.mrf.mxu0
  %v3695 = vpop.f32.mrf.mxu0
  %3696 = vdwg.mxu0
  %3697 = vmatprep.subr.bf16.mxu0 0
  %3698 = vmatpush1.bf16.msra.mxu0 %v3616
  %3699 = vmatprep.subr.bf16.mxu0 0
  %3700 = vmatpush1.bf16.msra.mxu0 %v3615
  %3701 = vmatprep.subr.bf16.mxu0 0
  %3702 = vmatpush1.bf16.msra.mxu0 %v3614
  %3703 = vmatprep.subr.bf16.mxu0 0
  %3704 = vmatpush1.bf16.msra.mxu0 %v3613
  %3705 = vmatprep.subr.bf16.mxu0 0
  %3706 = vmatpush1.bf16.msra.mxu0 %v3612
  %3707 = vmatprep.subr.bf16.mxu0 0
  %3708 = vmatpush1.bf16.msra.mxu0 %v3611
  %3709 = vmatprep.subr.bf16.mxu0 0
  %3710 = vmatpush1.bf16.msra.mxu0 %v3610
  %3711 = vmatprep.subr.bf16.mxu0 0
  %3712 = vmatpush1.bf16.msra.mxu0 %v3609
  %3713 = vmatprep.subr.bf16.mxu0 0
  %3714 = vmatpush2.bf16.msra.mxu0 %v3624
  %3715 = vmatprep.subr.bf16.mxu0 0
  %3716 = vmatpush2.bf16.msra.mxu0 %v3623
  %3717 = vmatprep.subr.bf16.mxu0 0
  %3718 = vmatpush2.bf16.msra.mxu0 %v3622
  %3719 = vmatprep.subr.bf16.mxu0 0
  %3720 = vmatpush2.bf16.msra.mxu0 %v3621
  %3721 = vmatprep.subr.bf16.mxu0 0
  %3722 = vmatpush2.bf16.msra.mxu0 %v3620
  %3723 = vmatprep.subr.bf16.mxu0 0
  %3724 = vmatpush2.bf16.msra.mxu0 %v3619
  %3725 = vmatprep.subr.bf16.mxu0 0
  %3726 = vmatpush2.bf16.msra.mxu0 %v3618
  %3727 = vmatprep.subr.bf16.mxu0 0
  %3728 = vmatpush2.bf16.msra.mxu0 %v3617
  %3729 = vmatprep.mubr.bf16.mxu0 %v3393
  %3730 = vmatmul.mubr.bf16.gmra.mxu0 %v3392
  %v3731 = vpop.f32.mrf.mxu0
  %v3732 = vadd.f32 %v3692, %v3731
  %v3733 = vpop.f32.mrf.mxu0
  %v3734 = vpop.f32.mrf.mxu0
  %v3735 = vpop.f32.mrf.mxu0
  %3736 = vdwg.mxu0
  %3737 = vst [vmem:[%s11] sm:$0xff] %v3732
  // Predicated region
  $region46: #{forward.1} parent=0 // pred_check
    _
  $region47: #{forward.1} parent=0 // pred_check_branch
    %3739 = sbr.rel (0) target = $region49
  $region48: #{forward.1} parent=0 // pred_region
    _
  $region49: #{forward.1} parent=0 // pred_fallthru
    _
  // Predicated region
  $region50: #{forward.1} parent=0 // pred_check
    _
  $region51: #{forward.1} parent=0 // pred_check_branch
    %3741 = sbr.rel (0) target = $region53
  $region52: #{forward.1} parent=0 // pred_region
    _
  $region53: #{forward.1} parent=0 // pred_fallthru
    _

</llo_original>
